<compile_context>
chip_gen: v7x
topology: tpu7x:2x2x1
jax: 0.10.0
libtpu: 0.0.40
codegen_flags: <defaults>
</compile_context>

<pallas_src>
import numpy as np
import jax
import jax.numpy as jnp
from jax.experimental import pallas as pl
from jax.experimental.pallas import tpu as pltpu

# ----- small, deterministic hyper-parameters consistent with QQN.__init__ -----
N_OBS = 4                  # n_observations == n_qubits
N_ACT = 2                  # n_actions
C_DEPTH = 3                # circuit depth (re-uploading layers)
N_QUBITS = N_OBS
DIM = 2 ** N_QUBITS        # statevector dimension (16)
SDIM = 2 * DIM             # per-member packed [re | im] width (32)
MPR = 4                    # batch members packed per row
PSIW = MPR * SDIM          # packed state lane width (128) = [re x4 | im x4]
CW = N_QUBITS * PSIW       # per-qubit chunked trig width (512)
BATCH = 16                 # whole batch handled in one grid step

# consts-slab row layout
ROW_SPREAD = 0             # 16 rows: lane-spread matrix with w1 folded in
ROW_LAM = 16               # 3 rows : per-depth 0.5*lambda, chunk-broadcast to 512
ROW_SIGN = 19              # 1 row  : +1 on re lanes, -1 on im lanes (512 wide)
ROW_MASK = 20              # 4 rows : state-index bit masks (128 lanes used)
ROW_INIT = 24              # 1 row  : packed |0...0> (128 lanes used)
CONST_ROWS = 32


# --------------------------------------------------------------------------- #
# In-kernel float32-accurate arctan (Cephes atanf style).  Uses only ops with
# guaranteed Mosaic lowering (abs/div/mul/add/compare/select).
# --------------------------------------------------------------------------- #
def _arctan_f32(x):
    sign = jnp.where(x < 0.0, -1.0, 1.0)
    t = jnp.abs(x)
    tan3pio8 = 2.414213562373095   # tan(3*pi/8)
    tan_pio8 = 0.4142135623730950  # tan(pi/8)
    big = t > tan3pio8
    mid = jnp.logical_and(t > tan_pio8, jnp.logical_not(big))
    safe_t = jnp.maximum(t, 1e-30)          # avoid inf in the unselected branch
    xr = jnp.where(big, -1.0 / safe_t, jnp.where(mid, (t - 1.0) / (t + 1.0), t))
    yoff = jnp.where(big, np.float32(np.pi / 2),
                     jnp.where(mid, np.float32(np.pi / 4), 0.0))
    z = xr * xr
    poly = (((8.05374449538e-2 * z - 1.38776856032e-1) * z
             + 1.99777106478e-1) * z - 3.33329491539e-1) * z * xr + xr
    return sign * (yoff + poly)


# --------------------------------------------------------------------------- #
# The Pallas kernel: whole QQN forward in one invocation.
#   x_ref     : (GBP, 16)        packed inputs, lane = member*4 + feature
#   consts_ref: (32, 512)        spread / lambdas / sign / masks / init slab
#   mats_ref  : (4, 128, 128)    W_0..W_2 (variational) + readout matrix
#   out_ref   : (GBP, 128)       lane-dense packed Q-values
# --------------------------------------------------------------------------- #
def qqn_kernel(x_ref, consts_ref, mats_ref, out_ref):
    gbp = x_ref.shape[0]

    # --- spread inputs to the packed lane space (w1 folded into the matrix) ---
    # chunk q (128 lanes) of xs holds  w1[q] * x[member, q]  replicated over that
    # member's 32 [re|im] lanes.  One small MXU op, off the serial chain.
    spread = consts_ref[ROW_SPREAD:ROW_SPREAD + 16, :]            # (16, 512)
    xs = jnp.dot(x_ref[...], spread, preferred_element_type=jnp.float32)
    angle = _arctan_f32(xs)                                       # (GBP, 512)

    sign = consts_ref[ROW_SIGN:ROW_SIGN + 1, :]                   # (1, 512)
    masks = [consts_ref[ROW_MASK + k:ROW_MASK + k + 1, 0:PSIW] > 0.5
             for k in range(N_QUBITS)]                            # each (1, 128)

    # --- initial state |0...0> for every packed member ------------------------
    psi = jnp.broadcast_to(consts_ref[ROW_INIT:ROW_INIT + 1, 0:PSIW],
                           (gbp, PSIW))                           # (GBP, 128)

    # --- ReUploadingPQC: exact statevector simulation -------------------------
    for d in range(C_DEPTH):
        # Hoisted EUP batch for this depth: cos/sin for all 4 qubits, already
        # lane-broadcast; the re/im sign is folded into s here (off the chain).
        half = angle * consts_ref[ROW_LAM + d:ROW_LAM + d + 1, :]  # 0.5*lam baked
        c_all = jnp.cos(half)                                      # (GBP, 512)
        s_all = jnp.sin(half) * sign                               # (GBP, 512)

        # Data (re-)uploading: Rx(lambda_{d,q} * angle_q) on every qubit.
        # The needed source permutation is lane XOR (64 + w):  flip state bit k
        # and swap the re/im halves.  Implemented as two full-128-lane static
        # rolls + one select (XOR 64 == roll 64 mod 128; +/-w chosen by mask).
        for q in range(N_QUBITS):
            k = N_QUBITS - 1 - q
            w = 1 << k
            c = c_all[:, q * PSIW:(q + 1) * PSIW]    # 128-aligned lane slices
            s = s_all[:, q * PSIW:(q + 1) * PSIW]
            sp = jnp.roll(psi, 64 + w, axis=1)       # source when bit_k(lane) == 1
            sm = jnp.roll(psi, 64 - w, axis=1)       # source when bit_k(lane) == 0
            swapped = jnp.where(masks[k], sp, sm)
            psi = c * psi + s * swapped

        # Trainable variational layer (Ry/Rz + CZ ring): one fused block-complex
        # matmul over all packed members,  psi <- psi @ W_d   (K = 128).
        psi = jnp.dot(psi, mats_ref[d], preferred_element_type=jnp.float32)

    # --- measurement: <Z_{a mod n_qubits}> * w2, lane-dense store --------------
    prob = psi * psi                                               # (GBP, 128)
    out_ref[...] = jnp.dot(prob, mats_ref[C_DEPTH],
                           preferred_element_type=jnp.float32)


def qqn_forward(x, consts, mats):
    b = x.shape[0]
    assert b % MPR == 0, "batch must be a multiple of 4 for lane packing"
    gb = b // MPR
    gbp = ((gb + 7) // 8) * 8          # pad packed rows to a sublane multiple

    xp = x.reshape(gb, MPR * N_OBS)
    if gbp != gb:
        xp = jnp.concatenate(
            [xp, jnp.zeros((gbp - gb, MPR * N_OBS), xp.dtype)], axis=0)

    def full_spec(arr):
        nd = arr.ndim
        return pl.BlockSpec(tuple(arr.shape), lambda i, _n=nd: (0,) * _n)

    cost = pl.CostEstimate(
        flops=1_250_000,                # 5 small matmuls + Rx-chain VPU work
        transcendentals=3 * 2 * gbp * CW,   # cos+sin per depth on (GBP, 512)
        bytes_accessed=(xp.size + consts.size + mats.size + gbp * PSIW) * 4,
    )

    out = pl.pallas_call(
        qqn_kernel,
        out_shape=jax.ShapeDtypeStruct((gbp, PSIW), jnp.float32),
        grid=(1,),   # single step: compute is tiny, avoid per-step pipeline overhead
        in_specs=[full_spec(xp), full_spec(consts), full_spec(mats)],
        out_specs=pl.BlockSpec((gbp, PSIW), lambda i: (0, 0)),
        compiler_params=pltpu.CompilerParams(
            dimension_semantics=("arbitrary",)),
        cost_estimate=cost,
    )(xp, consts, mats)
    # NOTE(v7x): if the evaluated batch ever grows to thousands of states, tile the
    # packed-row axis with a leading "parallel" grid dim to use the second TC.

    # tiny unpack (4, 128)->(B, N_ACT) done outside the kernel so the kernel's
    # store stays lane-dense.
    out = out[:gb].reshape(gb, MPR, SDIM)[:, :, :N_ACT].reshape(b, N_ACT)
    return out


# --------------------------------------------------------------------------- #
# Parameter / constant-matrix setup (numpy "glue": deterministic init).
# --------------------------------------------------------------------------- #
def _kron_list(mats):
    out = np.array([[1.0 + 0j]])
    for m in mats:
        out = np.kron(out, m)
    return out


def _single_qubit_gate(gate2, q, n):
    mats = [np.eye(2, dtype=complex)] * n
    mats[q] = gate2
    return _kron_list(mats)


def _ry(t):
    return np.array([[np.cos(t / 2), -np.sin(t / 2)],
                     [np.sin(t / 2), np.cos(t / 2)]], dtype=complex)


def _rz(t):
    return np.array([[np.exp(-1j * t / 2), 0.0],
                     [0.0, np.exp(1j * t / 2)]], dtype=complex)


def _cz_ring(n):
    dim = 2 ** n
    U = np.eye(dim, dtype=complex)
    for q in range(n):
        q2 = (q + 1) % n
        if q2 == q:
            continue
        diag = np.ones(dim, dtype=complex)
        for s in range(dim):
            if ((s >> (n - 1 - q)) & 1) and ((s >> (n - 1 - q2)) & 1):
                diag[s] = -1.0
        U = np.diag(diag) @ U
    return U


def init_params(key):
    k1, k2, k3, k4, k5 = jax.random.split(key, 5)
    # CustomMultiplyLayer weights (per-feature / per-action scales).
    w1 = jax.random.uniform(k1, (1, N_OBS), jnp.float32, 0.5, 1.5)
    w2 = jax.random.uniform(k2, (1, N_ACT), jnp.float32, 0.5, 1.5)
    # Input-scaling lambdas of the re-uploading PQC.
    lam = jax.random.uniform(k3, (C_DEPTH, N_QUBITS), jnp.float32, 0.5, 1.5)
    # Trainable variational rotation angles.
    theta = np.asarray(jax.random.uniform(k4, (C_DEPTH, N_QUBITS), jnp.float32,
                                          -np.pi, np.pi))
    phi = np.asarray(jax.random.uniform(k5, (C_DEPTH, N_QUBITS), jnp.float32,
                                        -np.pi, np.pi))
    w1_np = np.asarray(w1)
    w2_np = np.asarray(w2)
    lam_np = np.asarray(lam)

    # Diagonal observables: Z on qubit (a mod n_qubits), stored as (N_ACT, DIM).
    obs = np.zeros((N_ACT, DIM), np.float32)
    for a in range(N_ACT):
        qb = a % N_QUBITS
        for s in range(DIM):
            obs[a, s] = 1.0 - 2.0 * ((s >> (N_QUBITS - 1 - qb)) & 1)

    # ----------------- consts slab (CONST_ROWS, CW) ---------------------------
    # Packed lane index i = h*64 + m*16 + j  (h: re/im, m: member-in-row, j: state)
    consts = np.zeros((CONST_ROWS, CW), np.float32)
    # rows 0..15: lane-spread matrix with w1 folded in.  Input lane r = m*4 + q.
    for m in range(MPR):
        for q in range(N_OBS):
            r = m * N_OBS + q
            for h in range(2):
                base = q * PSIW + h * 64 + m * DIM
                consts[ROW_SPREAD + r, base:base + DIM] = w1_np[0, q]
    # rows 16..18: per-depth 0.5*lambda broadcast over each 128-lane chunk.
    for d in range(C_DEPTH):
        for q in range(N_QUBITS):
            consts[ROW_LAM + d, q * PSIW:(q + 1) * PSIW] = 0.5 * lam_np[d, q]
    # row 19: +1 on re lanes, -1 on im lanes (per chunk).
    for q in range(N_QUBITS):
        consts[ROW_SIGN, q * PSIW:q * PSIW + 64] = 1.0
        consts[ROW_SIGN, q * PSIW + 64:(q + 1) * PSIW] = -1.0
    # rows 20..23: state-index bit masks (bits 0..3 of the packed lane index).
    lanes = np.arange(PSIW)
    for k in range(N_QUBITS):
        consts[ROW_MASK + k, :PSIW] = ((lanes >> k) & 1).astype(np.float32)
    # row 24: packed |0...0>  (re of state 0 for every member).
    for m in range(MPR):
        consts[ROW_INIT, m * DIM] = 1.0

    # ----------------- matrix stack (C_DEPTH+1, PSIW, PSIW) -------------------
    czr = _cz_ring(N_QUBITS)
    v_list = []
    mats = np.zeros((C_DEPTH + 1, PSIW, PSIW), np.float32)
    for d in range(C_DEPTH):
        V = np.eye(DIM, dtype=complex)
        for q in range(N_QUBITS):
            V = _single_qubit_gate(_ry(theta[d, q]), q, N_QUBITS) @ V
            V = _single_qubit_gate(_rz(phi[d, q]), q, N_QUBITS) @ V
        V = czr @ V
        v_list.append(V)
        vre_t = np.real(V).T.astype(np.float32)
        vim_t = np.imag(V).T.astype(np.float32)
        for m in range(MPR):
            r0 = m * DIM            # re rows/cols of member m
            i0 = 64 + m * DIM       # im rows/cols of member m
            mats[d, r0:r0 + DIM, r0:r0 + DIM] = vre_t
            mats[d, r0:r0 + DIM, i0:i0 + DIM] = vim_t
            mats[d, i0:i0 + DIM, r0:r0 + DIM] = -vim_t
            mats[d, i0:i0 + DIM, i0:i0 + DIM] = vre_t
    # readout matrix: column m*32+a accumulates |psi_m|^2 against obs[a]*w2[a].
    for m in range(MPR):
        for a in range(N_ACT):
            col = m * SDIM + a
            for h in range(2):
                rows = h * 64 + m * DIM + np.arange(DIM)
                mats[C_DEPTH, rows, col] = obs[a] * w2_np[0, a]

    kernel_params = (jnp.asarray(consts), jnp.asarray(mats))
    ref_consts = (w1_np, lam_np, np.stack(v_list), obs.copy(), w2_np)
    return kernel_params, ref_consts


# Independent float64/complex128 numpy reference (validation only).
def qqn_reference(x, w1, lam, v_stack, obs, w2):
    x = np.asarray(x, np.float64)
    angle = np.arctan(x * w1.astype(np.float64))
    b = x.shape[0]
    psi = np.zeros((b, DIM), np.complex128)
    psi[:, 0] = 1.0
    idx = np.arange(DIM)
    for d in range(C_DEPTH):
        half = 0.5 * angle * lam[d].astype(np.float64)
        for q in range(N_QUBITS):
            wbit = 1 << (N_QUBITS - 1 - q)
            c = np.cos(half[:, q:q + 1])
            s = np.sin(half[:, q:q + 1])
            psi = c * psi - 1j * s * psi[:, idx ^ wbit]     # Rx on qubit q
        psi = psi @ v_stack[d].T                            # variational layer
    prob = np.abs(psi) ** 2
    return (prob @ obs.astype(np.float64).T) * w2.astype(np.float64)


if __name__ == "__main__":
    key = jax.random.PRNGKey(0)
    kx, kp = jax.random.split(key)
    x = jax.random.normal(kx, (BATCH, N_OBS), jnp.float32)
    kernel_params, ref_consts = init_params(kp)

    out = qqn_forward(x, *kernel_params)
    out = jax.block_until_ready(out)

    ref = qqn_reference(np.asarray(x), *ref_consts)
    np.testing.assert_allclose(np.asarray(out), ref, rtol=1e-3, atol=1e-3)
    assert out.shape == (BATCH, N_ACT) and out.dtype == jnp.float32
    print("KERNEL_OK")
</pallas_src>

<mosaic_0001>
module attributes {stable_mosaic.version = 11 : i64} {
  func.func @qqn_kernel(%arg0: i32, %arg1: memref<8x16xf32, #tpu.memory_space<vmem>>, %arg2: memref<32x512xf32, #tpu.memory_space<vmem>>, %arg3: memref<4x128x128xf32, #tpu.memory_space<vmem>>, %arg4: memref<8x128xf32, #tpu.memory_space<vmem>>) attributes {dimension_semantics = [#tpu.dimension_semantics<arbitrary>], iteration_bounds = array<i64: 1>, scalar_prefetch = 0 : i64, scratch_operands = 0 : i64, tpu.core_type = #tpu.core_type<tc>, window_params = [{pipeline_mode = #tpu.pipeline_mode<synchronous>, transform_indices = @transform_0, window_bounds = array<i64: 8, 16>}, {pipeline_mode = #tpu.pipeline_mode<synchronous>, transform_indices = @transform_1, window_bounds = array<i64: 32, 512>}, {pipeline_mode = #tpu.pipeline_mode<synchronous>, transform_indices = @transform_2, window_bounds = array<i64: 4, 128, 128>}, {pipeline_mode = #tpu.pipeline_mode<synchronous>, transform_indices = @transform_3, window_bounds = array<i64: 8, 128>}]} {
    %c0 = arith.constant 0 : index
    %c0_0 = arith.constant 0 : index
    %0 = vector.load %arg2[%c0, %c0_0] : memref<32x512xf32, #tpu.memory_space<vmem>>, vector<16x512xf32>
    %c0_1 = arith.constant 0 : index
    %c0_2 = arith.constant 0 : index
    %1 = vector.load %arg1[%c0_1, %c0_2] : memref<8x16xf32, #tpu.memory_space<vmem>>, vector<8x16xf32>
    %cst = arith.constant dense<0.000000e+00> : vector<8x512xf32>
    %2 = tpu.matmul %1, %0, %cst {dimension_numbers = #tpu.dot_dimension_numbers<[1], [0], [0], [1], [0, 0, 1, 1], [], []>} : vector<8x16xf32>, vector<16x512xf32>, vector<8x512xf32> -> vector<8x512xf32>
    %cst_3 = arith.constant 0.000000e+00 : f32
    %3 = vector.broadcast %cst_3 : f32 to vector<8x512xf32>
    %4 = arith.cmpf olt, %2, %3 : vector<8x512xf32>
    %cst_4 = arith.constant -1.000000e+00 : f32
    %cst_5 = arith.constant 1.000000e+00 : f32
    %5 = vector.broadcast %cst_4 : f32 to vector<8x512xf32>
    %6 = vector.broadcast %cst_5 : f32 to vector<8x512xf32>
    %7 = arith.select %4, %5, %6 : vector<8x512xi1>, vector<8x512xf32>
    %8 = math.absf %2 : vector<8x512xf32>
    %cst_6 = arith.constant 2.41421366 : f32
    %9 = vector.broadcast %cst_6 : f32 to vector<8x512xf32>
    %10 = arith.cmpf ogt, %8, %9 : vector<8x512xf32>
    %cst_7 = arith.constant 0.414213568 : f32
    %11 = vector.broadcast %cst_7 : f32 to vector<8x512xf32>
    %12 = arith.cmpf ogt, %8, %11 : vector<8x512xf32>
    %cst_8 = arith.constant dense<true> : vector<8x512xi1>
    %13 = arith.xori %10, %cst_8 : vector<8x512xi1>
    %14 = arith.andi %12, %13 : vector<8x512xi1>
    %cst_9 = arith.constant 1.000000e-30 : f32
    %15 = vector.broadcast %cst_9 : f32 to vector<8x512xf32>
    %16 = arith.maximumf %8, %15 : vector<8x512xf32>
    %cst_10 = arith.constant -1.000000e+00 : f32
    %17 = vector.broadcast %cst_10 : f32 to vector<8x512xf32>
    %18 = arith.divf %17, %16 : vector<8x512xf32>
    %cst_11 = arith.constant 1.000000e+00 : f32
    %19 = vector.broadcast %cst_11 : f32 to vector<8x512xf32>
    %20 = arith.subf %8, %19 : vector<8x512xf32>
    %cst_12 = arith.constant 1.000000e+00 : f32
    %21 = vector.broadcast %cst_12 : f32 to vector<8x512xf32>
    %22 = arith.addf %8, %21 : vector<8x512xf32>
    %23 = arith.divf %20, %22 : vector<8x512xf32>
    %24 = arith.select %14, %23, %8 : vector<8x512xi1>, vector<8x512xf32>
    %25 = arith.select %10, %18, %24 : vector<8x512xi1>, vector<8x512xf32>
    %cst_13 = arith.constant 0.785398185 : f32
    %cst_14 = arith.constant 0.000000e+00 : f32
    %26 = vector.broadcast %cst_13 : f32 to vector<8x512xf32>
    %27 = vector.broadcast %cst_14 : f32 to vector<8x512xf32>
    %28 = arith.select %14, %26, %27 : vector<8x512xi1>, vector<8x512xf32>
    %cst_15 = arith.constant 1.57079637 : f32
    %29 = vector.broadcast %cst_15 : f32 to vector<8x512xf32>
    %30 = arith.select %10, %29, %28 : vector<8x512xi1>, vector<8x512xf32>
    %31 = arith.mulf %25, %25 : vector<8x512xf32>
    %cst_16 = arith.constant 0.0805374458 : f32
    %32 = vector.broadcast %cst_16 : f32 to vector<8x512xf32>
    %33 = arith.mulf %32, %31 : vector<8x512xf32>
    %cst_17 = arith.constant 0.138776854 : f32
    %34 = vector.broadcast %cst_17 : f32 to vector<8x512xf32>
    %35 = arith.subf %33, %34 : vector<8x512xf32>
    %36 = arith.mulf %35, %31 : vector<8x512xf32>
    %cst_18 = arith.constant 0.199777111 : f32
    %37 = vector.broadcast %cst_18 : f32 to vector<8x512xf32>
    %38 = arith.addf %36, %37 : vector<8x512xf32>
    %39 = arith.mulf %38, %31 : vector<8x512xf32>
    %cst_19 = arith.constant 0.333329499 : f32
    %40 = vector.broadcast %cst_19 : f32 to vector<8x512xf32>
    %41 = arith.subf %39, %40 : vector<8x512xf32>
    %42 = arith.mulf %41, %31 : vector<8x512xf32>
    %43 = arith.mulf %42, %25 : vector<8x512xf32>
    %44 = arith.addf %43, %25 : vector<8x512xf32>
    %45 = arith.addf %30, %44 : vector<8x512xf32>
    %46 = arith.mulf %7, %45 : vector<8x512xf32>
    %c19 = arith.constant 19 : index
    %c0_20 = arith.constant 0 : index
    %47 = vector.load %arg2[%c19, %c0_20] : memref<32x512xf32, #tpu.memory_space<vmem>>, vector<1x512xf32>
    %c20 = arith.constant 20 : index
    %c0_21 = arith.constant 0 : index
    %48 = vector.load %arg2[%c20, %c0_21] : memref<32x512xf32, #tpu.memory_space<vmem>>, vector<1x128xf32>
    %cst_22 = arith.constant 5.000000e-01 : f32
    %49 = vector.broadcast %cst_22 : f32 to vector<1x128xf32>
    %50 = arith.cmpf ogt, %48, %49 : vector<1x128xf32>
    %c21 = arith.constant 21 : index
    %c0_23 = arith.constant 0 : index
    %51 = vector.load %arg2[%c21, %c0_23] : memref<32x512xf32, #tpu.memory_space<vmem>>, vector<1x128xf32>
    %cst_24 = arith.constant 5.000000e-01 : f32
    %52 = vector.broadcast %cst_24 : f32 to vector<1x128xf32>
    %53 = arith.cmpf ogt, %51, %52 : vector<1x128xf32>
    %c22 = arith.constant 22 : index
    %c0_25 = arith.constant 0 : index
    %54 = vector.load %arg2[%c22, %c0_25] : memref<32x512xf32, #tpu.memory_space<vmem>>, vector<1x128xf32>
    %cst_26 = arith.constant 5.000000e-01 : f32
    %55 = vector.broadcast %cst_26 : f32 to vector<1x128xf32>
    %56 = arith.cmpf ogt, %54, %55 : vector<1x128xf32>
    %c23 = arith.constant 23 : index
    %c0_27 = arith.constant 0 : index
    %57 = vector.load %arg2[%c23, %c0_27] : memref<32x512xf32, #tpu.memory_space<vmem>>, vector<1x128xf32>
    %cst_28 = arith.constant 5.000000e-01 : f32
    %58 = vector.broadcast %cst_28 : f32 to vector<1x128xf32>
    %59 = arith.cmpf ogt, %57, %58 : vector<1x128xf32>
    %c24 = arith.constant 24 : index
    %c0_29 = arith.constant 0 : index
    %60 = vector.load %arg2[%c24, %c0_29] : memref<32x512xf32, #tpu.memory_space<vmem>>, vector<1x128xf32>
    %61 = vector.shape_cast %60 : vector<1x128xf32> to vector<1x128xf32>
    %62 = vector.broadcast %61 : vector<1x128xf32> to vector<8x128xf32>
    %c16 = arith.constant 16 : index
    %c0_30 = arith.constant 0 : index
    %63 = vector.load %arg2[%c16, %c0_30] : memref<32x512xf32, #tpu.memory_space<vmem>>, vector<1x512xf32>
    %64 = vector.broadcast %63 : vector<1x512xf32> to vector<8x512xf32>
    %65 = arith.mulf %46, %64 : vector<8x512xf32>
    %66 = math.cos %65 : vector<8x512xf32>
    %67 = math.sin %65 : vector<8x512xf32>
    %68 = vector.broadcast %47 : vector<1x512xf32> to vector<8x512xf32>
    %69 = arith.mulf %67, %68 : vector<8x512xf32>
    %70 = vector.extract_strided_slice %66 {offsets = [0, 0], sizes = [8, 128], strides = [1, 1]} : vector<8x512xf32> to vector<8x128xf32>
    %71 = vector.extract_strided_slice %69 {offsets = [0, 0], sizes = [8, 128], strides = [1, 1]} : vector<8x512xf32> to vector<8x128xf32>
    %72 = vector.extract_strided_slice %62 {offsets = [0, 56], sizes = [8, 72], strides = [1, 1]} : vector<8x128xf32> to vector<8x72xf32>
    %73 = vector.extract_strided_slice %62 {offsets = [0, 0], sizes = [8, 56], strides = [1, 1]} : vector<8x128xf32> to vector<8x56xf32>
    %74 = tpu.concatenate %72, %73 in 1 : vector<8x72xf32>, vector<8x56xf32> -> vector<8x128xf32>
    %75 = vector.extract_strided_slice %62 {offsets = [0, 72], sizes = [8, 56], strides = [1, 1]} : vector<8x128xf32> to vector<8x56xf32>
    %76 = vector.extract_strided_slice %62 {offsets = [0, 0], sizes = [8, 72], strides = [1, 1]} : vector<8x128xf32> to vector<8x72xf32>
    %77 = tpu.concatenate %75, %76 in 1 : vector<8x56xf32>, vector<8x72xf32> -> vector<8x128xf32>
    %78 = vector.shape_cast %59 : vector<1x128xi1> to vector<1x128xi1>
    %79 = vector.broadcast %78 : vector<1x128xi1> to vector<8x128xi1>
    %80 = arith.select %79, %74, %77 : vector<8x128xi1>, vector<8x128xf32>
    %81 = arith.mulf %70, %62 : vector<8x128xf32>
    %82 = arith.mulf %71, %80 : vector<8x128xf32>
    %83 = arith.addf %81, %82 : vector<8x128xf32>
    %84 = vector.extract_strided_slice %66 {offsets = [0, 128], sizes = [8, 128], strides = [1, 1]} : vector<8x512xf32> to vector<8x128xf32>
    %85 = vector.extract_strided_slice %69 {offsets = [0, 128], sizes = [8, 128], strides = [1, 1]} : vector<8x512xf32> to vector<8x128xf32>
    %86 = vector.extract_strided_slice %83 {offsets = [0, 60], sizes = [8, 68], strides = [1, 1]} : vector<8x128xf32> to vector<8x68xf32>
    %87 = vector.extract_strided_slice %83 {offsets = [0, 0], sizes = [8, 60], strides = [1, 1]} : vector<8x128xf32> to vector<8x60xf32>
    %88 = tpu.concatenate %86, %87 in 1 : vector<8x68xf32>, vector<8x60xf32> -> vector<8x128xf32>
    %89 = vector.extract_strided_slice %83 {offsets = [0, 68], sizes = [8, 60], strides = [1, 1]} : vector<8x128xf32> to vector<8x60xf32>
    %90 = vector.extract_strided_slice %83 {offsets = [0, 0], sizes = [8, 68], strides = [1, 1]} : vector<8x128xf32> to vector<8x68xf32>
    %91 = tpu.concatenate %89, %90 in 1 : vector<8x60xf32>, vector<8x68xf32> -> vector<8x128xf32>
    %92 = vector.shape_cast %56 : vector<1x128xi1> to vector<1x128xi1>
    %93 = vector.broadcast %92 : vector<1x128xi1> to vector<8x128xi1>
    %94 = arith.select %93, %88, %91 : vector<8x128xi1>, vector<8x128xf32>
    %95 = arith.mulf %84, %83 : vector<8x128xf32>
    %96 = arith.mulf %85, %94 : vector<8x128xf32>
    %97 = arith.addf %95, %96 : vector<8x128xf32>
    %98 = vector.extract_strided_slice %66 {offsets = [0, 256], sizes = [8, 128], strides = [1, 1]} : vector<8x512xf32> to vector<8x128xf32>
    %99 = vector.extract_strided_slice %69 {offsets = [0, 256], sizes = [8, 128], strides = [1, 1]} : vector<8x512xf32> to vector<8x128xf32>
    %100 = vector.extract_strided_slice %97 {offsets = [0, 62], sizes = [8, 66], strides = [1, 1]} : vector<8x128xf32> to vector<8x66xf32>
    %101 = vector.extract_strided_slice %97 {offsets = [0, 0], sizes = [8, 62], strides = [1, 1]} : vector<8x128xf32> to vector<8x62xf32>
    %102 = tpu.concatenate %100, %101 in 1 : vector<8x66xf32>, vector<8x62xf32> -> vector<8x128xf32>
    %103 = vector.extract_strided_slice %97 {offsets = [0, 66], sizes = [8, 62], strides = [1, 1]} : vector<8x128xf32> to vector<8x62xf32>
    %104 = vector.extract_strided_slice %97 {offsets = [0, 0], sizes = [8, 66], strides = [1, 1]} : vector<8x128xf32> to vector<8x66xf32>
    %105 = tpu.concatenate %103, %104 in 1 : vector<8x62xf32>, vector<8x66xf32> -> vector<8x128xf32>
    %106 = vector.shape_cast %53 : vector<1x128xi1> to vector<1x128xi1>
    %107 = vector.broadcast %106 : vector<1x128xi1> to vector<8x128xi1>
    %108 = arith.select %107, %102, %105 : vector<8x128xi1>, vector<8x128xf32>
    %109 = arith.mulf %98, %97 : vector<8x128xf32>
    %110 = arith.mulf %99, %108 : vector<8x128xf32>
    %111 = arith.addf %109, %110 : vector<8x128xf32>
    %112 = vector.extract_strided_slice %66 {offsets = [0, 384], sizes = [8, 128], strides = [1, 1]} : vector<8x512xf32> to vector<8x128xf32>
    %113 = vector.extract_strided_slice %69 {offsets = [0, 384], sizes = [8, 128], strides = [1, 1]} : vector<8x512xf32> to vector<8x128xf32>
    %114 = vector.extract_strided_slice %111 {offsets = [0, 63], sizes = [8, 65], strides = [1, 1]} : vector<8x128xf32> to vector<8x65xf32>
    %115 = vector.extract_strided_slice %111 {offsets = [0, 0], sizes = [8, 63], strides = [1, 1]} : vector<8x128xf32> to vector<8x63xf32>
    %116 = tpu.concatenate %114, %115 in 1 : vector<8x65xf32>, vector<8x63xf32> -> vector<8x128xf32>
    %117 = vector.extract_strided_slice %111 {offsets = [0, 65], sizes = [8, 63], strides = [1, 1]} : vector<8x128xf32> to vector<8x63xf32>
    %118 = vector.extract_strided_slice %111 {offsets = [0, 0], sizes = [8, 65], strides = [1, 1]} : vector<8x128xf32> to vector<8x65xf32>
    %119 = tpu.concatenate %117, %118 in 1 : vector<8x63xf32>, vector<8x65xf32> -> vector<8x128xf32>
    %120 = vector.shape_cast %50 : vector<1x128xi1> to vector<1x128xi1>
    %121 = vector.broadcast %120 : vector<1x128xi1> to vector<8x128xi1>
    %122 = arith.select %121, %116, %119 : vector<8x128xi1>, vector<8x128xf32>
    %123 = arith.mulf %112, %111 : vector<8x128xf32>
    %124 = arith.mulf %113, %122 : vector<8x128xf32>
    %125 = arith.addf %123, %124 : vector<8x128xf32>
    %c0_31 = arith.constant 0 : index
    %c0_32 = arith.constant 0 : index
    %c0_33 = arith.constant 0 : index
    %126 = vector.load %arg3[%c0_31, %c0_32, %c0_33] : memref<4x128x128xf32, #tpu.memory_space<vmem>>, vector<1x128x128xf32>
    %127 = vector.shape_cast %126 : vector<1x128x128xf32> to vector<128x128xf32>
    %cst_34 = arith.constant dense<0.000000e+00> : vector<8x128xf32>
    %128 = tpu.matmul %125, %127, %cst_34 {dimension_numbers = #tpu.dot_dimension_numbers<[1], [0], [0], [1], [0, 0, 1, 1], [], []>} : vector<8x128xf32>, vector<128x128xf32>, vector<8x128xf32> -> vector<8x128xf32>
    %c17 = arith.constant 17 : index
    %c0_35 = arith.constant 0 : index
    %129 = vector.load %arg2[%c17, %c0_35] : memref<32x512xf32, #tpu.memory_space<vmem>>, vector<1x512xf32>
    %130 = vector.broadcast %129 : vector<1x512xf32> to vector<8x512xf32>
    %131 = arith.mulf %46, %130 : vector<8x512xf32>
    %132 = math.cos %131 : vector<8x512xf32>
    %133 = math.sin %131 : vector<8x512xf32>
    %134 = vector.broadcast %47 : vector<1x512xf32> to vector<8x512xf32>
    %135 = arith.mulf %133, %134 : vector<8x512xf32>
    %136 = vector.extract_strided_slice %132 {offsets = [0, 0], sizes = [8, 128], strides = [1, 1]} : vector<8x512xf32> to vector<8x128xf32>
    %137 = vector.extract_strided_slice %135 {offsets = [0, 0], sizes = [8, 128], strides = [1, 1]} : vector<8x512xf32> to vector<8x128xf32>
    %138 = vector.extract_strided_slice %128 {offsets = [0, 56], sizes = [8, 72], strides = [1, 1]} : vector<8x128xf32> to vector<8x72xf32>
    %139 = vector.extract_strided_slice %128 {offsets = [0, 0], sizes = [8, 56], strides = [1, 1]} : vector<8x128xf32> to vector<8x56xf32>
    %140 = tpu.concatenate %138, %139 in 1 : vector<8x72xf32>, vector<8x56xf32> -> vector<8x128xf32>
    %141 = vector.extract_strided_slice %128 {offsets = [0, 72], sizes = [8, 56], strides = [1, 1]} : vector<8x128xf32> to vector<8x56xf32>
    %142 = vector.extract_strided_slice %128 {offsets = [0, 0], sizes = [8, 72], strides = [1, 1]} : vector<8x128xf32> to vector<8x72xf32>
    %143 = tpu.concatenate %141, %142 in 1 : vector<8x56xf32>, vector<8x72xf32> -> vector<8x128xf32>
    %144 = vector.shape_cast %59 : vector<1x128xi1> to vector<1x128xi1>
    %145 = vector.broadcast %144 : vector<1x128xi1> to vector<8x128xi1>
    %146 = arith.select %145, %140, %143 : vector<8x128xi1>, vector<8x128xf32>
    %147 = arith.mulf %136, %128 : vector<8x128xf32>
    %148 = arith.mulf %137, %146 : vector<8x128xf32>
    %149 = arith.addf %147, %148 : vector<8x128xf32>
    %150 = vector.extract_strided_slice %132 {offsets = [0, 128], sizes = [8, 128], strides = [1, 1]} : vector<8x512xf32> to vector<8x128xf32>
    %151 = vector.extract_strided_slice %135 {offsets = [0, 128], sizes = [8, 128], strides = [1, 1]} : vector<8x512xf32> to vector<8x128xf32>
    %152 = vector.extract_strided_slice %149 {offsets = [0, 60], sizes = [8, 68], strides = [1, 1]} : vector<8x128xf32> to vector<8x68xf32>
    %153 = vector.extract_strided_slice %149 {offsets = [0, 0], sizes = [8, 60], strides = [1, 1]} : vector<8x128xf32> to vector<8x60xf32>
    %154 = tpu.concatenate %152, %153 in 1 : vector<8x68xf32>, vector<8x60xf32> -> vector<8x128xf32>
    %155 = vector.extract_strided_slice %149 {offsets = [0, 68], sizes = [8, 60], strides = [1, 1]} : vector<8x128xf32> to vector<8x60xf32>
    %156 = vector.extract_strided_slice %149 {offsets = [0, 0], sizes = [8, 68], strides = [1, 1]} : vector<8x128xf32> to vector<8x68xf32>
    %157 = tpu.concatenate %155, %156 in 1 : vector<8x60xf32>, vector<8x68xf32> -> vector<8x128xf32>
    %158 = vector.shape_cast %56 : vector<1x128xi1> to vector<1x128xi1>
    %159 = vector.broadcast %158 : vector<1x128xi1> to vector<8x128xi1>
    %160 = arith.select %159, %154, %157 : vector<8x128xi1>, vector<8x128xf32>
    %161 = arith.mulf %150, %149 : vector<8x128xf32>
    %162 = arith.mulf %151, %160 : vector<8x128xf32>
    %163 = arith.addf %161, %162 : vector<8x128xf32>
    %164 = vector.extract_strided_slice %132 {offsets = [0, 256], sizes = [8, 128], strides = [1, 1]} : vector<8x512xf32> to vector<8x128xf32>
    %165 = vector.extract_strided_slice %135 {offsets = [0, 256], sizes = [8, 128], strides = [1, 1]} : vector<8x512xf32> to vector<8x128xf32>
    %166 = vector.extract_strided_slice %163 {offsets = [0, 62], sizes = [8, 66], strides = [1, 1]} : vector<8x128xf32> to vector<8x66xf32>
    %167 = vector.extract_strided_slice %163 {offsets = [0, 0], sizes = [8, 62], strides = [1, 1]} : vector<8x128xf32> to vector<8x62xf32>
    %168 = tpu.concatenate %166, %167 in 1 : vector<8x66xf32>, vector<8x62xf32> -> vector<8x128xf32>
    %169 = vector.extract_strided_slice %163 {offsets = [0, 66], sizes = [8, 62], strides = [1, 1]} : vector<8x128xf32> to vector<8x62xf32>
    %170 = vector.extract_strided_slice %163 {offsets = [0, 0], sizes = [8, 66], strides = [1, 1]} : vector<8x128xf32> to vector<8x66xf32>
    %171 = tpu.concatenate %169, %170 in 1 : vector<8x62xf32>, vector<8x66xf32> -> vector<8x128xf32>
    %172 = vector.shape_cast %53 : vector<1x128xi1> to vector<1x128xi1>
    %173 = vector.broadcast %172 : vector<1x128xi1> to vector<8x128xi1>
    %174 = arith.select %173, %168, %171 : vector<8x128xi1>, vector<8x128xf32>
    %175 = arith.mulf %164, %163 : vector<8x128xf32>
    %176 = arith.mulf %165, %174 : vector<8x128xf32>
    %177 = arith.addf %175, %176 : vector<8x128xf32>
    %178 = vector.extract_strided_slice %132 {offsets = [0, 384], sizes = [8, 128], strides = [1, 1]} : vector<8x512xf32> to vector<8x128xf32>
    %179 = vector.extract_strided_slice %135 {offsets = [0, 384], sizes = [8, 128], strides = [1, 1]} : vector<8x512xf32> to vector<8x128xf32>
    %180 = vector.extract_strided_slice %177 {offsets = [0, 63], sizes = [8, 65], strides = [1, 1]} : vector<8x128xf32> to vector<8x65xf32>
    %181 = vector.extract_strided_slice %177 {offsets = [0, 0], sizes = [8, 63], strides = [1, 1]} : vector<8x128xf32> to vector<8x63xf32>
    %182 = tpu.concatenate %180, %181 in 1 : vector<8x65xf32>, vector<8x63xf32> -> vector<8x128xf32>
    %183 = vector.extract_strided_slice %177 {offsets = [0, 65], sizes = [8, 63], strides = [1, 1]} : vector<8x128xf32> to vector<8x63xf32>
    %184 = vector.extract_strided_slice %177 {offsets = [0, 0], sizes = [8, 65], strides = [1, 1]} : vector<8x128xf32> to vector<8x65xf32>
    %185 = tpu.concatenate %183, %184 in 1 : vector<8x63xf32>, vector<8x65xf32> -> vector<8x128xf32>
    %186 = vector.shape_cast %50 : vector<1x128xi1> to vector<1x128xi1>
    %187 = vector.broadcast %186 : vector<1x128xi1> to vector<8x128xi1>
    %188 = arith.select %187, %182, %185 : vector<8x128xi1>, vector<8x128xf32>
    %189 = arith.mulf %178, %177 : vector<8x128xf32>
    %190 = arith.mulf %179, %188 : vector<8x128xf32>
    %191 = arith.addf %189, %190 : vector<8x128xf32>
    %c1 = arith.constant 1 : index
    %c0_36 = arith.constant 0 : index
    %c0_37 = arith.constant 0 : index
    %192 = vector.load %arg3[%c1, %c0_36, %c0_37] : memref<4x128x128xf32, #tpu.memory_space<vmem>>, vector<1x128x128xf32>
    %193 = vector.shape_cast %192 : vector<1x128x128xf32> to vector<128x128xf32>
    %cst_38 = arith.constant dense<0.000000e+00> : vector<8x128xf32>
    %194 = tpu.matmul %191, %193, %cst_38 {dimension_numbers = #tpu.dot_dimension_numbers<[1], [0], [0], [1], [0, 0, 1, 1], [], []>} : vector<8x128xf32>, vector<128x128xf32>, vector<8x128xf32> -> vector<8x128xf32>
    %c18 = arith.constant 18 : index
    %c0_39 = arith.constant 0 : index
    %195 = vector.load %arg2[%c18, %c0_39] : memref<32x512xf32, #tpu.memory_space<vmem>>, vector<1x512xf32>
    %196 = vector.broadcast %195 : vector<1x512xf32> to vector<8x512xf32>
    %197 = arith.mulf %46, %196 : vector<8x512xf32>
    %198 = math.cos %197 : vector<8x512xf32>
    %199 = math.sin %197 : vector<8x512xf32>
    %200 = vector.broadcast %47 : vector<1x512xf32> to vector<8x512xf32>
    %201 = arith.mulf %199, %200 : vector<8x512xf32>
    %202 = vector.extract_strided_slice %198 {offsets = [0, 0], sizes = [8, 128], strides = [1, 1]} : vector<8x512xf32> to vector<8x128xf32>
    %203 = vector.extract_strided_slice %201 {offsets = [0, 0], sizes = [8, 128], strides = [1, 1]} : vector<8x512xf32> to vector<8x128xf32>
    %204 = vector.extract_strided_slice %194 {offsets = [0, 56], sizes = [8, 72], strides = [1, 1]} : vector<8x128xf32> to vector<8x72xf32>
    %205 = vector.extract_strided_slice %194 {offsets = [0, 0], sizes = [8, 56], strides = [1, 1]} : vector<8x128xf32> to vector<8x56xf32>
    %206 = tpu.concatenate %204, %205 in 1 : vector<8x72xf32>, vector<8x56xf32> -> vector<8x128xf32>
    %207 = vector.extract_strided_slice %194 {offsets = [0, 72], sizes = [8, 56], strides = [1, 1]} : vector<8x128xf32> to vector<8x56xf32>
    %208 = vector.extract_strided_slice %194 {offsets = [0, 0], sizes = [8, 72], strides = [1, 1]} : vector<8x128xf32> to vector<8x72xf32>
    %209 = tpu.concatenate %207, %208 in 1 : vector<8x56xf32>, vector<8x72xf32> -> vector<8x128xf32>
    %210 = vector.shape_cast %59 : vector<1x128xi1> to vector<1x128xi1>
    %211 = vector.broadcast %210 : vector<1x128xi1> to vector<8x128xi1>
    %212 = arith.select %211, %206, %209 : vector<8x128xi1>, vector<8x128xf32>
    %213 = arith.mulf %202, %194 : vector<8x128xf32>
    %214 = arith.mulf %203, %212 : vector<8x128xf32>
    %215 = arith.addf %213, %214 : vector<8x128xf32>
    %216 = vector.extract_strided_slice %198 {offsets = [0, 128], sizes = [8, 128], strides = [1, 1]} : vector<8x512xf32> to vector<8x128xf32>
    %217 = vector.extract_strided_slice %201 {offsets = [0, 128], sizes = [8, 128], strides = [1, 1]} : vector<8x512xf32> to vector<8x128xf32>
    %218 = vector.extract_strided_slice %215 {offsets = [0, 60], sizes = [8, 68], strides = [1, 1]} : vector<8x128xf32> to vector<8x68xf32>
    %219 = vector.extract_strided_slice %215 {offsets = [0, 0], sizes = [8, 60], strides = [1, 1]} : vector<8x128xf32> to vector<8x60xf32>
    %220 = tpu.concatenate %218, %219 in 1 : vector<8x68xf32>, vector<8x60xf32> -> vector<8x128xf32>
    %221 = vector.extract_strided_slice %215 {offsets = [0, 68], sizes = [8, 60], strides = [1, 1]} : vector<8x128xf32> to vector<8x60xf32>
    %222 = vector.extract_strided_slice %215 {offsets = [0, 0], sizes = [8, 68], strides = [1, 1]} : vector<8x128xf32> to vector<8x68xf32>
    %223 = tpu.concatenate %221, %222 in 1 : vector<8x60xf32>, vector<8x68xf32> -> vector<8x128xf32>
    %224 = vector.shape_cast %56 : vector<1x128xi1> to vector<1x128xi1>
    %225 = vector.broadcast %224 : vector<1x128xi1> to vector<8x128xi1>
    %226 = arith.select %225, %220, %223 : vector<8x128xi1>, vector<8x128xf32>
    %227 = arith.mulf %216, %215 : vector<8x128xf32>
    %228 = arith.mulf %217, %226 : vector<8x128xf32>
    %229 = arith.addf %227, %228 : vector<8x128xf32>
    %230 = vector.extract_strided_slice %198 {offsets = [0, 256], sizes = [8, 128], strides = [1, 1]} : vector<8x512xf32> to vector<8x128xf32>
    %231 = vector.extract_strided_slice %201 {offsets = [0, 256], sizes = [8, 128], strides = [1, 1]} : vector<8x512xf32> to vector<8x128xf32>
    %232 = vector.extract_strided_slice %229 {offsets = [0, 62], sizes = [8, 66], strides = [1, 1]} : vector<8x128xf32> to vector<8x66xf32>
    %233 = vector.extract_strided_slice %229 {offsets = [0, 0], sizes = [8, 62], strides = [1, 1]} : vector<8x128xf32> to vector<8x62xf32>
    %234 = tpu.concatenate %232, %233 in 1 : vector<8x66xf32>, vector<8x62xf32> -> vector<8x128xf32>
    %235 = vector.extract_strided_slice %229 {offsets = [0, 66], sizes = [8, 62], strides = [1, 1]} : vector<8x128xf32> to vector<8x62xf32>
    %236 = vector.extract_strided_slice %229 {offsets = [0, 0], sizes = [8, 66], strides = [1, 1]} : vector<8x128xf32> to vector<8x66xf32>
    %237 = tpu.concatenate %235, %236 in 1 : vector<8x62xf32>, vector<8x66xf32> -> vector<8x128xf32>
    %238 = vector.shape_cast %53 : vector<1x128xi1> to vector<1x128xi1>
    %239 = vector.broadcast %238 : vector<1x128xi1> to vector<8x128xi1>
    %240 = arith.select %239, %234, %237 : vector<8x128xi1>, vector<8x128xf32>
    %241 = arith.mulf %230, %229 : vector<8x128xf32>
    %242 = arith.mulf %231, %240 : vector<8x128xf32>
    %243 = arith.addf %241, %242 : vector<8x128xf32>
    %244 = vector.extract_strided_slice %198 {offsets = [0, 384], sizes = [8, 128], strides = [1, 1]} : vector<8x512xf32> to vector<8x128xf32>
    %245 = vector.extract_strided_slice %201 {offsets = [0, 384], sizes = [8, 128], strides = [1, 1]} : vector<8x512xf32> to vector<8x128xf32>
    %246 = vector.extract_strided_slice %243 {offsets = [0, 63], sizes = [8, 65], strides = [1, 1]} : vector<8x128xf32> to vector<8x65xf32>
    %247 = vector.extract_strided_slice %243 {offsets = [0, 0], sizes = [8, 63], strides = [1, 1]} : vector<8x128xf32> to vector<8x63xf32>
    %248 = tpu.concatenate %246, %247 in 1 : vector<8x65xf32>, vector<8x63xf32> -> vector<8x128xf32>
    %249 = vector.extract_strided_slice %243 {offsets = [0, 65], sizes = [8, 63], strides = [1, 1]} : vector<8x128xf32> to vector<8x63xf32>
    %250 = vector.extract_strided_slice %243 {offsets = [0, 0], sizes = [8, 65], strides = [1, 1]} : vector<8x128xf32> to vector<8x65xf32>
    %251 = tpu.concatenate %249, %250 in 1 : vector<8x63xf32>, vector<8x65xf32> -> vector<8x128xf32>
    %252 = vector.shape_cast %50 : vector<1x128xi1> to vector<1x128xi1>
    %253 = vector.broadcast %252 : vector<1x128xi1> to vector<8x128xi1>
    %254 = arith.select %253, %248, %251 : vector<8x128xi1>, vector<8x128xf32>
    %255 = arith.mulf %244, %243 : vector<8x128xf32>
    %256 = arith.mulf %245, %254 : vector<8x128xf32>
    %257 = arith.addf %255, %256 : vector<8x128xf32>
    %c2 = arith.constant 2 : index
    %c0_40 = arith.constant 0 : index
    %c0_41 = arith.constant 0 : index
    %258 = vector.load %arg3[%c2, %c0_40, %c0_41] : memref<4x128x128xf32, #tpu.memory_space<vmem>>, vector<1x128x128xf32>
    %259 = vector.shape_cast %258 : vector<1x128x128xf32> to vector<128x128xf32>
    %cst_42 = arith.constant dense<0.000000e+00> : vector<8x128xf32>
    %260 = tpu.matmul %257, %259, %cst_42 {dimension_numbers = #tpu.dot_dimension_numbers<[1], [0], [0], [1], [0, 0, 1, 1], [], []>} : vector<8x128xf32>, vector<128x128xf32>, vector<8x128xf32> -> vector<8x128xf32>
    %261 = arith.mulf %260, %260 : vector<8x128xf32>
    %c3 = arith.constant 3 : index
    %c0_43 = arith.constant 0 : index
    %c0_44 = arith.constant 0 : index
    %262 = vector.load %arg3[%c3, %c0_43, %c0_44] : memref<4x128x128xf32, #tpu.memory_space<vmem>>, vector<1x128x128xf32>
    %263 = vector.shape_cast %262 : vector<1x128x128xf32> to vector<128x128xf32>
    %cst_45 = arith.constant dense<0.000000e+00> : vector<8x128xf32>
    %264 = tpu.matmul %261, %263, %cst_45 {dimension_numbers = #tpu.dot_dimension_numbers<[1], [0], [0], [1], [0, 0, 1, 1], [], []>} : vector<8x128xf32>, vector<128x128xf32>, vector<8x128xf32> -> vector<8x128xf32>
    %c0_46 = arith.constant 0 : index
    %c0_47 = arith.constant 0 : index
    %265 = vector.load %arg4[%c0_46, %c0_47] : memref<8x128xf32, #tpu.memory_space<vmem>>, vector<8x128xf32>
    tpu.vector_store %arg4[%c0_46, %c0_47], %264 {strides = array<i32>} : memref<8x128xf32, #tpu.memory_space<vmem>>, vector<8x128xf32>,
    return
  }
  func.func @transform_0(%arg0: i32) -> (i32, i32) {
    %c0_i32 = arith.constant 0 : i32
    %c0_i32_0 = arith.constant 0 : i32
    %c0_i32_1 = arith.constant 0 : i32
    return %c0_i32, %c0_i32_0 : i32, i32
  }
  func.func @transform_1(%arg0: i32) -> (i32, i32) {
    %c0_i32 = arith.constant 0 : i32
    %c0_i32_0 = arith.constant 0 : i32
    %c0_i32_1 = arith.constant 0 : i32
    return %c0_i32, %c0_i32_0 : i32, i32
  }
  func.func @transform_2(%arg0: i32) -> (i32, i32, i32) {
    %c0_i32 = arith.constant 0 : i32
    %c0_i32_0 = arith.constant 0 : i32
    %c0_i32_1 = arith.constant 0 : i32
    %c0_i32_2 = arith.constant 0 : i32
    return %c0_i32, %c0_i32_0, %c0_i32_1 : i32, i32, i32
  }
  func.func @transform_3(%arg0: i32) -> (i32, i32) {
    %c0_i32 = arith.constant 0 : i32
    %c0_i32_0 = arith.constant 0 : i32
    %c0_i32_1 = arith.constant 0 : i32
    return %c0_i32, %c0_i32_0 : i32, i32
  }
}

</mosaic_0001>

<llo_original>
// kernel: tpu_custom_call.1
$region0: #{tpu_custom_call.1}
  #allocation0 [shape = 'u32[]', space=smem, size = 0x4, offset = 0x4, fixed_abs, tag = 'smem constant byte address 0x4 - core index']
  #allocation1 [shape = 'u32[144,128]{1,0:T(1,128)}', space=vmem, size = 0x12000, scoped, tag = 'internal scratch']
  %s0 = inlined_call_operand.hbm [shape: f32[8,16], index: 0, kind: input, shape index: {}]
  %s1 = inlined_call_operand.hbm [shape: f32[32,512], index: 1, kind: input, shape index: {}]
  %s2 = inlined_call_operand.hbm [shape: f32[4,128,128], index: 2, kind: input, shape index: {}]
  %s3 = inlined_call_operand.hbm [shape: f32[8,128], index: 3, kind: output, shape index: {}]
  %s4 = sld [smem:[#allocation0]]
  $region34: #{tpu_custom_call.1} parent=0
    _
  %s6 = ssub.s32 1, %s4
  %s7 = scalar_select 0, %s6, %s4
  $region1: #{tpu_custom_call.1} parent=0
    #allocation2 [shape = 'u8[4096]{0}', space=vmem, size = 0x1000, scoped, tag = 'input window, operand 0, single buffered']
    #allocation3 [shape = 's32[1]{0}', space=sflag, size = 0x4, scoped, tag = 'scoped memory for tpu_custom_call.1']
    #allocation4 [shape = 's32[1]{0}', space=sflag, size = 0x4, scoped, tag = 'scoped memory for tpu_custom_call.1']
    #allocation5 [shape = 'u8[65536]{0}', space=vmem, size = 0x10000, scoped, tag = 'input window, operand 1, single buffered']
    #allocation6 [shape = 's32[1]{0}', space=sflag, size = 0x4, scoped, tag = 'scoped memory for tpu_custom_call.1']
    #allocation7 [shape = 'u8[262144]{0}', space=vmem, size = 0x40000, scoped, tag = 'input window, operand 2, single buffered']
    #allocation8 [shape = 'u8[4096]{0}', space=vmem, size = 0x1000, scoped, tag = 'output window, operand 0, single buffered']
    %8 = vsyncpa [#allocation3], 0
    %9 = vsyncpa [#allocation6], 0
    %10 = vsyncpa [#allocation4], 0
    // Predicated region
    $region2: #{tpu_custom_call.1} parent=1 // pred_check
      _
    $region3: #{tpu_custom_call.1} parent=1 // pred_check_branch
      %12 = sbr.rel (0) target = $region5
    $region4: #{tpu_custom_call.1} parent=1 // pred_region
      %s14 = ssub.s32 128, 128
      %15 = vsyncadd [#allocation3], %s14
      %s17 = sshll.u32 [#allocation2], 4
      %s18 = int_to_ptr.vmem [resolvable:$true] %s17
      %20 = dma.hbm_to_vmem [thread:$0]  %s0, 128, %s18, [#allocation3]
    $region5: #{tpu_custom_call.1} parent=1 // pred_fallthru
      _
    // Predicated region
    $region6: #{tpu_custom_call.1} parent=1 // pred_check
      _
    $region7: #{tpu_custom_call.1} parent=1 // pred_check_branch
      %22 = sbr.rel (0) target = $region9
    $region8: #{tpu_custom_call.1} parent=1 // pred_region
      %s24 = ssub.s32 2048, 2048
      %25 = vsyncadd [#allocation6], %s24
      %s26 = sshll.u32 [#allocation5], 4
      %s27 = int_to_ptr.vmem [resolvable:$true] %s26
      %32 = dma.hbm_to_vmem [thread:$0]  %s1, 2048, %s27, [#allocation6], 512, 512, 32
    $region9: #{tpu_custom_call.1} parent=1 // pred_fallthru
      _
    // Predicated region
    $region10: #{tpu_custom_call.1} parent=1 // pred_check
      _
    $region11: #{tpu_custom_call.1} parent=1 // pred_check_branch
      %34 = sbr.rel (0) target = $region13
    $region12: #{tpu_custom_call.1} parent=1 // pred_region
      %s36 = ssub.s32 8192, 8192
      %37 = vsyncadd [#allocation6], %s36
      %s38 = sshll.u32 [#allocation7], 4
      %s39 = int_to_ptr.vmem [resolvable:$true] %s38
      %44 = dma.hbm_to_vmem [thread:$0]  %s2, 8192, %s39, [#allocation6], 128, 128, 8
    $region13: #{tpu_custom_call.1} parent=1 // pred_fallthru
      _
    // Predicated region
    $region14: #{tpu_custom_call.1} parent=1 // pred_check
      _
    $region15: #{tpu_custom_call.1} parent=1 // pred_check_branch
      %46 = sbr.rel (0) target = $region17
    $region16: #{tpu_custom_call.1} parent=1 // pred_region
      %47 = dma.done [#allocation3], 128
    $region17: #{tpu_custom_call.1} parent=1 // pred_fallthru
      _
    // Predicated region
    $region18: #{tpu_custom_call.1} parent=1 // pred_check
      _
    $region19: #{tpu_custom_call.1} parent=1 // pred_check_branch
      %49 = sbr.rel (0) target = $region21
    $region20: #{tpu_custom_call.1} parent=1 // pred_region
      %50 = dma.done [#allocation6], 2048
    $region21: #{tpu_custom_call.1} parent=1 // pred_fallthru
      _
    // Predicated region
    $region22: #{tpu_custom_call.1} parent=1 // pred_check
      _
    $region23: #{tpu_custom_call.1} parent=1 // pred_check_branch
      %52 = sbr.rel (0) target = $region25
    $region24: #{tpu_custom_call.1} parent=1 // pred_region
      %53 = dma.done [#allocation6], 8192
    $region25: #{tpu_custom_call.1} parent=1 // pred_fallthru
      _
    %v54 = vld [vmem:[#allocation5] sm:$0xff]
    %v55 = vld [vmem:[#allocation5 + $0x8] sm:$0xff]
    %v56 = vld [vmem:[#allocation5 + $0x10] sm:$0xff]
    %v57 = vld [vmem:[#allocation5 + $0x18] sm:$0xff]
    %v58 = vld [vmem:[#allocation5 + $0x20] sm:$0xff]
    %v59 = vld [vmem:[#allocation5 + $0x28] sm:$0xff]
    %v60 = vld [vmem:[#allocation5 + $0x30] sm:$0xff]
    %v61 = vld [vmem:[#allocation5 + $0x38] sm:$0xff]
    %v62 = vld [vmem:[#allocation2] sm:$0xff]
    %vm63 = vcmask 130048
    %v65 = vsel %vm63, %v62, 0
    %67 = vmatprep.subr.mxu0 %v55
    %68 = vmatpush1.msra.mxu0 %v54
    %69 = vmatprep.subr.mxu0 %v59
    %70 = vmatpush1.msra.mxu0 %v58
    %71 = vmatprep.subr.mxu0 0.0
    %72 = vmatpush1.msra.mxu0 0.0
    %73 = vmatprep.subr.mxu0 0.0
    %74 = vmatpush1.msra.mxu0 0.0
    %75 = vmatprep.subr.mxu0 0.0
    %76 = vmatpush1.msra.mxu0 0.0
    %77 = vmatprep.subr.mxu0 0.0
    %78 = vmatpush1.msra.mxu0 0.0
    %79 = vmatprep.subr.mxu0 0.0
    %80 = vmatpush1.msra.mxu0 0.0
    %81 = vmatprep.subr.mxu0 0.0
    %82 = vmatpush1.msra.mxu0 0.0
    %83 = vmatprep.subr.mxu0 0.0
    %84 = vmatpush1.msra.mxu0 0.0
    %85 = vmatprep.subr.mxu0 0.0
    %86 = vmatpush1.msra.mxu0 0.0
    %87 = vmatprep.subr.mxu0 0.0
    %88 = vmatpush1.msra.mxu0 0.0
    %89 = vmatprep.subr.mxu0 0.0
    %90 = vmatpush1.msra.mxu0 0.0
    %91 = vmatprep.subr.mxu0 0.0
    %92 = vmatpush1.msra.mxu0 0.0
    %93 = vmatprep.subr.mxu0 0.0
    %94 = vmatpush1.msra.mxu0 0.0
    %95 = vmatprep.subr.mxu0 0.0
    %96 = vmatpush1.msra.mxu0 0.0
    %97 = vmatprep.subr.mxu0 0.0
    %98 = vmatpush1.msra.mxu0 0.0
    %99 = vmatprep.subr.mxu0 0.0
    %100 = vmatpush1.msra.mxu0 0.0
    %101 = vmatprep.subr.mxu0 0.0
    %102 = vmatpush1.msra.mxu0 0.0
    %103 = vmatprep.subr.mxu0 0.0
    %104 = vmatpush1.msra.mxu0 0.0
    %105 = vmatprep.subr.mxu0 0.0
    %106 = vmatpush1.msra.mxu0 0.0
    %107 = vmatprep.subr.mxu0 0.0
    %108 = vmatpush1.msra.mxu0 0.0
    %109 = vmatprep.subr.mxu0 0.0
    %110 = vmatpush1.msra.mxu0 0.0
    %111 = vmatprep.subr.mxu0 0.0
    %112 = vmatpush1.msra.mxu0 0.0
    %113 = vmatprep.subr.mxu0 0.0
    %114 = vmatpush1.msra.mxu0 0.0
    %115 = vmatprep.subr.mxu0 0.0
    %116 = vmatpush1.msra.mxu0 0.0
    %117 = vmatprep.subr.mxu0 0.0
    %118 = vmatpush1.msra.mxu0 0.0
    %119 = vmatprep.subr.mxu0 0.0
    %120 = vmatpush1.msra.mxu0 0.0
    %121 = vmatprep.subr.mxu0 0.0
    %122 = vmatpush1.msra.mxu0 0.0
    %123 = vmatprep.subr.mxu0 0.0
    %124 = vmatpush1.msra.mxu0 0.0
    %125 = vmatprep.subr.mxu0 0.0
    %126 = vmatpush1.msra.mxu0 0.0
    %127 = vmatprep.subr.mxu0 0.0
    %128 = vmatpush1.msra.mxu0 0.0
    %129 = vmatprep.subr.mxu0 0.0
    %130 = vmatpush1.msra.mxu0 0.0
    %131 = vmatprep.mubr.f32.mxu0 0.0
    %132 = vmatmul.mubr.f32.gmra.mrb[0].mxu0 %v65
    %v133 = vpop.f32.mrb[0].mxu0
    %v134 = vadd.f32 0.0, %v133
    %v135 = vpop.f32.mrb[0].mxu0
    %v136 = vadd.f32 0.0, %v135
    %137 = vdwg.mxu0
    %138 = vmatprep.subr.mxu0 %v57
    %139 = vmatpush1.msra.mxu0 %v56
    %140 = vmatprep.subr.mxu0 %v61
    %141 = vmatpush1.msra.mxu0 %v60
    %142 = vmatprep.subr.mxu0 0.0
    %143 = vmatpush1.msra.mxu0 0.0
    %144 = vmatprep.subr.mxu0 0.0
    %145 = vmatpush1.msra.mxu0 0.0
    %146 = vmatprep.subr.mxu0 0.0
    %147 = vmatpush1.msra.mxu0 0.0
    %148 = vmatprep.subr.mxu0 0.0
    %149 = vmatpush1.msra.mxu0 0.0
    %150 = vmatprep.subr.mxu0 0.0
    %151 = vmatpush1.msra.mxu0 0.0
    %152 = vmatprep.subr.mxu0 0.0
    %153 = vmatpush1.msra.mxu0 0.0
    %154 = vmatprep.subr.mxu0 0.0
    %155 = vmatpush1.msra.mxu0 0.0
    %156 = vmatprep.subr.mxu0 0.0
    %157 = vmatpush1.msra.mxu0 0.0
    %158 = vmatprep.subr.mxu0 0.0
    %159 = vmatpush1.msra.mxu0 0.0
    %160 = vmatprep.subr.mxu0 0.0
    %161 = vmatpush1.msra.mxu0 0.0
    %162 = vmatprep.subr.mxu0 0.0
    %163 = vmatpush1.msra.mxu0 0.0
    %164 = vmatprep.subr.mxu0 0.0
    %165 = vmatpush1.msra.mxu0 0.0
    %166 = vmatprep.subr.mxu0 0.0
    %167 = vmatpush1.msra.mxu0 0.0
    %168 = vmatprep.subr.mxu0 0.0
    %169 = vmatpush1.msra.mxu0 0.0
    %170 = vmatprep.subr.mxu0 0.0
    %171 = vmatpush1.msra.mxu0 0.0
    %172 = vmatprep.subr.mxu0 0.0
    %173 = vmatpush1.msra.mxu0 0.0
    %174 = vmatprep.subr.mxu0 0.0
    %175 = vmatpush1.msra.mxu0 0.0
    %176 = vmatprep.subr.mxu0 0.0
    %177 = vmatpush1.msra.mxu0 0.0
    %178 = vmatprep.subr.mxu0 0.0
    %179 = vmatpush1.msra.mxu0 0.0
    %180 = vmatprep.subr.mxu0 0.0
    %181 = vmatpush1.msra.mxu0 0.0
    %182 = vmatprep.subr.mxu0 0.0
    %183 = vmatpush1.msra.mxu0 0.0
    %184 = vmatprep.subr.mxu0 0.0
    %185 = vmatpush1.msra.mxu0 0.0
    %186 = vmatprep.subr.mxu0 0.0
    %187 = vmatpush1.msra.mxu0 0.0
    %188 = vmatprep.subr.mxu0 0.0
    %189 = vmatpush1.msra.mxu0 0.0
    %190 = vmatprep.subr.mxu0 0.0
    %191 = vmatpush1.msra.mxu0 0.0
    %192 = vmatprep.subr.mxu0 0.0
    %193 = vmatpush1.msra.mxu0 0.0
    %194 = vmatprep.subr.mxu0 0.0
    %195 = vmatpush1.msra.mxu0 0.0
    %196 = vmatprep.subr.mxu0 0.0
    %197 = vmatpush1.msra.mxu0 0.0
    %198 = vmatprep.subr.mxu0 0.0
    %199 = vmatpush1.msra.mxu0 0.0
    %200 = vmatprep.subr.mxu0 0.0
    %201 = vmatpush1.msra.mxu0 0.0
    %202 = vmatprep.mubr.f32.mxu0 0.0
    %203 = vmatmul.mubr.f32.gmra.mrb[0].mxu0 %v65
    %v204 = vpop.f32.mrb[0].mxu0
    %v205 = vadd.f32 0.0, %v204
    %v206 = vpop.f32.mrb[0].mxu0
    %v207 = vadd.f32 0.0, %v206
    %208 = vdwg.mxu0
    %vm209 = vcmp.lt.f32.partialorder %v134, 0.0
    %vm210 = vcmp.lt.f32.partialorder %v136, 0.0
    %vm211 = vcmp.lt.f32.partialorder %v205, 0.0
    %vm212 = vcmp.lt.f32.partialorder %v207, 0.0
    %v213 = vsel %vm209, -1.0, 1.0
    %v214 = vsel %vm210, -1.0, 1.0
    %v215 = vsel %vm211, -1.0, 1.0
    %v216 = vsel %vm212, -1.0, 1.0
    %v217 = vand.u32 2147483647, %v134
    %v218 = vand.u32 2147483647, %v136
    %v219 = vand.u32 2147483647, %v205
    %v220 = vand.u32 2147483647, %v207
    %vm221 = vcmp.gt.f32.partialorder %v217, 2.4142137
    %vm222 = vcmp.gt.f32.partialorder %v218, 2.4142137
    %vm223 = vcmp.gt.f32.partialorder %v219, 2.4142137
    %vm224 = vcmp.gt.f32.partialorder %v220, 2.4142137
    %vm225 = vcmp.gt.f32.partialorder %v217, 0.41421357
    %vm226 = vcmp.gt.f32.partialorder %v218, 0.41421357
    %vm227 = vcmp.gt.f32.partialorder %v219, 0.41421357
    %vm228 = vcmp.gt.f32.partialorder %v220, 0.41421357
    %vm229 = vmxor %vm221, 1
    %vm230 = vmxor %vm222, 1
    %vm231 = vmxor %vm223, 1
    %vm232 = vmxor %vm224, 1
    %vm233 = vmand %vm225, %vm229
    %vm234 = vmand %vm226, %vm230
    %vm235 = vmand %vm227, %vm231
    %vm236 = vmand %vm228, %vm232
    %v237 = vmax.f32 %v217, 1e-30
    %v238 = vmax.f32 %v218, 1e-30
    %v239 = vmax.f32 %v219, 1e-30
    %v240 = vmax.f32 %v220, 1e-30
    %v241 = vrcp.pop %v237
    %v242 = vmul.f32 -1.0, %v241
    %v243 = vrcp.pop %v238
    %v244 = vmul.f32 -1.0, %v243
    %v245 = vrcp.pop %v239
    %v246 = vmul.f32 -1.0, %v245
    %v247 = vrcp.pop %v240
    %v248 = vmul.f32 -1.0, %v247
    %v249 = vsub.f32 %v217, 1.0
    %v250 = vsub.f32 %v218, 1.0
    %v251 = vsub.f32 %v219, 1.0
    %v252 = vsub.f32 %v220, 1.0
    %v253 = vadd.f32 %v217, 1.0
    %v254 = vadd.f32 %v218, 1.0
    %v255 = vadd.f32 %v219, 1.0
    %v256 = vadd.f32 %v220, 1.0
    %v257 = vrcp.pop %v253
    %v258 = vmul.f32 %v249, %v257
    %v259 = vrcp.pop %v254
    %v260 = vmul.f32 %v250, %v259
    %v261 = vrcp.pop %v255
    %v262 = vmul.f32 %v251, %v261
    %v263 = vrcp.pop %v256
    %v264 = vmul.f32 %v252, %v263
    %v265 = vsel %vm233, %v258, %v217
    %v266 = vsel %vm234, %v260, %v218
    %v267 = vsel %vm235, %v262, %v219
    %v268 = vsel %vm236, %v264, %v220
    %v269 = vsel %vm221, %v242, %v265
    %v270 = vsel %vm222, %v244, %v266
    %v271 = vsel %vm223, %v246, %v267
    %v272 = vsel %vm224, %v248, %v268
    %v273 = vsel %vm233, 0.7853982, 0.0
    %v274 = vsel %vm234, 0.7853982, 0.0
    %v275 = vsel %vm235, 0.7853982, 0.0
    %v276 = vsel %vm236, 0.7853982, 0.0
    %v277 = vsel %vm221, 1.5707964, %v273
    %v278 = vsel %vm222, 1.5707964, %v274
    %v279 = vsel %vm223, 1.5707964, %v275
    %v280 = vsel %vm224, 1.5707964, %v276
    %v281 = vmul.f32 %v269, %v269
    %v282 = vmul.f32 %v270, %v270
    %v283 = vmul.f32 %v271, %v271
    %v284 = vmul.f32 %v272, %v272
    %v285 = vmul.f32 %v281, 0.080537446
    %v286 = vmul.f32 %v282, 0.080537446
    %v287 = vmul.f32 %v283, 0.080537446
    %v288 = vmul.f32 %v284, 0.080537446
    %v289 = vsub.f32 %v285, 0.13877685
    %v290 = vsub.f32 %v286, 0.13877685
    %v291 = vsub.f32 %v287, 0.13877685
    %v292 = vsub.f32 %v288, 0.13877685
    %v293 = vmul.f32 %v289, %v281
    %v294 = vmul.f32 %v290, %v282
    %v295 = vmul.f32 %v291, %v283
    %v296 = vmul.f32 %v292, %v284
    %v297 = vadd.f32 %v293, 0.19977711
    %v298 = vadd.f32 %v294, 0.19977711
    %v299 = vadd.f32 %v295, 0.19977711
    %v300 = vadd.f32 %v296, 0.19977711
    %v301 = vmul.f32 %v297, %v281
    %v302 = vmul.f32 %v298, %v282
    %v303 = vmul.f32 %v299, %v283
    %v304 = vmul.f32 %v300, %v284
    %v305 = vsub.f32 %v301, 0.3333295
    %v306 = vsub.f32 %v302, 0.3333295
    %v307 = vsub.f32 %v303, 0.3333295
    %v308 = vsub.f32 %v304, 0.3333295
    %v309 = vmul.f32 %v305, %v281
    %v310 = vmul.f32 %v306, %v282
    %v311 = vmul.f32 %v307, %v283
    %v312 = vmul.f32 %v308, %v284
    %v313 = vmul.f32 %v309, %v269
    %v314 = vmul.f32 %v310, %v270
    %v315 = vmul.f32 %v311, %v271
    %v316 = vmul.f32 %v312, %v272
    %v317 = vadd.f32 %v313, %v269
    %v318 = vadd.f32 %v314, %v270
    %v319 = vadd.f32 %v315, %v271
    %v320 = vadd.f32 %v316, %v272
    %v321 = vadd.f32 %v277, %v317
    %v322 = vadd.f32 %v278, %v318
    %v323 = vadd.f32 %v279, %v319
    %v324 = vadd.f32 %v280, %v320
    %v325 = vmul.f32 %v213, %v321
    %v326 = vmul.f32 %v214, %v322
    %v327 = vmul.f32 %v215, %v323
    %v328 = vmul.f32 %v216, %v324
    %s329 = scalar_lea.vmem [#allocation5], 67
    %v330 = vld [vmem:[%s329] ss:$8 sm:$0xf]
    %v331 = vld [vmem:[#allocation5 + $0x44] ss:$0 sm:$0xff]
    %vm332 = vcmp.gt.f32.partialorder %v331, 0.5
    %v333 = vld [vmem:[#allocation5 + $0x45] ss:$0 sm:$0xff]
    %vm334 = vcmp.gt.f32.partialorder %v333, 0.5
    %v335 = vld [vmem:[#allocation5 + $0x46] ss:$0 sm:$0xff]
    %vm336 = vcmp.gt.f32.partialorder %v335, 0.5
    %v337 = vld [vmem:[#allocation5 + $0x47] ss:$0 sm:$0xff]
    %vm338 = vcmp.gt.f32.partialorder %v337, 0.5
    %v339 = vld [vmem:[#allocation5 + $0x60] ss:$0 sm:$0xff]
    %s340 = scalar_lea.vmem [#allocation5], 64
    %v341 = vld [vmem:[%s340] ss:$8 sm:$0xf]
    %v343 = vlaneseq
    %v344 = vshrl.u32 %v343, 7
    %v345 = vsub.s32 0, %v344
    %v346 = vrot.slane %v341, %v345
    %v347 = vlaneseq
    %v348 = vshrl.u32 %v347, 7
    %v349 = vsub.s32 1, %v348
    %v350 = vrot.slane %v341, %v349
    %v351 = vlaneseq
    %v352 = vshrl.u32 %v351, 7
    %v353 = vsub.s32 2, %v352
    %v354 = vrot.slane %v341, %v353
    %v355 = vlaneseq
    %v356 = vshrl.u32 %v355, 7
    %v357 = vsub.s32 3, %v356
    %v358 = vrot.slane %v341, %v357
    %v363 = vmul.f32 %v325, %v346
    %v364 = vmul.f32 %v326, %v350
    %v365 = vmul.f32 %v327, %v354
    %v366 = vmul.f32 %v328, %v358
    %v367 = vand.u32 2147483647, %v363
    %vm368 = vcmp.le.f32.partialorder %v367, 0.7853982
    %vm369 = vcmp.lt.s32.totalorder %v363, 0
    %v370 = vand.u32 %v363, 2139095040
    %v371 = vshrl.u32 %v370, 23
    %v372 = vsub.s32 %v371, 127
    %v373 = vand.u32 2147483647, %v363
    %v374 = vand.u32 %v373, 8388607
    %v375 = vor.u32 %v374, 8388608
    %v376 = vsub.s32 0, %v375
    %v377 = vadd.s32 %v372, 1
    %vm378 = vcmp.gt.s32.totalorder %v377, 0
    %v379 = vsel %vm378, %v377, 0
    %v380 = vshrl.u32 %v379, 5
    %v381 = vand.u32 %v379, 31
    %v382 = vsub.s32 32, %v381
    %v383 = vshrl.u32 683565275, %v382
    %v384 = vshll.u32 683565275, %v381
    %v385 = vshrl.u32 2475754826, %v382
    %v386 = vor.u32 %v384, %v385
    %v387 = vshll.u32 2475754826, %v381
    %v388 = vshrl.u32 2131351028, %v382
    %v389 = vor.u32 %v387, %v388
    %v390 = vshll.u32 2131351028, %v381
    %v391 = vshrl.u32 2102212464, %v382
    %v392 = vor.u32 %v390, %v391
    %v393 = vshll.u32 2102212464, %v381
    %v394 = vshrl.u32 920167782, %v382
    %v395 = vor.u32 %v393, %v394
    %v396 = vshll.u32 920167782, %v381
    %v397 = vshrl.u32 1326507024, %v382
    %v398 = vor.u32 %v396, %v397
    %vm399 = vcmp.lt.s32.totalorder %v380, 1
    %vm400 = vcmp.lt.s32.totalorder %v380, 2
    %vm401 = vcmp.lt.s32.totalorder %v380, 3
    %vm402 = vcmp.lt.s32.totalorder %v380, 4
    %v403 = vsel %vm399, %v383, %v386
    %v404 = vsel %vm402, %v392, 2102212464
    %v405 = vsel %vm401, %v389, %v404
    %v406 = vsel %vm400, %v403, %v405
    %v407 = vsel %vm399, %v386, %v389
    %v408 = vsel %vm402, %v395, 920167782
    %v409 = vsel %vm401, %v392, %v408
    %v410 = vsel %vm400, %v407, %v409
    %v411 = vsel %vm399, %v389, %v392
    %v412 = vsel %vm402, %v398, 1326507024
    %v413 = vsel %vm401, %v395, %v412
    %v414 = vsel %vm400, %v411, %v413
    %v415 = vshll.u32 %v375, 8
    %v416 = vmul.u32.u64.compose %v415, %v414
    %v417 = vextract.low.u32 %v416
    %v418 = vextract.high.u32 %v416
    %v419 = vmul.u32.u64.compose %v415, %v410
    %v420 = vextract.low.u32 %v419
    %v421 = vextract.high.u32 %v419
    %v422 = vmul.u32 %v415, %v406
    %v423 = vadd.s32 %v418, %v420
    %vm424 = vc.u32 %v418, %v420
    %v425 = vadd.s32 %v421, 1
    %v426 = vsel %vm424, %v425, %v421
    %v427 = vadd.s32 %v422, %v426
    %v428 = vadd.s32 %v427, 536870912
    %v429 = vshrl.u32 %v428, 30
    %v430 = vshll.u32 %v429, 30
    %v431 = vsub.s32 %v427, %v430
    %vm432 = vcmp.lt.s32.totalorder %v431, 0
    %v433 = vsub.s32 0, %v431
    %v434 = vsel %vm432, %v433, %v431
    %v435 = vclz %v434
    %v436 = vsub.s32 %v435, 2
    %vm437 = vcmp.gt.s32.totalorder 0, %v436
    %v438 = vsel %vm437, 0, %v436
    %v439 = vsub.s32 32, %v438
    %v440 = vshll.u32 %v431, %v438
    %v441 = vshrl.u32 %v423, %v439
    %v442 = vor.u32 %v440, %v441
    %v443 = vsub.s32 4294967266, %v438
    %v444 = vadd.s32 %v443, 127
    %v445 = vshll.u32 %v444, 23
    %v446 = vor.u32 4788187, %v445
    %v447 = vand.u32 2147483647, %v446
    %v449 = vcvt.s32.f32 %v442
    %v450 = vmul.f32 %v449, %v447
    %v451 = vxor.u32 %v450, 2147483648
    %v452 = vsel %vm369, %v451, %v450
    %v453 = vsub.s32 4, %v429
    %v454 = vsel %vm369, %v453, %v429
    %v455 = vsel %vm368, %v363, %v452
    %v456 = vsel %vm368, 0, %v454
    %v457 = vcosq.f32.pop %v455
    %v458 = vsinq.f32.pop %v455
    %vm459 = vweird.f32 %v363
    %v460 = vand.u32 %v456, 3
    %vm461 = vcmp.lt.s32.totalorder %v460, 2
    %vm462 = vcmp.eq.s32.totalorder %v460, 0
    %v463 = vxor.u32 %v458, 2147483648
    %v464 = vsel %vm462, %v457, %v463
    %vm465 = vcmp.eq.s32.totalorder %v460, 2
    %v466 = vxor.u32 %v457, 2147483648
    %v467 = vsel %vm465, %v466, %v458
    %v468 = vsel %vm461, %v464, %v467
    %v469 = vsel %vm459, nan, %v468
    %v470 = vand.u32 2147483647, %v364
    %vm471 = vcmp.le.f32.partialorder %v470, 0.7853982
    %vm472 = vcmp.lt.s32.totalorder %v364, 0
    %v473 = vand.u32 %v364, 2139095040
    %v474 = vshrl.u32 %v473, 23
    %v475 = vsub.s32 %v474, 127
    %v476 = vand.u32 2147483647, %v364
    %v477 = vand.u32 %v476, 8388607
    %v478 = vor.u32 %v477, 8388608
    %v479 = vsub.s32 0, %v478
    %v480 = vadd.s32 %v475, 1
    %vm481 = vcmp.gt.s32.totalorder %v480, 0
    %v482 = vsel %vm481, %v480, 0
    %v483 = vshrl.u32 %v482, 5
    %v484 = vand.u32 %v482, 31
    %v485 = vsub.s32 32, %v484
    %v486 = vshrl.u32 683565275, %v485
    %v487 = vshll.u32 683565275, %v484
    %v488 = vshrl.u32 2475754826, %v485
    %v489 = vor.u32 %v487, %v488
    %v490 = vshll.u32 2475754826, %v484
    %v491 = vshrl.u32 2131351028, %v485
    %v492 = vor.u32 %v490, %v491
    %v493 = vshll.u32 2131351028, %v484
    %v494 = vshrl.u32 2102212464, %v485
    %v495 = vor.u32 %v493, %v494
    %v496 = vshll.u32 2102212464, %v484
    %v497 = vshrl.u32 920167782, %v485
    %v498 = vor.u32 %v496, %v497
    %v499 = vshll.u32 920167782, %v484
    %v500 = vshrl.u32 1326507024, %v485
    %v501 = vor.u32 %v499, %v500
    %vm502 = vcmp.lt.s32.totalorder %v483, 1
    %vm503 = vcmp.lt.s32.totalorder %v483, 2
    %vm504 = vcmp.lt.s32.totalorder %v483, 3
    %vm505 = vcmp.lt.s32.totalorder %v483, 4
    %v506 = vsel %vm502, %v486, %v489
    %v507 = vsel %vm505, %v495, 2102212464
    %v508 = vsel %vm504, %v492, %v507
    %v509 = vsel %vm503, %v506, %v508
    %v510 = vsel %vm502, %v489, %v492
    %v511 = vsel %vm505, %v498, 920167782
    %v512 = vsel %vm504, %v495, %v511
    %v513 = vsel %vm503, %v510, %v512
    %v514 = vsel %vm502, %v492, %v495
    %v515 = vsel %vm505, %v501, 1326507024
    %v516 = vsel %vm504, %v498, %v515
    %v517 = vsel %vm503, %v514, %v516
    %v518 = vshll.u32 %v478, 8
    %v519 = vmul.u32.u64.compose %v518, %v517
    %v520 = vextract.low.u32 %v519
    %v521 = vextract.high.u32 %v519
    %v522 = vmul.u32.u64.compose %v518, %v513
    %v523 = vextract.low.u32 %v522
    %v524 = vextract.high.u32 %v522
    %v525 = vmul.u32 %v518, %v509
    %v526 = vadd.s32 %v521, %v523
    %vm527 = vc.u32 %v521, %v523
    %v528 = vadd.s32 %v524, 1
    %v529 = vsel %vm527, %v528, %v524
    %v530 = vadd.s32 %v525, %v529
    %v531 = vadd.s32 %v530, 536870912
    %v532 = vshrl.u32 %v531, 30
    %v533 = vshll.u32 %v532, 30
    %v534 = vsub.s32 %v530, %v533
    %vm535 = vcmp.lt.s32.totalorder %v534, 0
    %v536 = vsub.s32 0, %v534
    %v537 = vsel %vm535, %v536, %v534
    %v538 = vclz %v537
    %v539 = vsub.s32 %v538, 2
    %vm540 = vcmp.gt.s32.totalorder 0, %v539
    %v541 = vsel %vm540, 0, %v539
    %v542 = vsub.s32 32, %v541
    %v543 = vshll.u32 %v534, %v541
    %v544 = vshrl.u32 %v526, %v542
    %v545 = vor.u32 %v543, %v544
    %v546 = vsub.s32 4294967266, %v541
    %v547 = vadd.s32 %v546, 127
    %v548 = vshll.u32 %v547, 23
    %v549 = vor.u32 4788187, %v548
    %v550 = vand.u32 2147483647, %v549
    %v552 = vcvt.s32.f32 %v545
    %v553 = vmul.f32 %v552, %v550
    %v554 = vxor.u32 %v553, 2147483648
    %v555 = vsel %vm472, %v554, %v553
    %v556 = vsub.s32 4, %v532
    %v557 = vsel %vm472, %v556, %v532
    %v558 = vsel %vm471, %v364, %v555
    %v559 = vsel %vm471, 0, %v557
    %v560 = vcosq.f32.pop %v558
    %v561 = vsinq.f32.pop %v558
    %vm562 = vweird.f32 %v364
    %v563 = vand.u32 %v559, 3
    %vm564 = vcmp.lt.s32.totalorder %v563, 2
    %vm565 = vcmp.eq.s32.totalorder %v563, 0
    %v566 = vxor.u32 %v561, 2147483648
    %v567 = vsel %vm565, %v560, %v566
    %vm568 = vcmp.eq.s32.totalorder %v563, 2
    %v569 = vxor.u32 %v560, 2147483648
    %v570 = vsel %vm568, %v569, %v561
    %v571 = vsel %vm564, %v567, %v570
    %v572 = vsel %vm562, nan, %v571
    %v573 = vand.u32 2147483647, %v365
    %vm574 = vcmp.le.f32.partialorder %v573, 0.7853982
    %vm575 = vcmp.lt.s32.totalorder %v365, 0
    %v576 = vand.u32 %v365, 2139095040
    %v577 = vshrl.u32 %v576, 23
    %v578 = vsub.s32 %v577, 127
    %v579 = vand.u32 2147483647, %v365
    %v580 = vand.u32 %v579, 8388607
    %v581 = vor.u32 %v580, 8388608
    %v582 = vsub.s32 0, %v581
    %v583 = vadd.s32 %v578, 1
    %vm584 = vcmp.gt.s32.totalorder %v583, 0
    %v585 = vsel %vm584, %v583, 0
    %v586 = vshrl.u32 %v585, 5
    %v587 = vand.u32 %v585, 31
    %v588 = vsub.s32 32, %v587
    %v589 = vshrl.u32 683565275, %v588
    %v590 = vshll.u32 683565275, %v587
    %v591 = vshrl.u32 2475754826, %v588
    %v592 = vor.u32 %v590, %v591
    %v593 = vshll.u32 2475754826, %v587
    %v594 = vshrl.u32 2131351028, %v588
    %v595 = vor.u32 %v593, %v594
    %v596 = vshll.u32 2131351028, %v587
    %v597 = vshrl.u32 2102212464, %v588
    %v598 = vor.u32 %v596, %v597
    %v599 = vshll.u32 2102212464, %v587
    %v600 = vshrl.u32 920167782, %v588
    %v601 = vor.u32 %v599, %v600
    %v602 = vshll.u32 920167782, %v587
    %v603 = vshrl.u32 1326507024, %v588
    %v604 = vor.u32 %v602, %v603
    %vm605 = vcmp.lt.s32.totalorder %v586, 1
    %vm606 = vcmp.lt.s32.totalorder %v586, 2
    %vm607 = vcmp.lt.s32.totalorder %v586, 3
    %vm608 = vcmp.lt.s32.totalorder %v586, 4
    %v609 = vsel %vm605, %v589, %v592
    %v610 = vsel %vm608, %v598, 2102212464
    %v611 = vsel %vm607, %v595, %v610
    %v612 = vsel %vm606, %v609, %v611
    %v613 = vsel %vm605, %v592, %v595
    %v614 = vsel %vm608, %v601, 920167782
    %v615 = vsel %vm607, %v598, %v614
    %v616 = vsel %vm606, %v613, %v615
    %v617 = vsel %vm605, %v595, %v598
    %v618 = vsel %vm608, %v604, 1326507024
    %v619 = vsel %vm607, %v601, %v618
    %v620 = vsel %vm606, %v617, %v619
    %v621 = vshll.u32 %v581, 8
    %v622 = vmul.u32.u64.compose %v621, %v620
    %v623 = vextract.low.u32 %v622
    %v624 = vextract.high.u32 %v622
    %v625 = vmul.u32.u64.compose %v621, %v616
    %v626 = vextract.low.u32 %v625
    %v627 = vextract.high.u32 %v625
    %v628 = vmul.u32 %v621, %v612
    %v629 = vadd.s32 %v624, %v626
    %vm630 = vc.u32 %v624, %v626
    %v631 = vadd.s32 %v627, 1
    %v632 = vsel %vm630, %v631, %v627
    %v633 = vadd.s32 %v628, %v632
    %v634 = vadd.s32 %v633, 536870912
    %v635 = vshrl.u32 %v634, 30
    %v636 = vshll.u32 %v635, 30
    %v637 = vsub.s32 %v633, %v636
    %vm638 = vcmp.lt.s32.totalorder %v637, 0
    %v639 = vsub.s32 0, %v637
    %v640 = vsel %vm638, %v639, %v637
    %v641 = vclz %v640
    %v642 = vsub.s32 %v641, 2
    %vm643 = vcmp.gt.s32.totalorder 0, %v642
    %v644 = vsel %vm643, 0, %v642
    %v645 = vsub.s32 32, %v644
    %v646 = vshll.u32 %v637, %v644
    %v647 = vshrl.u32 %v629, %v645
    %v648 = vor.u32 %v646, %v647
    %v649 = vsub.s32 4294967266, %v644
    %v650 = vadd.s32 %v649, 127
    %v651 = vshll.u32 %v650, 23
    %v652 = vor.u32 4788187, %v651
    %v653 = vand.u32 2147483647, %v652
    %v655 = vcvt.s32.f32 %v648
    %v656 = vmul.f32 %v655, %v653
    %v657 = vxor.u32 %v656, 2147483648
    %v658 = vsel %vm575, %v657, %v656
    %v659 = vsub.s32 4, %v635
    %v660 = vsel %vm575, %v659, %v635
    %v661 = vsel %vm574, %v365, %v658
    %v662 = vsel %vm574, 0, %v660
    %v663 = vcosq.f32.pop %v661
    %v664 = vsinq.f32.pop %v661
    %vm665 = vweird.f32 %v365
    %v666 = vand.u32 %v662, 3
    %vm667 = vcmp.lt.s32.totalorder %v666, 2
    %vm668 = vcmp.eq.s32.totalorder %v666, 0
    %v669 = vxor.u32 %v664, 2147483648
    %v670 = vsel %vm668, %v663, %v669
    %vm671 = vcmp.eq.s32.totalorder %v666, 2
    %v672 = vxor.u32 %v663, 2147483648
    %v673 = vsel %vm671, %v672, %v664
    %v674 = vsel %vm667, %v670, %v673
    %v675 = vsel %vm665, nan, %v674
    %v676 = vand.u32 2147483647, %v366
    %vm677 = vcmp.le.f32.partialorder %v676, 0.7853982
    %vm678 = vcmp.lt.s32.totalorder %v366, 0
    %v679 = vand.u32 %v366, 2139095040
    %v680 = vshrl.u32 %v679, 23
    %v681 = vsub.s32 %v680, 127
    %v682 = vand.u32 2147483647, %v366
    %v683 = vand.u32 %v682, 8388607
    %v684 = vor.u32 %v683, 8388608
    %v685 = vsub.s32 0, %v684
    %v686 = vadd.s32 %v681, 1
    %vm687 = vcmp.gt.s32.totalorder %v686, 0
    %v688 = vsel %vm687, %v686, 0
    %v689 = vshrl.u32 %v688, 5
    %v690 = vand.u32 %v688, 31
    %v691 = vsub.s32 32, %v690
    %v692 = vshrl.u32 683565275, %v691
    %v693 = vshll.u32 683565275, %v690
    %v694 = vshrl.u32 2475754826, %v691
    %v695 = vor.u32 %v693, %v694
    %v696 = vshll.u32 2475754826, %v690
    %v697 = vshrl.u32 2131351028, %v691
    %v698 = vor.u32 %v696, %v697
    %v699 = vshll.u32 2131351028, %v690
    %v700 = vshrl.u32 2102212464, %v691
    %v701 = vor.u32 %v699, %v700
    %v702 = vshll.u32 2102212464, %v690
    %v703 = vshrl.u32 920167782, %v691
    %v704 = vor.u32 %v702, %v703
    %v705 = vshll.u32 920167782, %v690
    %v706 = vshrl.u32 1326507024, %v691
    %v707 = vor.u32 %v705, %v706
    %vm708 = vcmp.lt.s32.totalorder %v689, 1
    %vm709 = vcmp.lt.s32.totalorder %v689, 2
    %vm710 = vcmp.lt.s32.totalorder %v689, 3
    %vm711 = vcmp.lt.s32.totalorder %v689, 4
    %v712 = vsel %vm708, %v692, %v695
    %v713 = vsel %vm711, %v701, 2102212464
    %v714 = vsel %vm710, %v698, %v713
    %v715 = vsel %vm709, %v712, %v714
    %v716 = vsel %vm708, %v695, %v698
    %v717 = vsel %vm711, %v704, 920167782
    %v718 = vsel %vm710, %v701, %v717
    %v719 = vsel %vm709, %v716, %v718
    %v720 = vsel %vm708, %v698, %v701
    %v721 = vsel %vm711, %v707, 1326507024
    %v722 = vsel %vm710, %v704, %v721
    %v723 = vsel %vm709, %v720, %v722
    %v724 = vshll.u32 %v684, 8
    %v725 = vmul.u32.u64.compose %v724, %v723
    %v726 = vextract.low.u32 %v725
    %v727 = vextract.high.u32 %v725
    %v728 = vmul.u32.u64.compose %v724, %v719
    %v729 = vextract.low.u32 %v728
    %v730 = vextract.high.u32 %v728
    %v731 = vmul.u32 %v724, %v715
    %v732 = vadd.s32 %v727, %v729
    %vm733 = vc.u32 %v727, %v729
    %v734 = vadd.s32 %v730, 1
    %v735 = vsel %vm733, %v734, %v730
    %v736 = vadd.s32 %v731, %v735
    %v737 = vadd.s32 %v736, 536870912
    %v738 = vshrl.u32 %v737, 30
    %v739 = vshll.u32 %v738, 30
    %v740 = vsub.s32 %v736, %v739
    %vm741 = vcmp.lt.s32.totalorder %v740, 0
    %v742 = vsub.s32 0, %v740
    %v743 = vsel %vm741, %v742, %v740
    %v744 = vclz %v743
    %v745 = vsub.s32 %v744, 2
    %vm746 = vcmp.gt.s32.totalorder 0, %v745
    %v747 = vsel %vm746, 0, %v745
    %v748 = vsub.s32 32, %v747
    %v749 = vshll.u32 %v740, %v747
    %v750 = vshrl.u32 %v732, %v748
    %v751 = vor.u32 %v749, %v750
    %v752 = vsub.s32 4294967266, %v747
    %v753 = vadd.s32 %v752, 127
    %v754 = vshll.u32 %v753, 23
    %v755 = vor.u32 4788187, %v754
    %v756 = vand.u32 2147483647, %v755
    %v758 = vcvt.s32.f32 %v751
    %v759 = vmul.f32 %v758, %v756
    %v760 = vxor.u32 %v759, 2147483648
    %v761 = vsel %vm678, %v760, %v759
    %v762 = vsub.s32 4, %v738
    %v763 = vsel %vm678, %v762, %v738
    %v764 = vsel %vm677, %v366, %v761
    %v765 = vsel %vm677, 0, %v763
    %v766 = vcosq.f32.pop %v764
    %v767 = vsinq.f32.pop %v764
    %vm768 = vweird.f32 %v366
    %v769 = vand.u32 %v765, 3
    %vm770 = vcmp.lt.s32.totalorder %v769, 2
    %vm771 = vcmp.eq.s32.totalorder %v769, 0
    %v772 = vxor.u32 %v767, 2147483648
    %v773 = vsel %vm771, %v766, %v772
    %vm774 = vcmp.eq.s32.totalorder %v769, 2
    %v775 = vxor.u32 %v766, 2147483648
    %v776 = vsel %vm774, %v775, %v767
    %v777 = vsel %vm770, %v773, %v776
    %v778 = vsel %vm768, nan, %v777
    %v779 = vand.u32 2147483647, %v363
    %vm780 = vcmp.le.f32.partialorder %v779, 0.7853982
    %vm781 = vcmp.lt.s32.totalorder %v363, 0
    %v782 = vand.u32 %v363, 2139095040
    %v783 = vshrl.u32 %v782, 23
    %v784 = vsub.s32 %v783, 127
    %v785 = vand.u32 2147483647, %v363
    %v786 = vand.u32 %v785, 8388607
    %v787 = vor.u32 %v786, 8388608
    %v788 = vsub.s32 0, %v787
    %v789 = vadd.s32 %v784, 1
    %vm790 = vcmp.gt.s32.totalorder %v789, 0
    %v791 = vsel %vm790, %v789, 0
    %v792 = vshrl.u32 %v791, 5
    %v793 = vand.u32 %v791, 31
    %v794 = vsub.s32 32, %v793
    %v795 = vshrl.u32 683565275, %v794
    %v796 = vshll.u32 683565275, %v793
    %v797 = vshrl.u32 2475754826, %v794
    %v798 = vor.u32 %v796, %v797
    %v799 = vshll.u32 2475754826, %v793
    %v800 = vshrl.u32 2131351028, %v794
    %v801 = vor.u32 %v799, %v800
    %v802 = vshll.u32 2131351028, %v793
    %v803 = vshrl.u32 2102212464, %v794
    %v804 = vor.u32 %v802, %v803
    %v805 = vshll.u32 2102212464, %v793
    %v806 = vshrl.u32 920167782, %v794
    %v807 = vor.u32 %v805, %v806
    %v808 = vshll.u32 920167782, %v793
    %v809 = vshrl.u32 1326507024, %v794
    %v810 = vor.u32 %v808, %v809
    %vm811 = vcmp.lt.s32.totalorder %v792, 1
    %vm812 = vcmp.lt.s32.totalorder %v792, 2
    %vm813 = vcmp.lt.s32.totalorder %v792, 3
    %vm814 = vcmp.lt.s32.totalorder %v792, 4
    %v815 = vsel %vm811, %v795, %v798
    %v816 = vsel %vm814, %v804, 2102212464
    %v817 = vsel %vm813, %v801, %v816
    %v818 = vsel %vm812, %v815, %v817
    %v819 = vsel %vm811, %v798, %v801
    %v820 = vsel %vm814, %v807, 920167782
    %v821 = vsel %vm813, %v804, %v820
    %v822 = vsel %vm812, %v819, %v821
    %v823 = vsel %vm811, %v801, %v804
    %v824 = vsel %vm814, %v810, 1326507024
    %v825 = vsel %vm813, %v807, %v824
    %v826 = vsel %vm812, %v823, %v825
    %v827 = vshll.u32 %v787, 8
    %v828 = vmul.u32.u64.compose %v827, %v826
    %v829 = vextract.low.u32 %v828
    %v830 = vextract.high.u32 %v828
    %v831 = vmul.u32.u64.compose %v827, %v822
    %v832 = vextract.low.u32 %v831
    %v833 = vextract.high.u32 %v831
    %v834 = vmul.u32 %v827, %v818
    %v835 = vadd.s32 %v830, %v832
    %vm836 = vc.u32 %v830, %v832
    %v837 = vadd.s32 %v833, 1
    %v838 = vsel %vm836, %v837, %v833
    %v839 = vadd.s32 %v834, %v838
    %v840 = vadd.s32 %v839, 536870912
    %v841 = vshrl.u32 %v840, 30
    %v842 = vshll.u32 %v841, 30
    %v843 = vsub.s32 %v839, %v842
    %vm844 = vcmp.lt.s32.totalorder %v843, 0
    %v845 = vsub.s32 0, %v843
    %v846 = vsel %vm844, %v845, %v843
    %v847 = vclz %v846
    %v848 = vsub.s32 %v847, 2
    %vm849 = vcmp.gt.s32.totalorder 0, %v848
    %v850 = vsel %vm849, 0, %v848
    %v851 = vsub.s32 32, %v850
    %v852 = vshll.u32 %v843, %v850
    %v853 = vshrl.u32 %v835, %v851
    %v854 = vor.u32 %v852, %v853
    %v855 = vsub.s32 4294967266, %v850
    %v856 = vadd.s32 %v855, 127
    %v857 = vshll.u32 %v856, 23
    %v858 = vor.u32 4788187, %v857
    %v859 = vand.u32 2147483647, %v858
    %v861 = vcvt.s32.f32 %v854
    %v862 = vmul.f32 %v861, %v859
    %v863 = vxor.u32 %v862, 2147483648
    %v864 = vsel %vm781, %v863, %v862
    %v865 = vsub.s32 4, %v841
    %v866 = vsel %vm781, %v865, %v841
    %v867 = vsel %vm780, %v363, %v864
    %v868 = vsel %vm780, 0, %v866
    %v869 = vcosq.f32.pop %v867
    %v870 = vsinq.f32.pop %v867
    %vm871 = vweird.f32 %v363
    %v872 = vadd.s32 %v868, 3
    %v873 = vand.u32 %v872, 3
    %vm874 = vcmp.lt.s32.totalorder %v873, 2
    %vm875 = vcmp.eq.s32.totalorder %v873, 0
    %v876 = vxor.u32 %v870, 2147483648
    %v877 = vsel %vm875, %v869, %v876
    %vm878 = vcmp.eq.s32.totalorder %v873, 2
    %v879 = vxor.u32 %v869, 2147483648
    %v880 = vsel %vm878, %v879, %v870
    %v881 = vsel %vm874, %v877, %v880
    %v882 = vsel %vm871, nan, %v881
    %v883 = vand.u32 2147483647, %v364
    %vm884 = vcmp.le.f32.partialorder %v883, 0.7853982
    %vm885 = vcmp.lt.s32.totalorder %v364, 0
    %v886 = vand.u32 %v364, 2139095040
    %v887 = vshrl.u32 %v886, 23
    %v888 = vsub.s32 %v887, 127
    %v889 = vand.u32 2147483647, %v364
    %v890 = vand.u32 %v889, 8388607
    %v891 = vor.u32 %v890, 8388608
    %v892 = vsub.s32 0, %v891
    %v893 = vadd.s32 %v888, 1
    %vm894 = vcmp.gt.s32.totalorder %v893, 0
    %v895 = vsel %vm894, %v893, 0
    %v896 = vshrl.u32 %v895, 5
    %v897 = vand.u32 %v895, 31
    %v898 = vsub.s32 32, %v897
    %v899 = vshrl.u32 683565275, %v898
    %v900 = vshll.u32 683565275, %v897
    %v901 = vshrl.u32 2475754826, %v898
    %v902 = vor.u32 %v900, %v901
    %v903 = vshll.u32 2475754826, %v897
    %v904 = vshrl.u32 2131351028, %v898
    %v905 = vor.u32 %v903, %v904
    %v906 = vshll.u32 2131351028, %v897
    %v907 = vshrl.u32 2102212464, %v898
    %v908 = vor.u32 %v906, %v907
    %v909 = vshll.u32 2102212464, %v897
    %v910 = vshrl.u32 920167782, %v898
    %v911 = vor.u32 %v909, %v910
    %v912 = vshll.u32 920167782, %v897
    %v913 = vshrl.u32 1326507024, %v898
    %v914 = vor.u32 %v912, %v913
    %vm915 = vcmp.lt.s32.totalorder %v896, 1
    %vm916 = vcmp.lt.s32.totalorder %v896, 2
    %vm917 = vcmp.lt.s32.totalorder %v896, 3
    %vm918 = vcmp.lt.s32.totalorder %v896, 4
    %v919 = vsel %vm915, %v899, %v902
    %v920 = vsel %vm918, %v908, 2102212464
    %v921 = vsel %vm917, %v905, %v920
    %v922 = vsel %vm916, %v919, %v921
    %v923 = vsel %vm915, %v902, %v905
    %v924 = vsel %vm918, %v911, 920167782
    %v925 = vsel %vm917, %v908, %v924
    %v926 = vsel %vm916, %v923, %v925
    %v927 = vsel %vm915, %v905, %v908
    %v928 = vsel %vm918, %v914, 1326507024
    %v929 = vsel %vm917, %v911, %v928
    %v930 = vsel %vm916, %v927, %v929
    %v931 = vshll.u32 %v891, 8
    %v932 = vmul.u32.u64.compose %v931, %v930
    %v933 = vextract.low.u32 %v932
    %v934 = vextract.high.u32 %v932
    %v935 = vmul.u32.u64.compose %v931, %v926
    %v936 = vextract.low.u32 %v935
    %v937 = vextract.high.u32 %v935
    %v938 = vmul.u32 %v931, %v922
    %v939 = vadd.s32 %v934, %v936
    %vm940 = vc.u32 %v934, %v936
    %v941 = vadd.s32 %v937, 1
    %v942 = vsel %vm940, %v941, %v937
    %v943 = vadd.s32 %v938, %v942
    %v944 = vadd.s32 %v943, 536870912
    %v945 = vshrl.u32 %v944, 30
    %v946 = vshll.u32 %v945, 30
    %v947 = vsub.s32 %v943, %v946
    %vm948 = vcmp.lt.s32.totalorder %v947, 0
    %v949 = vsub.s32 0, %v947
    %v950 = vsel %vm948, %v949, %v947
    %v951 = vclz %v950
    %v952 = vsub.s32 %v951, 2
    %vm953 = vcmp.gt.s32.totalorder 0, %v952
    %v954 = vsel %vm953, 0, %v952
    %v955 = vsub.s32 32, %v954
    %v956 = vshll.u32 %v947, %v954
    %v957 = vshrl.u32 %v939, %v955
    %v958 = vor.u32 %v956, %v957
    %v959 = vsub.s32 4294967266, %v954
    %v960 = vadd.s32 %v959, 127
    %v961 = vshll.u32 %v960, 23
    %v962 = vor.u32 4788187, %v961
    %v963 = vand.u32 2147483647, %v962
    %v965 = vcvt.s32.f32 %v958
    %v966 = vmul.f32 %v965, %v963
    %v967 = vxor.u32 %v966, 2147483648
    %v968 = vsel %vm885, %v967, %v966
    %v969 = vsub.s32 4, %v945
    %v970 = vsel %vm885, %v969, %v945
    %v971 = vsel %vm884, %v364, %v968
    %v972 = vsel %vm884, 0, %v970
    %v973 = vcosq.f32.pop %v971
    %v974 = vsinq.f32.pop %v971
    %vm975 = vweird.f32 %v364
    %v976 = vadd.s32 %v972, 3
    %v977 = vand.u32 %v976, 3
    %vm978 = vcmp.lt.s32.totalorder %v977, 2
    %vm979 = vcmp.eq.s32.totalorder %v977, 0
    %v980 = vxor.u32 %v974, 2147483648
    %v981 = vsel %vm979, %v973, %v980
    %vm982 = vcmp.eq.s32.totalorder %v977, 2
    %v983 = vxor.u32 %v973, 2147483648
    %v984 = vsel %vm982, %v983, %v974
    %v985 = vsel %vm978, %v981, %v984
    %v986 = vsel %vm975, nan, %v985
    %v987 = vand.u32 2147483647, %v365
    %vm988 = vcmp.le.f32.partialorder %v987, 0.7853982
    %vm989 = vcmp.lt.s32.totalorder %v365, 0
    %v990 = vand.u32 %v365, 2139095040
    %v991 = vshrl.u32 %v990, 23
    %v992 = vsub.s32 %v991, 127
    %v993 = vand.u32 2147483647, %v365
    %v994 = vand.u32 %v993, 8388607
    %v995 = vor.u32 %v994, 8388608
    %v996 = vsub.s32 0, %v995
    %v997 = vadd.s32 %v992, 1
    %vm998 = vcmp.gt.s32.totalorder %v997, 0
    %v999 = vsel %vm998, %v997, 0
    %v1000 = vshrl.u32 %v999, 5
    %v1001 = vand.u32 %v999, 31
    %v1002 = vsub.s32 32, %v1001
    %v1003 = vshrl.u32 683565275, %v1002
    %v1004 = vshll.u32 683565275, %v1001
    %v1005 = vshrl.u32 2475754826, %v1002
    %v1006 = vor.u32 %v1004, %v1005
    %v1007 = vshll.u32 2475754826, %v1001
    %v1008 = vshrl.u32 2131351028, %v1002
    %v1009 = vor.u32 %v1007, %v1008
    %v1010 = vshll.u32 2131351028, %v1001
    %v1011 = vshrl.u32 2102212464, %v1002
    %v1012 = vor.u32 %v1010, %v1011
    %v1013 = vshll.u32 2102212464, %v1001
    %v1014 = vshrl.u32 920167782, %v1002
    %v1015 = vor.u32 %v1013, %v1014
    %v1016 = vshll.u32 920167782, %v1001
    %v1017 = vshrl.u32 1326507024, %v1002
    %v1018 = vor.u32 %v1016, %v1017
    %vm1019 = vcmp.lt.s32.totalorder %v1000, 1
    %vm1020 = vcmp.lt.s32.totalorder %v1000, 2
    %vm1021 = vcmp.lt.s32.totalorder %v1000, 3
    %vm1022 = vcmp.lt.s32.totalorder %v1000, 4
    %v1023 = vsel %vm1019, %v1003, %v1006
    %v1024 = vsel %vm1022, %v1012, 2102212464
    %v1025 = vsel %vm1021, %v1009, %v1024
    %v1026 = vsel %vm1020, %v1023, %v1025
    %v1027 = vsel %vm1019, %v1006, %v1009
    %v1028 = vsel %vm1022, %v1015, 920167782
    %v1029 = vsel %vm1021, %v1012, %v1028
    %v1030 = vsel %vm1020, %v1027, %v1029
    %v1031 = vsel %vm1019, %v1009, %v1012
    %v1032 = vsel %vm1022, %v1018, 1326507024
    %v1033 = vsel %vm1021, %v1015, %v1032
    %v1034 = vsel %vm1020, %v1031, %v1033
    %v1035 = vshll.u32 %v995, 8
    %v1036 = vmul.u32.u64.compose %v1035, %v1034
    %v1037 = vextract.low.u32 %v1036
    %v1038 = vextract.high.u32 %v1036
    %v1039 = vmul.u32.u64.compose %v1035, %v1030
    %v1040 = vextract.low.u32 %v1039
    %v1041 = vextract.high.u32 %v1039
    %v1042 = vmul.u32 %v1035, %v1026
    %v1043 = vadd.s32 %v1038, %v1040
    %vm1044 = vc.u32 %v1038, %v1040
    %v1045 = vadd.s32 %v1041, 1
    %v1046 = vsel %vm1044, %v1045, %v1041
    %v1047 = vadd.s32 %v1042, %v1046
    %v1048 = vadd.s32 %v1047, 536870912
    %v1049 = vshrl.u32 %v1048, 30
    %v1050 = vshll.u32 %v1049, 30
    %v1051 = vsub.s32 %v1047, %v1050
    %vm1052 = vcmp.lt.s32.totalorder %v1051, 0
    %v1053 = vsub.s32 0, %v1051
    %v1054 = vsel %vm1052, %v1053, %v1051
    %v1055 = vclz %v1054
    %v1056 = vsub.s32 %v1055, 2
    %vm1057 = vcmp.gt.s32.totalorder 0, %v1056
    %v1058 = vsel %vm1057, 0, %v1056
    %v1059 = vsub.s32 32, %v1058
    %v1060 = vshll.u32 %v1051, %v1058
    %v1061 = vshrl.u32 %v1043, %v1059
    %v1062 = vor.u32 %v1060, %v1061
    %v1063 = vsub.s32 4294967266, %v1058
    %v1064 = vadd.s32 %v1063, 127
    %v1065 = vshll.u32 %v1064, 23
    %v1066 = vor.u32 4788187, %v1065
    %v1067 = vand.u32 2147483647, %v1066
    %v1069 = vcvt.s32.f32 %v1062
    %v1070 = vmul.f32 %v1069, %v1067
    %v1071 = vxor.u32 %v1070, 2147483648
    %v1072 = vsel %vm989, %v1071, %v1070
    %v1073 = vsub.s32 4, %v1049
    %v1074 = vsel %vm989, %v1073, %v1049
    %v1075 = vsel %vm988, %v365, %v1072
    %v1076 = vsel %vm988, 0, %v1074
    %v1077 = vcosq.f32.pop %v1075
    %v1078 = vsinq.f32.pop %v1075
    %vm1079 = vweird.f32 %v365
    %v1080 = vadd.s32 %v1076, 3
    %v1081 = vand.u32 %v1080, 3
    %vm1082 = vcmp.lt.s32.totalorder %v1081, 2
    %vm1083 = vcmp.eq.s32.totalorder %v1081, 0
    %v1084 = vxor.u32 %v1078, 2147483648
    %v1085 = vsel %vm1083, %v1077, %v1084
    %vm1086 = vcmp.eq.s32.totalorder %v1081, 2
    %v1087 = vxor.u32 %v1077, 2147483648
    %v1088 = vsel %vm1086, %v1087, %v1078
    %v1089 = vsel %vm1082, %v1085, %v1088
    %v1090 = vsel %vm1079, nan, %v1089
    %v1091 = vand.u32 2147483647, %v366
    %vm1092 = vcmp.le.f32.partialorder %v1091, 0.7853982
    %vm1093 = vcmp.lt.s32.totalorder %v366, 0
    %v1094 = vand.u32 %v366, 2139095040
    %v1095 = vshrl.u32 %v1094, 23
    %v1096 = vsub.s32 %v1095, 127
    %v1097 = vand.u32 2147483647, %v366
    %v1098 = vand.u32 %v1097, 8388607
    %v1099 = vor.u32 %v1098, 8388608
    %v1100 = vsub.s32 0, %v1099
    %v1101 = vadd.s32 %v1096, 1
    %vm1102 = vcmp.gt.s32.totalorder %v1101, 0
    %v1103 = vsel %vm1102, %v1101, 0
    %v1104 = vshrl.u32 %v1103, 5
    %v1105 = vand.u32 %v1103, 31
    %v1106 = vsub.s32 32, %v1105
    %v1107 = vshrl.u32 683565275, %v1106
    %v1108 = vshll.u32 683565275, %v1105
    %v1109 = vshrl.u32 2475754826, %v1106
    %v1110 = vor.u32 %v1108, %v1109
    %v1111 = vshll.u32 2475754826, %v1105
    %v1112 = vshrl.u32 2131351028, %v1106
    %v1113 = vor.u32 %v1111, %v1112
    %v1114 = vshll.u32 2131351028, %v1105
    %v1115 = vshrl.u32 2102212464, %v1106
    %v1116 = vor.u32 %v1114, %v1115
    %v1117 = vshll.u32 2102212464, %v1105
    %v1118 = vshrl.u32 920167782, %v1106
    %v1119 = vor.u32 %v1117, %v1118
    %v1120 = vshll.u32 920167782, %v1105
    %v1121 = vshrl.u32 1326507024, %v1106
    %v1122 = vor.u32 %v1120, %v1121
    %vm1123 = vcmp.lt.s32.totalorder %v1104, 1
    %vm1124 = vcmp.lt.s32.totalorder %v1104, 2
    %vm1125 = vcmp.lt.s32.totalorder %v1104, 3
    %vm1126 = vcmp.lt.s32.totalorder %v1104, 4
    %v1127 = vsel %vm1123, %v1107, %v1110
    %v1128 = vsel %vm1126, %v1116, 2102212464
    %v1129 = vsel %vm1125, %v1113, %v1128
    %v1130 = vsel %vm1124, %v1127, %v1129
    %v1131 = vsel %vm1123, %v1110, %v1113
    %v1132 = vsel %vm1126, %v1119, 920167782
    %v1133 = vsel %vm1125, %v1116, %v1132
    %v1134 = vsel %vm1124, %v1131, %v1133
    %v1135 = vsel %vm1123, %v1113, %v1116
    %v1136 = vsel %vm1126, %v1122, 1326507024
    %v1137 = vsel %vm1125, %v1119, %v1136
    %v1138 = vsel %vm1124, %v1135, %v1137
    %v1139 = vshll.u32 %v1099, 8
    %v1140 = vmul.u32.u64.compose %v1139, %v1138
    %v1141 = vextract.low.u32 %v1140
    %v1142 = vextract.high.u32 %v1140
    %v1143 = vmul.u32.u64.compose %v1139, %v1134
    %v1144 = vextract.low.u32 %v1143
    %v1145 = vextract.high.u32 %v1143
    %v1146 = vmul.u32 %v1139, %v1130
    %v1147 = vadd.s32 %v1142, %v1144
    %vm1148 = vc.u32 %v1142, %v1144
    %v1149 = vadd.s32 %v1145, 1
    %v1150 = vsel %vm1148, %v1149, %v1145
    %v1151 = vadd.s32 %v1146, %v1150
    %v1152 = vadd.s32 %v1151, 536870912
    %v1153 = vshrl.u32 %v1152, 30
    %v1154 = vshll.u32 %v1153, 30
    %v1155 = vsub.s32 %v1151, %v1154
    %vm1156 = vcmp.lt.s32.totalorder %v1155, 0
    %v1157 = vsub.s32 0, %v1155
    %v1158 = vsel %vm1156, %v1157, %v1155
    %v1159 = vclz %v1158
    %v1160 = vsub.s32 %v1159, 2
    %vm1161 = vcmp.gt.s32.totalorder 0, %v1160
    %v1162 = vsel %vm1161, 0, %v1160
    %v1163 = vsub.s32 32, %v1162
    %v1164 = vshll.u32 %v1155, %v1162
    %v1165 = vshrl.u32 %v1147, %v1163
    %v1166 = vor.u32 %v1164, %v1165
    %v1167 = vsub.s32 4294967266, %v1162
    %v1168 = vadd.s32 %v1167, 127
    %v1169 = vshll.u32 %v1168, 23
    %v1170 = vor.u32 4788187, %v1169
    %v1171 = vand.u32 2147483647, %v1170
    %v1173 = vcvt.s32.f32 %v1166
    %v1174 = vmul.f32 %v1173, %v1171
    %v1175 = vxor.u32 %v1174, 2147483648
    %v1176 = vsel %vm1093, %v1175, %v1174
    %v1177 = vsub.s32 4, %v1153
    %v1178 = vsel %vm1093, %v1177, %v1153
    %v1179 = vsel %vm1092, %v366, %v1176
    %v1180 = vsel %vm1092, 0, %v1178
    %v1181 = vcosq.f32.pop %v1179
    %v1182 = vsinq.f32.pop %v1179
    %vm1183 = vweird.f32 %v366
    %v1184 = vadd.s32 %v1180, 3
    %v1185 = vand.u32 %v1184, 3
    %vm1186 = vcmp.lt.s32.totalorder %v1185, 2
    %vm1187 = vcmp.eq.s32.totalorder %v1185, 0
    %v1188 = vxor.u32 %v1182, 2147483648
    %v1189 = vsel %vm1187, %v1181, %v1188
    %vm1190 = vcmp.eq.s32.totalorder %v1185, 2
    %v1191 = vxor.u32 %v1181, 2147483648
    %v1192 = vsel %vm1190, %v1191, %v1182
    %v1193 = vsel %vm1186, %v1189, %v1192
    %v1194 = vsel %vm1183, nan, %v1193
    %v1196 = vlaneseq
    %v1197 = vshrl.u32 %v1196, 7
    %v1198 = vsub.s32 0, %v1197
    %v1199 = vrot.slane %v330, %v1198
    %v1200 = vlaneseq
    %v1201 = vshrl.u32 %v1200, 7
    %v1202 = vsub.s32 1, %v1201
    %v1203 = vrot.slane %v330, %v1202
    %v1204 = vlaneseq
    %v1205 = vshrl.u32 %v1204, 7
    %v1206 = vsub.s32 2, %v1205
    %v1207 = vrot.slane %v330, %v1206
    %v1208 = vlaneseq
    %v1209 = vshrl.u32 %v1208, 7
    %v1210 = vsub.s32 3, %v1209
    %v1211 = vrot.slane %v330, %v1210
    %v1216 = vmul.f32 %v882, %v1199
    %v1217 = vmul.f32 %v986, %v1203
    %v1218 = vmul.f32 %v1090, %v1207
    %v1219 = vmul.f32 %v1194, %v1211
    %1221 = vrot.lane.b32.xlu0 %v339, 72
    %v1222 = vpop.permute.xlu0 %1221
    %1224 = vrot.lane.b32.xlu0 %v339, 56
    %v1225 = vpop.permute.xlu0 %1224
    %v1227 = vsel %vm338, 1, 0
    %vm1228 = vcmp.eq.s32.totalorder %v1227, 1
    %v1229 = vsel %vm1228, %v1222, %v1225
    %v1230 = vmul.f32 %v469, %v339
    %v1231 = vmul.f32 %v1216, %v1229
    %v1232 = vadd.f32 %v1230, %v1231
    %1234 = vrot.lane.b32.xlu0 %v1232, 68
    %v1235 = vpop.permute.xlu0 %1234
    %1237 = vrot.lane.b32.xlu0 %v1232, 60
    %v1238 = vpop.permute.xlu0 %1237
    %v1240 = vsel %vm336, 1, 0
    %vm1241 = vcmp.eq.s32.totalorder %v1240, 1
    %v1242 = vsel %vm1241, %v1235, %v1238
    %v1243 = vmul.f32 %v572, %v1232
    %v1244 = vmul.f32 %v1217, %v1242
    %v1245 = vadd.f32 %v1243, %v1244
    %1247 = vrot.lane.b32.xlu0 %v1245, 66
    %v1248 = vpop.permute.xlu0 %1247
    %1250 = vrot.lane.b32.xlu0 %v1245, 62
    %v1251 = vpop.permute.xlu0 %1250
    %v1253 = vsel %vm334, 1, 0
    %vm1254 = vcmp.eq.s32.totalorder %v1253, 1
    %v1255 = vsel %vm1254, %v1248, %v1251
    %v1256 = vmul.f32 %v675, %v1245
    %v1257 = vmul.f32 %v1218, %v1255
    %v1258 = vadd.f32 %v1256, %v1257
    %1260 = vrot.lane.b32.xlu0 %v1258, 65
    %v1261 = vpop.permute.xlu0 %1260
    %1263 = vrot.lane.b32.xlu0 %v1258, 63
    %v1264 = vpop.permute.xlu0 %1263
    %v1266 = vsel %vm332, 1, 0
    %vm1267 = vcmp.eq.s32.totalorder %v1266, 1
    %v1268 = vsel %vm1267, %v1261, %v1264
    %v1269 = vmul.f32 %v778, %v1258
    %v1270 = vmul.f32 %v1219, %v1268
    %v1271 = vadd.f32 %v1269, %v1270
    %v1272 = vld [vmem:[#allocation7] sm:$0xff]
    %v1273 = vld [vmem:[#allocation7 + $0x8] sm:$0xff]
    %v1274 = vld [vmem:[#allocation7 + $0x10] sm:$0xff]
    %v1275 = vld [vmem:[#allocation7 + $0x18] sm:$0xff]
    %v1276 = vld [vmem:[#allocation7 + $0x20] sm:$0xff]
    %v1277 = vld [vmem:[#allocation7 + $0x28] sm:$0xff]
    %v1278 = vld [vmem:[#allocation7 + $0x30] sm:$0xff]
    %v1279 = vld [vmem:[#allocation7 + $0x38] sm:$0xff]
    %v1280 = vld [vmem:[#allocation7 + $0x40] sm:$0xff]
    %v1281 = vld [vmem:[#allocation7 + $0x48] sm:$0xff]
    %v1282 = vld [vmem:[#allocation7 + $0x50] sm:$0xff]
    %v1283 = vld [vmem:[#allocation7 + $0x58] sm:$0xff]
    %v1284 = vld [vmem:[#allocation7 + $0x60] sm:$0xff]
    %v1285 = vld [vmem:[#allocation7 + $0x68] sm:$0xff]
    %v1286 = vld [vmem:[#allocation7 + $0x70] sm:$0xff]
    %v1287 = vld [vmem:[#allocation7 + $0x78] sm:$0xff]
    %1288 = vmatprep.subr.mxu0 0.0
    %1289 = vmatpush1.msra.mxu0 %v1272
    %1290 = vmatprep.subr.mxu0 0.0
    %1291 = vmatpush1.msra.mxu0 %v1273
    %1292 = vmatprep.subr.mxu0 0.0
    %1293 = vmatpush1.msra.mxu0 %v1274
    %1294 = vmatprep.subr.mxu0 0.0
    %1295 = vmatpush1.msra.mxu0 %v1275
    %1296 = vmatprep.subr.mxu0 0.0
    %1297 = vmatpush1.msra.mxu0 %v1276
    %1298 = vmatprep.subr.mxu0 0.0
    %1299 = vmatpush1.msra.mxu0 %v1277
    %1300 = vmatprep.subr.mxu0 0.0
    %1301 = vmatpush1.msra.mxu0 %v1278
    %1302 = vmatprep.subr.mxu0 0.0
    %1303 = vmatpush1.msra.mxu0 %v1279
    %1304 = vmatprep.subr.mxu0 0.0
    %1305 = vmatpush1.msra.mxu0 %v1280
    %1306 = vmatprep.subr.mxu0 0.0
    %1307 = vmatpush1.msra.mxu0 %v1281
    %1308 = vmatprep.subr.mxu0 0.0
    %1309 = vmatpush1.msra.mxu0 %v1282
    %1310 = vmatprep.subr.mxu0 0.0
    %1311 = vmatpush1.msra.mxu0 %v1283
    %1312 = vmatprep.subr.mxu0 0.0
    %1313 = vmatpush1.msra.mxu0 %v1284
    %1314 = vmatprep.subr.mxu0 0.0
    %1315 = vmatpush1.msra.mxu0 %v1285
    %1316 = vmatprep.subr.mxu0 0.0
    %1317 = vmatpush1.msra.mxu0 %v1286
    %1318 = vmatprep.subr.mxu0 0.0
    %1319 = vmatpush1.msra.mxu0 %v1287
    %1320 = vmatprep.subr.mxu0 0.0
    %1321 = vmatpush1.msra.mxu0 0.0
    %1322 = vmatprep.subr.mxu0 0.0
    %1323 = vmatpush1.msra.mxu0 0.0
    %1324 = vmatprep.subr.mxu0 0.0
    %1325 = vmatpush1.msra.mxu0 0.0
    %1326 = vmatprep.subr.mxu0 0.0
    %1327 = vmatpush1.msra.mxu0 0.0
    %1328 = vmatprep.subr.mxu0 0.0
    %1329 = vmatpush1.msra.mxu0 0.0
    %1330 = vmatprep.subr.mxu0 0.0
    %1331 = vmatpush1.msra.mxu0 0.0
    %1332 = vmatprep.subr.mxu0 0.0
    %1333 = vmatpush1.msra.mxu0 0.0
    %1334 = vmatprep.subr.mxu0 0.0
    %1335 = vmatpush1.msra.mxu0 0.0
    %1336 = vmatprep.subr.mxu0 0.0
    %1337 = vmatpush1.msra.mxu0 0.0
    %1338 = vmatprep.subr.mxu0 0.0
    %1339 = vmatpush1.msra.mxu0 0.0
    %1340 = vmatprep.subr.mxu0 0.0
    %1341 = vmatpush1.msra.mxu0 0.0
    %1342 = vmatprep.subr.mxu0 0.0
    %1343 = vmatpush1.msra.mxu0 0.0
    %1344 = vmatprep.subr.mxu0 0.0
    %1345 = vmatpush1.msra.mxu0 0.0
    %1346 = vmatprep.subr.mxu0 0.0
    %1347 = vmatpush1.msra.mxu0 0.0
    %1348 = vmatprep.subr.mxu0 0.0
    %1349 = vmatpush1.msra.mxu0 0.0
    %1350 = vmatprep.subr.mxu0 0.0
    %1351 = vmatpush1.msra.mxu0 0.0
    %1352 = vmatprep.mubr.f32.mxu0 0.0
    %1353 = vmatmul.mubr.f32.gmra.mrb[0].mxu0 %v1271
    %v1354 = vpop.f32.mrb[0].mxu0
    %v1355 = vadd.f32 0.0, %v1354
    %v1356 = vpop.f32.mrb[0].mxu0
    %1357 = vdwg.mxu0
    %s1358 = scalar_lea.vmem [#allocation5], 65
    %v1359 = vld [vmem:[%s1358] ss:$8 sm:$0xf]
    %v1361 = vlaneseq
    %v1362 = vshrl.u32 %v1361, 7
    %v1363 = vsub.s32 0, %v1362
    %v1364 = vrot.slane %v1359, %v1363
    %v1365 = vlaneseq
    %v1366 = vshrl.u32 %v1365, 7
    %v1367 = vsub.s32 1, %v1366
    %v1368 = vrot.slane %v1359, %v1367
    %v1369 = vlaneseq
    %v1370 = vshrl.u32 %v1369, 7
    %v1371 = vsub.s32 2, %v1370
    %v1372 = vrot.slane %v1359, %v1371
    %v1373 = vlaneseq
    %v1374 = vshrl.u32 %v1373, 7
    %v1375 = vsub.s32 3, %v1374
    %v1376 = vrot.slane %v1359, %v1375
    %v1381 = vmul.f32 %v325, %v1364
    %v1382 = vmul.f32 %v326, %v1368
    %v1383 = vmul.f32 %v327, %v1372
    %v1384 = vmul.f32 %v328, %v1376
    %v1385 = vand.u32 2147483647, %v1381
    %vm1386 = vcmp.le.f32.partialorder %v1385, 0.7853982
    %vm1387 = vcmp.lt.s32.totalorder %v1381, 0
    %v1388 = vand.u32 %v1381, 2139095040
    %v1389 = vshrl.u32 %v1388, 23
    %v1390 = vsub.s32 %v1389, 127
    %v1391 = vand.u32 2147483647, %v1381
    %v1392 = vand.u32 %v1391, 8388607
    %v1393 = vor.u32 %v1392, 8388608
    %v1394 = vsub.s32 0, %v1393
    %v1395 = vadd.s32 %v1390, 1
    %vm1396 = vcmp.gt.s32.totalorder %v1395, 0
    %v1397 = vsel %vm1396, %v1395, 0
    %v1398 = vshrl.u32 %v1397, 5
    %v1399 = vand.u32 %v1397, 31
    %v1400 = vsub.s32 32, %v1399
    %v1401 = vshrl.u32 683565275, %v1400
    %v1402 = vshll.u32 683565275, %v1399
    %v1403 = vshrl.u32 2475754826, %v1400
    %v1404 = vor.u32 %v1402, %v1403
    %v1405 = vshll.u32 2475754826, %v1399
    %v1406 = vshrl.u32 2131351028, %v1400
    %v1407 = vor.u32 %v1405, %v1406
    %v1408 = vshll.u32 2131351028, %v1399
    %v1409 = vshrl.u32 2102212464, %v1400
    %v1410 = vor.u32 %v1408, %v1409
    %v1411 = vshll.u32 2102212464, %v1399
    %v1412 = vshrl.u32 920167782, %v1400
    %v1413 = vor.u32 %v1411, %v1412
    %v1414 = vshll.u32 920167782, %v1399
    %v1415 = vshrl.u32 1326507024, %v1400
    %v1416 = vor.u32 %v1414, %v1415
    %vm1417 = vcmp.lt.s32.totalorder %v1398, 1
    %vm1418 = vcmp.lt.s32.totalorder %v1398, 2
    %vm1419 = vcmp.lt.s32.totalorder %v1398, 3
    %vm1420 = vcmp.lt.s32.totalorder %v1398, 4
    %v1421 = vsel %vm1417, %v1401, %v1404
    %v1422 = vsel %vm1420, %v1410, 2102212464
    %v1423 = vsel %vm1419, %v1407, %v1422
    %v1424 = vsel %vm1418, %v1421, %v1423
    %v1425 = vsel %vm1417, %v1404, %v1407
    %v1426 = vsel %vm1420, %v1413, 920167782
    %v1427 = vsel %vm1419, %v1410, %v1426
    %v1428 = vsel %vm1418, %v1425, %v1427
    %v1429 = vsel %vm1417, %v1407, %v1410
    %v1430 = vsel %vm1420, %v1416, 1326507024
    %v1431 = vsel %vm1419, %v1413, %v1430
    %v1432 = vsel %vm1418, %v1429, %v1431
    %v1433 = vshll.u32 %v1393, 8
    %v1434 = vmul.u32.u64.compose %v1433, %v1432
    %v1435 = vextract.low.u32 %v1434
    %v1436 = vextract.high.u32 %v1434
    %v1437 = vmul.u32.u64.compose %v1433, %v1428
    %v1438 = vextract.low.u32 %v1437
    %v1439 = vextract.high.u32 %v1437
    %v1440 = vmul.u32 %v1433, %v1424
    %v1441 = vadd.s32 %v1436, %v1438
    %vm1442 = vc.u32 %v1436, %v1438
    %v1443 = vadd.s32 %v1439, 1
    %v1444 = vsel %vm1442, %v1443, %v1439
    %v1445 = vadd.s32 %v1440, %v1444
    %v1446 = vadd.s32 %v1445, 536870912
    %v1447 = vshrl.u32 %v1446, 30
    %v1448 = vshll.u32 %v1447, 30
    %v1449 = vsub.s32 %v1445, %v1448
    %vm1450 = vcmp.lt.s32.totalorder %v1449, 0
    %v1451 = vsub.s32 0, %v1449
    %v1452 = vsel %vm1450, %v1451, %v1449
    %v1453 = vclz %v1452
    %v1454 = vsub.s32 %v1453, 2
    %vm1455 = vcmp.gt.s32.totalorder 0, %v1454
    %v1456 = vsel %vm1455, 0, %v1454
    %v1457 = vsub.s32 32, %v1456
    %v1458 = vshll.u32 %v1449, %v1456
    %v1459 = vshrl.u32 %v1441, %v1457
    %v1460 = vor.u32 %v1458, %v1459
    %v1461 = vsub.s32 4294967266, %v1456
    %v1462 = vadd.s32 %v1461, 127
    %v1463 = vshll.u32 %v1462, 23
    %v1464 = vor.u32 4788187, %v1463
    %v1465 = vand.u32 2147483647, %v1464
    %v1467 = vcvt.s32.f32 %v1460
    %v1468 = vmul.f32 %v1467, %v1465
    %v1469 = vxor.u32 %v1468, 2147483648
    %v1470 = vsel %vm1387, %v1469, %v1468
    %v1471 = vsub.s32 4, %v1447
    %v1472 = vsel %vm1387, %v1471, %v1447
    %v1473 = vsel %vm1386, %v1381, %v1470
    %v1474 = vsel %vm1386, 0, %v1472
    %v1475 = vcosq.f32.pop %v1473
    %v1476 = vsinq.f32.pop %v1473
    %vm1477 = vweird.f32 %v1381
    %v1478 = vand.u32 %v1474, 3
    %vm1479 = vcmp.lt.s32.totalorder %v1478, 2
    %vm1480 = vcmp.eq.s32.totalorder %v1478, 0
    %v1481 = vxor.u32 %v1476, 2147483648
    %v1482 = vsel %vm1480, %v1475, %v1481
    %vm1483 = vcmp.eq.s32.totalorder %v1478, 2
    %v1484 = vxor.u32 %v1475, 2147483648
    %v1485 = vsel %vm1483, %v1484, %v1476
    %v1486 = vsel %vm1479, %v1482, %v1485
    %v1487 = vsel %vm1477, nan, %v1486
    %v1488 = vand.u32 2147483647, %v1382
    %vm1489 = vcmp.le.f32.partialorder %v1488, 0.7853982
    %vm1490 = vcmp.lt.s32.totalorder %v1382, 0
    %v1491 = vand.u32 %v1382, 2139095040
    %v1492 = vshrl.u32 %v1491, 23
    %v1493 = vsub.s32 %v1492, 127
    %v1494 = vand.u32 2147483647, %v1382
    %v1495 = vand.u32 %v1494, 8388607
    %v1496 = vor.u32 %v1495, 8388608
    %v1497 = vsub.s32 0, %v1496
    %v1498 = vadd.s32 %v1493, 1
    %vm1499 = vcmp.gt.s32.totalorder %v1498, 0
    %v1500 = vsel %vm1499, %v1498, 0
    %v1501 = vshrl.u32 %v1500, 5
    %v1502 = vand.u32 %v1500, 31
    %v1503 = vsub.s32 32, %v1502
    %v1504 = vshrl.u32 683565275, %v1503
    %v1505 = vshll.u32 683565275, %v1502
    %v1506 = vshrl.u32 2475754826, %v1503
    %v1507 = vor.u32 %v1505, %v1506
    %v1508 = vshll.u32 2475754826, %v1502
    %v1509 = vshrl.u32 2131351028, %v1503
    %v1510 = vor.u32 %v1508, %v1509
    %v1511 = vshll.u32 2131351028, %v1502
    %v1512 = vshrl.u32 2102212464, %v1503
    %v1513 = vor.u32 %v1511, %v1512
    %v1514 = vshll.u32 2102212464, %v1502
    %v1515 = vshrl.u32 920167782, %v1503
    %v1516 = vor.u32 %v1514, %v1515
    %v1517 = vshll.u32 920167782, %v1502
    %v1518 = vshrl.u32 1326507024, %v1503
    %v1519 = vor.u32 %v1517, %v1518
    %vm1520 = vcmp.lt.s32.totalorder %v1501, 1
    %vm1521 = vcmp.lt.s32.totalorder %v1501, 2
    %vm1522 = vcmp.lt.s32.totalorder %v1501, 3
    %vm1523 = vcmp.lt.s32.totalorder %v1501, 4
    %v1524 = vsel %vm1520, %v1504, %v1507
    %v1525 = vsel %vm1523, %v1513, 2102212464
    %v1526 = vsel %vm1522, %v1510, %v1525
    %v1527 = vsel %vm1521, %v1524, %v1526
    %v1528 = vsel %vm1520, %v1507, %v1510
    %v1529 = vsel %vm1523, %v1516, 920167782
    %v1530 = vsel %vm1522, %v1513, %v1529
    %v1531 = vsel %vm1521, %v1528, %v1530
    %v1532 = vsel %vm1520, %v1510, %v1513
    %v1533 = vsel %vm1523, %v1519, 1326507024
    %v1534 = vsel %vm1522, %v1516, %v1533
    %v1535 = vsel %vm1521, %v1532, %v1534
    %v1536 = vshll.u32 %v1496, 8
    %v1537 = vmul.u32.u64.compose %v1536, %v1535
    %v1538 = vextract.low.u32 %v1537
    %v1539 = vextract.high.u32 %v1537
    %v1540 = vmul.u32.u64.compose %v1536, %v1531
    %v1541 = vextract.low.u32 %v1540
    %v1542 = vextract.high.u32 %v1540
    %v1543 = vmul.u32 %v1536, %v1527
    %v1544 = vadd.s32 %v1539, %v1541
    %vm1545 = vc.u32 %v1539, %v1541
    %v1546 = vadd.s32 %v1542, 1
    %v1547 = vsel %vm1545, %v1546, %v1542
    %v1548 = vadd.s32 %v1543, %v1547
    %v1549 = vadd.s32 %v1548, 536870912
    %v1550 = vshrl.u32 %v1549, 30
    %v1551 = vshll.u32 %v1550, 30
    %v1552 = vsub.s32 %v1548, %v1551
    %vm1553 = vcmp.lt.s32.totalorder %v1552, 0
    %v1554 = vsub.s32 0, %v1552
    %v1555 = vsel %vm1553, %v1554, %v1552
    %v1556 = vclz %v1555
    %v1557 = vsub.s32 %v1556, 2
    %vm1558 = vcmp.gt.s32.totalorder 0, %v1557
    %v1559 = vsel %vm1558, 0, %v1557
    %v1560 = vsub.s32 32, %v1559
    %v1561 = vshll.u32 %v1552, %v1559
    %v1562 = vshrl.u32 %v1544, %v1560
    %v1563 = vor.u32 %v1561, %v1562
    %v1564 = vsub.s32 4294967266, %v1559
    %v1565 = vadd.s32 %v1564, 127
    %v1566 = vshll.u32 %v1565, 23
    %v1567 = vor.u32 4788187, %v1566
    %v1568 = vand.u32 2147483647, %v1567
    %v1570 = vcvt.s32.f32 %v1563
    %v1571 = vmul.f32 %v1570, %v1568
    %v1572 = vxor.u32 %v1571, 2147483648
    %v1573 = vsel %vm1490, %v1572, %v1571
    %v1574 = vsub.s32 4, %v1550
    %v1575 = vsel %vm1490, %v1574, %v1550
    %v1576 = vsel %vm1489, %v1382, %v1573
    %v1577 = vsel %vm1489, 0, %v1575
    %v1578 = vcosq.f32.pop %v1576
    %v1579 = vsinq.f32.pop %v1576
    %vm1580 = vweird.f32 %v1382
    %v1581 = vand.u32 %v1577, 3
    %vm1582 = vcmp.lt.s32.totalorder %v1581, 2
    %vm1583 = vcmp.eq.s32.totalorder %v1581, 0
    %v1584 = vxor.u32 %v1579, 2147483648
    %v1585 = vsel %vm1583, %v1578, %v1584
    %vm1586 = vcmp.eq.s32.totalorder %v1581, 2
    %v1587 = vxor.u32 %v1578, 2147483648
    %v1588 = vsel %vm1586, %v1587, %v1579
    %v1589 = vsel %vm1582, %v1585, %v1588
    %v1590 = vsel %vm1580, nan, %v1589
    %v1591 = vand.u32 2147483647, %v1383
    %vm1592 = vcmp.le.f32.partialorder %v1591, 0.7853982
    %vm1593 = vcmp.lt.s32.totalorder %v1383, 0
    %v1594 = vand.u32 %v1383, 2139095040
    %v1595 = vshrl.u32 %v1594, 23
    %v1596 = vsub.s32 %v1595, 127
    %v1597 = vand.u32 2147483647, %v1383
    %v1598 = vand.u32 %v1597, 8388607
    %v1599 = vor.u32 %v1598, 8388608
    %v1600 = vsub.s32 0, %v1599
    %v1601 = vadd.s32 %v1596, 1
    %vm1602 = vcmp.gt.s32.totalorder %v1601, 0
    %v1603 = vsel %vm1602, %v1601, 0
    %v1604 = vshrl.u32 %v1603, 5
    %v1605 = vand.u32 %v1603, 31
    %v1606 = vsub.s32 32, %v1605
    %v1607 = vshrl.u32 683565275, %v1606
    %v1608 = vshll.u32 683565275, %v1605
    %v1609 = vshrl.u32 2475754826, %v1606
    %v1610 = vor.u32 %v1608, %v1609
    %v1611 = vshll.u32 2475754826, %v1605
    %v1612 = vshrl.u32 2131351028, %v1606
    %v1613 = vor.u32 %v1611, %v1612
    %v1614 = vshll.u32 2131351028, %v1605
    %v1615 = vshrl.u32 2102212464, %v1606
    %v1616 = vor.u32 %v1614, %v1615
    %v1617 = vshll.u32 2102212464, %v1605
    %v1618 = vshrl.u32 920167782, %v1606
    %v1619 = vor.u32 %v1617, %v1618
    %v1620 = vshll.u32 920167782, %v1605
    %v1621 = vshrl.u32 1326507024, %v1606
    %v1622 = vor.u32 %v1620, %v1621
    %vm1623 = vcmp.lt.s32.totalorder %v1604, 1
    %vm1624 = vcmp.lt.s32.totalorder %v1604, 2
    %vm1625 = vcmp.lt.s32.totalorder %v1604, 3
    %vm1626 = vcmp.lt.s32.totalorder %v1604, 4
    %v1627 = vsel %vm1623, %v1607, %v1610
    %v1628 = vsel %vm1626, %v1616, 2102212464
    %v1629 = vsel %vm1625, %v1613, %v1628
    %v1630 = vsel %vm1624, %v1627, %v1629
    %v1631 = vsel %vm1623, %v1610, %v1613
    %v1632 = vsel %vm1626, %v1619, 920167782
    %v1633 = vsel %vm1625, %v1616, %v1632
    %v1634 = vsel %vm1624, %v1631, %v1633
    %v1635 = vsel %vm1623, %v1613, %v1616
    %v1636 = vsel %vm1626, %v1622, 1326507024
    %v1637 = vsel %vm1625, %v1619, %v1636
    %v1638 = vsel %vm1624, %v1635, %v1637
    %v1639 = vshll.u32 %v1599, 8
    %v1640 = vmul.u32.u64.compose %v1639, %v1638
    %v1641 = vextract.low.u32 %v1640
    %v1642 = vextract.high.u32 %v1640
    %v1643 = vmul.u32.u64.compose %v1639, %v1634
    %v1644 = vextract.low.u32 %v1643
    %v1645 = vextract.high.u32 %v1643
    %v1646 = vmul.u32 %v1639, %v1630
    %v1647 = vadd.s32 %v1642, %v1644
    %vm1648 = vc.u32 %v1642, %v1644
    %v1649 = vadd.s32 %v1645, 1
    %v1650 = vsel %vm1648, %v1649, %v1645
    %v1651 = vadd.s32 %v1646, %v1650
    %v1652 = vadd.s32 %v1651, 536870912
    %v1653 = vshrl.u32 %v1652, 30
    %v1654 = vshll.u32 %v1653, 30
    %v1655 = vsub.s32 %v1651, %v1654
    %vm1656 = vcmp.lt.s32.totalorder %v1655, 0
    %v1657 = vsub.s32 0, %v1655
    %v1658 = vsel %vm1656, %v1657, %v1655
    %v1659 = vclz %v1658
    %v1660 = vsub.s32 %v1659, 2
    %vm1661 = vcmp.gt.s32.totalorder 0, %v1660
    %v1662 = vsel %vm1661, 0, %v1660
    %v1663 = vsub.s32 32, %v1662
    %v1664 = vshll.u32 %v1655, %v1662
    %v1665 = vshrl.u32 %v1647, %v1663
    %v1666 = vor.u32 %v1664, %v1665
    %v1667 = vsub.s32 4294967266, %v1662
    %v1668 = vadd.s32 %v1667, 127
    %v1669 = vshll.u32 %v1668, 23
    %v1670 = vor.u32 4788187, %v1669
    %v1671 = vand.u32 2147483647, %v1670
    %v1673 = vcvt.s32.f32 %v1666
    %v1674 = vmul.f32 %v1673, %v1671
    %v1675 = vxor.u32 %v1674, 2147483648
    %v1676 = vsel %vm1593, %v1675, %v1674
    %v1677 = vsub.s32 4, %v1653
    %v1678 = vsel %vm1593, %v1677, %v1653
    %v1679 = vsel %vm1592, %v1383, %v1676
    %v1680 = vsel %vm1592, 0, %v1678
    %v1681 = vcosq.f32.pop %v1679
    %v1682 = vsinq.f32.pop %v1679
    %vm1683 = vweird.f32 %v1383
    %v1684 = vand.u32 %v1680, 3
    %vm1685 = vcmp.lt.s32.totalorder %v1684, 2
    %vm1686 = vcmp.eq.s32.totalorder %v1684, 0
    %v1687 = vxor.u32 %v1682, 2147483648
    %v1688 = vsel %vm1686, %v1681, %v1687
    %vm1689 = vcmp.eq.s32.totalorder %v1684, 2
    %v1690 = vxor.u32 %v1681, 2147483648
    %v1691 = vsel %vm1689, %v1690, %v1682
    %v1692 = vsel %vm1685, %v1688, %v1691
    %v1693 = vsel %vm1683, nan, %v1692
    %v1694 = vand.u32 2147483647, %v1384
    %vm1695 = vcmp.le.f32.partialorder %v1694, 0.7853982
    %vm1696 = vcmp.lt.s32.totalorder %v1384, 0
    %v1697 = vand.u32 %v1384, 2139095040
    %v1698 = vshrl.u32 %v1697, 23
    %v1699 = vsub.s32 %v1698, 127
    %v1700 = vand.u32 2147483647, %v1384
    %v1701 = vand.u32 %v1700, 8388607
    %v1702 = vor.u32 %v1701, 8388608
    %v1703 = vsub.s32 0, %v1702
    %v1704 = vadd.s32 %v1699, 1
    %vm1705 = vcmp.gt.s32.totalorder %v1704, 0
    %v1706 = vsel %vm1705, %v1704, 0
    %v1707 = vshrl.u32 %v1706, 5
    %v1708 = vand.u32 %v1706, 31
    %v1709 = vsub.s32 32, %v1708
    %v1710 = vshrl.u32 683565275, %v1709
    %v1711 = vshll.u32 683565275, %v1708
    %v1712 = vshrl.u32 2475754826, %v1709
    %v1713 = vor.u32 %v1711, %v1712
    %v1714 = vshll.u32 2475754826, %v1708
    %v1715 = vshrl.u32 2131351028, %v1709
    %v1716 = vor.u32 %v1714, %v1715
    %v1717 = vshll.u32 2131351028, %v1708
    %v1718 = vshrl.u32 2102212464, %v1709
    %v1719 = vor.u32 %v1717, %v1718
    %v1720 = vshll.u32 2102212464, %v1708
    %v1721 = vshrl.u32 920167782, %v1709
    %v1722 = vor.u32 %v1720, %v1721
    %v1723 = vshll.u32 920167782, %v1708
    %v1724 = vshrl.u32 1326507024, %v1709
    %v1725 = vor.u32 %v1723, %v1724
    %vm1726 = vcmp.lt.s32.totalorder %v1707, 1
    %vm1727 = vcmp.lt.s32.totalorder %v1707, 2
    %vm1728 = vcmp.lt.s32.totalorder %v1707, 3
    %vm1729 = vcmp.lt.s32.totalorder %v1707, 4
    %v1730 = vsel %vm1726, %v1710, %v1713
    %v1731 = vsel %vm1729, %v1719, 2102212464
    %v1732 = vsel %vm1728, %v1716, %v1731
    %v1733 = vsel %vm1727, %v1730, %v1732
    %v1734 = vsel %vm1726, %v1713, %v1716
    %v1735 = vsel %vm1729, %v1722, 920167782
    %v1736 = vsel %vm1728, %v1719, %v1735
    %v1737 = vsel %vm1727, %v1734, %v1736
    %v1738 = vsel %vm1726, %v1716, %v1719
    %v1739 = vsel %vm1729, %v1725, 1326507024
    %v1740 = vsel %vm1728, %v1722, %v1739
    %v1741 = vsel %vm1727, %v1738, %v1740
    %v1742 = vshll.u32 %v1702, 8
    %v1743 = vmul.u32.u64.compose %v1742, %v1741
    %v1744 = vextract.low.u32 %v1743
    %v1745 = vextract.high.u32 %v1743
    %v1746 = vmul.u32.u64.compose %v1742, %v1737
    %v1747 = vextract.low.u32 %v1746
    %v1748 = vextract.high.u32 %v1746
    %v1749 = vmul.u32 %v1742, %v1733
    %v1750 = vadd.s32 %v1745, %v1747
    %vm1751 = vc.u32 %v1745, %v1747
    %v1752 = vadd.s32 %v1748, 1
    %v1753 = vsel %vm1751, %v1752, %v1748
    %v1754 = vadd.s32 %v1749, %v1753
    %v1755 = vadd.s32 %v1754, 536870912
    %v1756 = vshrl.u32 %v1755, 30
    %v1757 = vshll.u32 %v1756, 30
    %v1758 = vsub.s32 %v1754, %v1757
    %vm1759 = vcmp.lt.s32.totalorder %v1758, 0
    %v1760 = vsub.s32 0, %v1758
    %v1761 = vsel %vm1759, %v1760, %v1758
    %v1762 = vclz %v1761
    %v1763 = vsub.s32 %v1762, 2
    %vm1764 = vcmp.gt.s32.totalorder 0, %v1763
    %v1765 = vsel %vm1764, 0, %v1763
    %v1766 = vsub.s32 32, %v1765
    %v1767 = vshll.u32 %v1758, %v1765
    %v1768 = vshrl.u32 %v1750, %v1766
    %v1769 = vor.u32 %v1767, %v1768
    %v1770 = vsub.s32 4294967266, %v1765
    %v1771 = vadd.s32 %v1770, 127
    %v1772 = vshll.u32 %v1771, 23
    %v1773 = vor.u32 4788187, %v1772
    %v1774 = vand.u32 2147483647, %v1773
    %v1776 = vcvt.s32.f32 %v1769
    %v1777 = vmul.f32 %v1776, %v1774
    %v1778 = vxor.u32 %v1777, 2147483648
    %v1779 = vsel %vm1696, %v1778, %v1777
    %v1780 = vsub.s32 4, %v1756
    %v1781 = vsel %vm1696, %v1780, %v1756
    %v1782 = vsel %vm1695, %v1384, %v1779
    %v1783 = vsel %vm1695, 0, %v1781
    %v1784 = vcosq.f32.pop %v1782
    %v1785 = vsinq.f32.pop %v1782
    %vm1786 = vweird.f32 %v1384
    %v1787 = vand.u32 %v1783, 3
    %vm1788 = vcmp.lt.s32.totalorder %v1787, 2
    %vm1789 = vcmp.eq.s32.totalorder %v1787, 0
    %v1790 = vxor.u32 %v1785, 2147483648
    %v1791 = vsel %vm1789, %v1784, %v1790
    %vm1792 = vcmp.eq.s32.totalorder %v1787, 2
    %v1793 = vxor.u32 %v1784, 2147483648
    %v1794 = vsel %vm1792, %v1793, %v1785
    %v1795 = vsel %vm1788, %v1791, %v1794
    %v1796 = vsel %vm1786, nan, %v1795
    %v1797 = vand.u32 2147483647, %v1381
    %vm1798 = vcmp.le.f32.partialorder %v1797, 0.7853982
    %vm1799 = vcmp.lt.s32.totalorder %v1381, 0
    %v1800 = vand.u32 %v1381, 2139095040
    %v1801 = vshrl.u32 %v1800, 23
    %v1802 = vsub.s32 %v1801, 127
    %v1803 = vand.u32 2147483647, %v1381
    %v1804 = vand.u32 %v1803, 8388607
    %v1805 = vor.u32 %v1804, 8388608
    %v1806 = vsub.s32 0, %v1805
    %v1807 = vadd.s32 %v1802, 1
    %vm1808 = vcmp.gt.s32.totalorder %v1807, 0
    %v1809 = vsel %vm1808, %v1807, 0
    %v1810 = vshrl.u32 %v1809, 5
    %v1811 = vand.u32 %v1809, 31
    %v1812 = vsub.s32 32, %v1811
    %v1813 = vshrl.u32 683565275, %v1812
    %v1814 = vshll.u32 683565275, %v1811
    %v1815 = vshrl.u32 2475754826, %v1812
    %v1816 = vor.u32 %v1814, %v1815
    %v1817 = vshll.u32 2475754826, %v1811
    %v1818 = vshrl.u32 2131351028, %v1812
    %v1819 = vor.u32 %v1817, %v1818
    %v1820 = vshll.u32 2131351028, %v1811
    %v1821 = vshrl.u32 2102212464, %v1812
    %v1822 = vor.u32 %v1820, %v1821
    %v1823 = vshll.u32 2102212464, %v1811
    %v1824 = vshrl.u32 920167782, %v1812
    %v1825 = vor.u32 %v1823, %v1824
    %v1826 = vshll.u32 920167782, %v1811
    %v1827 = vshrl.u32 1326507024, %v1812
    %v1828 = vor.u32 %v1826, %v1827
    %vm1829 = vcmp.lt.s32.totalorder %v1810, 1
    %vm1830 = vcmp.lt.s32.totalorder %v1810, 2
    %vm1831 = vcmp.lt.s32.totalorder %v1810, 3
    %vm1832 = vcmp.lt.s32.totalorder %v1810, 4
    %v1833 = vsel %vm1829, %v1813, %v1816
    %v1834 = vsel %vm1832, %v1822, 2102212464
    %v1835 = vsel %vm1831, %v1819, %v1834
    %v1836 = vsel %vm1830, %v1833, %v1835
    %v1837 = vsel %vm1829, %v1816, %v1819
    %v1838 = vsel %vm1832, %v1825, 920167782
    %v1839 = vsel %vm1831, %v1822, %v1838
    %v1840 = vsel %vm1830, %v1837, %v1839
    %v1841 = vsel %vm1829, %v1819, %v1822
    %v1842 = vsel %vm1832, %v1828, 1326507024
    %v1843 = vsel %vm1831, %v1825, %v1842
    %v1844 = vsel %vm1830, %v1841, %v1843
    %v1845 = vshll.u32 %v1805, 8
    %v1846 = vmul.u32.u64.compose %v1845, %v1844
    %v1847 = vextract.low.u32 %v1846
    %v1848 = vextract.high.u32 %v1846
    %v1849 = vmul.u32.u64.compose %v1845, %v1840
    %v1850 = vextract.low.u32 %v1849
    %v1851 = vextract.high.u32 %v1849
    %v1852 = vmul.u32 %v1845, %v1836
    %v1853 = vadd.s32 %v1848, %v1850
    %vm1854 = vc.u32 %v1848, %v1850
    %v1855 = vadd.s32 %v1851, 1
    %v1856 = vsel %vm1854, %v1855, %v1851
    %v1857 = vadd.s32 %v1852, %v1856
    %v1858 = vadd.s32 %v1857, 536870912
    %v1859 = vshrl.u32 %v1858, 30
    %v1860 = vshll.u32 %v1859, 30
    %v1861 = vsub.s32 %v1857, %v1860
    %vm1862 = vcmp.lt.s32.totalorder %v1861, 0
    %v1863 = vsub.s32 0, %v1861
    %v1864 = vsel %vm1862, %v1863, %v1861
    %v1865 = vclz %v1864
    %v1866 = vsub.s32 %v1865, 2
    %vm1867 = vcmp.gt.s32.totalorder 0, %v1866
    %v1868 = vsel %vm1867, 0, %v1866
    %v1869 = vsub.s32 32, %v1868
    %v1870 = vshll.u32 %v1861, %v1868
    %v1871 = vshrl.u32 %v1853, %v1869
    %v1872 = vor.u32 %v1870, %v1871
    %v1873 = vsub.s32 4294967266, %v1868
    %v1874 = vadd.s32 %v1873, 127
    %v1875 = vshll.u32 %v1874, 23
    %v1876 = vor.u32 4788187, %v1875
    %v1877 = vand.u32 2147483647, %v1876
    %v1879 = vcvt.s32.f32 %v1872
    %v1880 = vmul.f32 %v1879, %v1877
    %v1881 = vxor.u32 %v1880, 2147483648
    %v1882 = vsel %vm1799, %v1881, %v1880
    %v1883 = vsub.s32 4, %v1859
    %v1884 = vsel %vm1799, %v1883, %v1859
    %v1885 = vsel %vm1798, %v1381, %v1882
    %v1886 = vsel %vm1798, 0, %v1884
    %v1887 = vcosq.f32.pop %v1885
    %v1888 = vsinq.f32.pop %v1885
    %vm1889 = vweird.f32 %v1381
    %v1890 = vadd.s32 %v1886, 3
    %v1891 = vand.u32 %v1890, 3
    %vm1892 = vcmp.lt.s32.totalorder %v1891, 2
    %vm1893 = vcmp.eq.s32.totalorder %v1891, 0
    %v1894 = vxor.u32 %v1888, 2147483648
    %v1895 = vsel %vm1893, %v1887, %v1894
    %vm1896 = vcmp.eq.s32.totalorder %v1891, 2
    %v1897 = vxor.u32 %v1887, 2147483648
    %v1898 = vsel %vm1896, %v1897, %v1888
    %v1899 = vsel %vm1892, %v1895, %v1898
    %v1900 = vsel %vm1889, nan, %v1899
    %v1901 = vand.u32 2147483647, %v1382
    %vm1902 = vcmp.le.f32.partialorder %v1901, 0.7853982
    %vm1903 = vcmp.lt.s32.totalorder %v1382, 0
    %v1904 = vand.u32 %v1382, 2139095040
    %v1905 = vshrl.u32 %v1904, 23
    %v1906 = vsub.s32 %v1905, 127
    %v1907 = vand.u32 2147483647, %v1382
    %v1908 = vand.u32 %v1907, 8388607
    %v1909 = vor.u32 %v1908, 8388608
    %v1910 = vsub.s32 0, %v1909
    %v1911 = vadd.s32 %v1906, 1
    %vm1912 = vcmp.gt.s32.totalorder %v1911, 0
    %v1913 = vsel %vm1912, %v1911, 0
    %v1914 = vshrl.u32 %v1913, 5
    %v1915 = vand.u32 %v1913, 31
    %v1916 = vsub.s32 32, %v1915
    %v1917 = vshrl.u32 683565275, %v1916
    %v1918 = vshll.u32 683565275, %v1915
    %v1919 = vshrl.u32 2475754826, %v1916
    %v1920 = vor.u32 %v1918, %v1919
    %v1921 = vshll.u32 2475754826, %v1915
    %v1922 = vshrl.u32 2131351028, %v1916
    %v1923 = vor.u32 %v1921, %v1922
    %v1924 = vshll.u32 2131351028, %v1915
    %v1925 = vshrl.u32 2102212464, %v1916
    %v1926 = vor.u32 %v1924, %v1925
    %v1927 = vshll.u32 2102212464, %v1915
    %v1928 = vshrl.u32 920167782, %v1916
    %v1929 = vor.u32 %v1927, %v1928
    %v1930 = vshll.u32 920167782, %v1915
    %v1931 = vshrl.u32 1326507024, %v1916
    %v1932 = vor.u32 %v1930, %v1931
    %vm1933 = vcmp.lt.s32.totalorder %v1914, 1
    %vm1934 = vcmp.lt.s32.totalorder %v1914, 2
    %vm1935 = vcmp.lt.s32.totalorder %v1914, 3
    %vm1936 = vcmp.lt.s32.totalorder %v1914, 4
    %v1937 = vsel %vm1933, %v1917, %v1920
    %v1938 = vsel %vm1936, %v1926, 2102212464
    %v1939 = vsel %vm1935, %v1923, %v1938
    %v1940 = vsel %vm1934, %v1937, %v1939
    %v1941 = vsel %vm1933, %v1920, %v1923
    %v1942 = vsel %vm1936, %v1929, 920167782
    %v1943 = vsel %vm1935, %v1926, %v1942
    %v1944 = vsel %vm1934, %v1941, %v1943
    %v1945 = vsel %vm1933, %v1923, %v1926
    %v1946 = vsel %vm1936, %v1932, 1326507024
    %v1947 = vsel %vm1935, %v1929, %v1946
    %v1948 = vsel %vm1934, %v1945, %v1947
    %v1949 = vshll.u32 %v1909, 8
    %v1950 = vmul.u32.u64.compose %v1949, %v1948
    %v1951 = vextract.low.u32 %v1950
    %v1952 = vextract.high.u32 %v1950
    %v1953 = vmul.u32.u64.compose %v1949, %v1944
    %v1954 = vextract.low.u32 %v1953
    %v1955 = vextract.high.u32 %v1953
    %v1956 = vmul.u32 %v1949, %v1940
    %v1957 = vadd.s32 %v1952, %v1954
    %vm1958 = vc.u32 %v1952, %v1954
    %v1959 = vadd.s32 %v1955, 1
    %v1960 = vsel %vm1958, %v1959, %v1955
    %v1961 = vadd.s32 %v1956, %v1960
    %v1962 = vadd.s32 %v1961, 536870912
    %v1963 = vshrl.u32 %v1962, 30
    %v1964 = vshll.u32 %v1963, 30
    %v1965 = vsub.s32 %v1961, %v1964
    %vm1966 = vcmp.lt.s32.totalorder %v1965, 0
    %v1967 = vsub.s32 0, %v1965
    %v1968 = vsel %vm1966, %v1967, %v1965
    %v1969 = vclz %v1968
    %v1970 = vsub.s32 %v1969, 2
    %vm1971 = vcmp.gt.s32.totalorder 0, %v1970
    %v1972 = vsel %vm1971, 0, %v1970
    %v1973 = vsub.s32 32, %v1972
    %v1974 = vshll.u32 %v1965, %v1972
    %v1975 = vshrl.u32 %v1957, %v1973
    %v1976 = vor.u32 %v1974, %v1975
    %v1977 = vsub.s32 4294967266, %v1972
    %v1978 = vadd.s32 %v1977, 127
    %v1979 = vshll.u32 %v1978, 23
    %v1980 = vor.u32 4788187, %v1979
    %v1981 = vand.u32 2147483647, %v1980
    %v1983 = vcvt.s32.f32 %v1976
    %v1984 = vmul.f32 %v1983, %v1981
    %v1985 = vxor.u32 %v1984, 2147483648
    %v1986 = vsel %vm1903, %v1985, %v1984
    %v1987 = vsub.s32 4, %v1963
    %v1988 = vsel %vm1903, %v1987, %v1963
    %v1989 = vsel %vm1902, %v1382, %v1986
    %v1990 = vsel %vm1902, 0, %v1988
    %v1991 = vcosq.f32.pop %v1989
    %v1992 = vsinq.f32.pop %v1989
    %vm1993 = vweird.f32 %v1382
    %v1994 = vadd.s32 %v1990, 3
    %v1995 = vand.u32 %v1994, 3
    %vm1996 = vcmp.lt.s32.totalorder %v1995, 2
    %vm1997 = vcmp.eq.s32.totalorder %v1995, 0
    %v1998 = vxor.u32 %v1992, 2147483648
    %v1999 = vsel %vm1997, %v1991, %v1998
    %vm2000 = vcmp.eq.s32.totalorder %v1995, 2
    %v2001 = vxor.u32 %v1991, 2147483648
    %v2002 = vsel %vm2000, %v2001, %v1992
    %v2003 = vsel %vm1996, %v1999, %v2002
    %v2004 = vsel %vm1993, nan, %v2003
    %v2005 = vand.u32 2147483647, %v1383
    %vm2006 = vcmp.le.f32.partialorder %v2005, 0.7853982
    %vm2007 = vcmp.lt.s32.totalorder %v1383, 0
    %v2008 = vand.u32 %v1383, 2139095040
    %v2009 = vshrl.u32 %v2008, 23
    %v2010 = vsub.s32 %v2009, 127
    %v2011 = vand.u32 2147483647, %v1383
    %v2012 = vand.u32 %v2011, 8388607
    %v2013 = vor.u32 %v2012, 8388608
    %v2014 = vsub.s32 0, %v2013
    %v2015 = vadd.s32 %v2010, 1
    %vm2016 = vcmp.gt.s32.totalorder %v2015, 0
    %v2017 = vsel %vm2016, %v2015, 0
    %v2018 = vshrl.u32 %v2017, 5
    %v2019 = vand.u32 %v2017, 31
    %v2020 = vsub.s32 32, %v2019
    %v2021 = vshrl.u32 683565275, %v2020
    %v2022 = vshll.u32 683565275, %v2019
    %v2023 = vshrl.u32 2475754826, %v2020
    %v2024 = vor.u32 %v2022, %v2023
    %v2025 = vshll.u32 2475754826, %v2019
    %v2026 = vshrl.u32 2131351028, %v2020
    %v2027 = vor.u32 %v2025, %v2026
    %v2028 = vshll.u32 2131351028, %v2019
    %v2029 = vshrl.u32 2102212464, %v2020
    %v2030 = vor.u32 %v2028, %v2029
    %v2031 = vshll.u32 2102212464, %v2019
    %v2032 = vshrl.u32 920167782, %v2020
    %v2033 = vor.u32 %v2031, %v2032
    %v2034 = vshll.u32 920167782, %v2019
    %v2035 = vshrl.u32 1326507024, %v2020
    %v2036 = vor.u32 %v2034, %v2035
    %vm2037 = vcmp.lt.s32.totalorder %v2018, 1
    %vm2038 = vcmp.lt.s32.totalorder %v2018, 2
    %vm2039 = vcmp.lt.s32.totalorder %v2018, 3
    %vm2040 = vcmp.lt.s32.totalorder %v2018, 4
    %v2041 = vsel %vm2037, %v2021, %v2024
    %v2042 = vsel %vm2040, %v2030, 2102212464
    %v2043 = vsel %vm2039, %v2027, %v2042
    %v2044 = vsel %vm2038, %v2041, %v2043
    %v2045 = vsel %vm2037, %v2024, %v2027
    %v2046 = vsel %vm2040, %v2033, 920167782
    %v2047 = vsel %vm2039, %v2030, %v2046
    %v2048 = vsel %vm2038, %v2045, %v2047
    %v2049 = vsel %vm2037, %v2027, %v2030
    %v2050 = vsel %vm2040, %v2036, 1326507024
    %v2051 = vsel %vm2039, %v2033, %v2050
    %v2052 = vsel %vm2038, %v2049, %v2051
    %v2053 = vshll.u32 %v2013, 8
    %v2054 = vmul.u32.u64.compose %v2053, %v2052
    %v2055 = vextract.low.u32 %v2054
    %v2056 = vextract.high.u32 %v2054
    %v2057 = vmul.u32.u64.compose %v2053, %v2048
    %v2058 = vextract.low.u32 %v2057
    %v2059 = vextract.high.u32 %v2057
    %v2060 = vmul.u32 %v2053, %v2044
    %v2061 = vadd.s32 %v2056, %v2058
    %vm2062 = vc.u32 %v2056, %v2058
    %v2063 = vadd.s32 %v2059, 1
    %v2064 = vsel %vm2062, %v2063, %v2059
    %v2065 = vadd.s32 %v2060, %v2064
    %v2066 = vadd.s32 %v2065, 536870912
    %v2067 = vshrl.u32 %v2066, 30
    %v2068 = vshll.u32 %v2067, 30
    %v2069 = vsub.s32 %v2065, %v2068
    %vm2070 = vcmp.lt.s32.totalorder %v2069, 0
    %v2071 = vsub.s32 0, %v2069
    %v2072 = vsel %vm2070, %v2071, %v2069
    %v2073 = vclz %v2072
    %v2074 = vsub.s32 %v2073, 2
    %vm2075 = vcmp.gt.s32.totalorder 0, %v2074
    %v2076 = vsel %vm2075, 0, %v2074
    %v2077 = vsub.s32 32, %v2076
    %v2078 = vshll.u32 %v2069, %v2076
    %v2079 = vshrl.u32 %v2061, %v2077
    %v2080 = vor.u32 %v2078, %v2079
    %v2081 = vsub.s32 4294967266, %v2076
    %v2082 = vadd.s32 %v2081, 127
    %v2083 = vshll.u32 %v2082, 23
    %v2084 = vor.u32 4788187, %v2083
    %v2085 = vand.u32 2147483647, %v2084
    %v2087 = vcvt.s32.f32 %v2080
    %v2088 = vmul.f32 %v2087, %v2085
    %v2089 = vxor.u32 %v2088, 2147483648
    %v2090 = vsel %vm2007, %v2089, %v2088
    %v2091 = vsub.s32 4, %v2067
    %v2092 = vsel %vm2007, %v2091, %v2067
    %v2093 = vsel %vm2006, %v1383, %v2090
    %v2094 = vsel %vm2006, 0, %v2092
    %v2095 = vcosq.f32.pop %v2093
    %v2096 = vsinq.f32.pop %v2093
    %vm2097 = vweird.f32 %v1383
    %v2098 = vadd.s32 %v2094, 3
    %v2099 = vand.u32 %v2098, 3
    %vm2100 = vcmp.lt.s32.totalorder %v2099, 2
    %vm2101 = vcmp.eq.s32.totalorder %v2099, 0
    %v2102 = vxor.u32 %v2096, 2147483648
    %v2103 = vsel %vm2101, %v2095, %v2102
    %vm2104 = vcmp.eq.s32.totalorder %v2099, 2
    %v2105 = vxor.u32 %v2095, 2147483648
    %v2106 = vsel %vm2104, %v2105, %v2096
    %v2107 = vsel %vm2100, %v2103, %v2106
    %v2108 = vsel %vm2097, nan, %v2107
    %v2109 = vand.u32 2147483647, %v1384
    %vm2110 = vcmp.le.f32.partialorder %v2109, 0.7853982
    %vm2111 = vcmp.lt.s32.totalorder %v1384, 0
    %v2112 = vand.u32 %v1384, 2139095040
    %v2113 = vshrl.u32 %v2112, 23
    %v2114 = vsub.s32 %v2113, 127
    %v2115 = vand.u32 2147483647, %v1384
    %v2116 = vand.u32 %v2115, 8388607
    %v2117 = vor.u32 %v2116, 8388608
    %v2118 = vsub.s32 0, %v2117
    %v2119 = vadd.s32 %v2114, 1
    %vm2120 = vcmp.gt.s32.totalorder %v2119, 0
    %v2121 = vsel %vm2120, %v2119, 0
    %v2122 = vshrl.u32 %v2121, 5
    %v2123 = vand.u32 %v2121, 31
    %v2124 = vsub.s32 32, %v2123
    %v2125 = vshrl.u32 683565275, %v2124
    %v2126 = vshll.u32 683565275, %v2123
    %v2127 = vshrl.u32 2475754826, %v2124
    %v2128 = vor.u32 %v2126, %v2127
    %v2129 = vshll.u32 2475754826, %v2123
    %v2130 = vshrl.u32 2131351028, %v2124
    %v2131 = vor.u32 %v2129, %v2130
    %v2132 = vshll.u32 2131351028, %v2123
    %v2133 = vshrl.u32 2102212464, %v2124
    %v2134 = vor.u32 %v2132, %v2133
    %v2135 = vshll.u32 2102212464, %v2123
    %v2136 = vshrl.u32 920167782, %v2124
    %v2137 = vor.u32 %v2135, %v2136
    %v2138 = vshll.u32 920167782, %v2123
    %v2139 = vshrl.u32 1326507024, %v2124
    %v2140 = vor.u32 %v2138, %v2139
    %vm2141 = vcmp.lt.s32.totalorder %v2122, 1
    %vm2142 = vcmp.lt.s32.totalorder %v2122, 2
    %vm2143 = vcmp.lt.s32.totalorder %v2122, 3
    %vm2144 = vcmp.lt.s32.totalorder %v2122, 4
    %v2145 = vsel %vm2141, %v2125, %v2128
    %v2146 = vsel %vm2144, %v2134, 2102212464
    %v2147 = vsel %vm2143, %v2131, %v2146
    %v2148 = vsel %vm2142, %v2145, %v2147
    %v2149 = vsel %vm2141, %v2128, %v2131
    %v2150 = vsel %vm2144, %v2137, 920167782
    %v2151 = vsel %vm2143, %v2134, %v2150
    %v2152 = vsel %vm2142, %v2149, %v2151
    %v2153 = vsel %vm2141, %v2131, %v2134
    %v2154 = vsel %vm2144, %v2140, 1326507024
    %v2155 = vsel %vm2143, %v2137, %v2154
    %v2156 = vsel %vm2142, %v2153, %v2155
    %v2157 = vshll.u32 %v2117, 8
    %v2158 = vmul.u32.u64.compose %v2157, %v2156
    %v2159 = vextract.low.u32 %v2158
    %v2160 = vextract.high.u32 %v2158
    %v2161 = vmul.u32.u64.compose %v2157, %v2152
    %v2162 = vextract.low.u32 %v2161
    %v2163 = vextract.high.u32 %v2161
    %v2164 = vmul.u32 %v2157, %v2148
    %v2165 = vadd.s32 %v2160, %v2162
    %vm2166 = vc.u32 %v2160, %v2162
    %v2167 = vadd.s32 %v2163, 1
    %v2168 = vsel %vm2166, %v2167, %v2163
    %v2169 = vadd.s32 %v2164, %v2168
    %v2170 = vadd.s32 %v2169, 536870912
    %v2171 = vshrl.u32 %v2170, 30
    %v2172 = vshll.u32 %v2171, 30
    %v2173 = vsub.s32 %v2169, %v2172
    %vm2174 = vcmp.lt.s32.totalorder %v2173, 0
    %v2175 = vsub.s32 0, %v2173
    %v2176 = vsel %vm2174, %v2175, %v2173
    %v2177 = vclz %v2176
    %v2178 = vsub.s32 %v2177, 2
    %vm2179 = vcmp.gt.s32.totalorder 0, %v2178
    %v2180 = vsel %vm2179, 0, %v2178
    %v2181 = vsub.s32 32, %v2180
    %v2182 = vshll.u32 %v2173, %v2180
    %v2183 = vshrl.u32 %v2165, %v2181
    %v2184 = vor.u32 %v2182, %v2183
    %v2185 = vsub.s32 4294967266, %v2180
    %v2186 = vadd.s32 %v2185, 127
    %v2187 = vshll.u32 %v2186, 23
    %v2188 = vor.u32 4788187, %v2187
    %v2189 = vand.u32 2147483647, %v2188
    %v2191 = vcvt.s32.f32 %v2184
    %v2192 = vmul.f32 %v2191, %v2189
    %v2193 = vxor.u32 %v2192, 2147483648
    %v2194 = vsel %vm2111, %v2193, %v2192
    %v2195 = vsub.s32 4, %v2171
    %v2196 = vsel %vm2111, %v2195, %v2171
    %v2197 = vsel %vm2110, %v1384, %v2194
    %v2198 = vsel %vm2110, 0, %v2196
    %v2199 = vcosq.f32.pop %v2197
    %v2200 = vsinq.f32.pop %v2197
    %vm2201 = vweird.f32 %v1384
    %v2202 = vadd.s32 %v2198, 3
    %v2203 = vand.u32 %v2202, 3
    %vm2204 = vcmp.lt.s32.totalorder %v2203, 2
    %vm2205 = vcmp.eq.s32.totalorder %v2203, 0
    %v2206 = vxor.u32 %v2200, 2147483648
    %v2207 = vsel %vm2205, %v2199, %v2206
    %vm2208 = vcmp.eq.s32.totalorder %v2203, 2
    %v2209 = vxor.u32 %v2199, 2147483648
    %v2210 = vsel %vm2208, %v2209, %v2200
    %v2211 = vsel %vm2204, %v2207, %v2210
    %v2212 = vsel %vm2201, nan, %v2211
    %v2213 = vmul.f32 %v1900, %v1199
    %v2214 = vmul.f32 %v2004, %v1203
    %v2215 = vmul.f32 %v2108, %v1207
    %v2216 = vmul.f32 %v2212, %v1211
    %2218 = vrot.lane.b32.xlu0 %v1355, 72
    %v2219 = vpop.permute.xlu0 %2218
    %2221 = vrot.lane.b32.xlu0 %v1355, 56
    %v2222 = vpop.permute.xlu0 %2221
    %v2224 = vsel %vm1228, %v2219, %v2222
    %v2225 = vmul.f32 %v1487, %v1355
    %v2226 = vmul.f32 %v2213, %v2224
    %v2227 = vadd.f32 %v2225, %v2226
    %2229 = vrot.lane.b32.xlu0 %v2227, 68
    %v2230 = vpop.permute.xlu0 %2229
    %2232 = vrot.lane.b32.xlu0 %v2227, 60
    %v2233 = vpop.permute.xlu0 %2232
    %v2235 = vsel %vm1241, %v2230, %v2233
    %v2236 = vmul.f32 %v1590, %v2227
    %v2237 = vmul.f32 %v2214, %v2235
    %v2238 = vadd.f32 %v2236, %v2237
    %2240 = vrot.lane.b32.xlu0 %v2238, 66
    %v2241 = vpop.permute.xlu0 %2240
    %2243 = vrot.lane.b32.xlu0 %v2238, 62
    %v2244 = vpop.permute.xlu0 %2243
    %v2246 = vsel %vm1254, %v2241, %v2244
    %v2247 = vmul.f32 %v1693, %v2238
    %v2248 = vmul.f32 %v2215, %v2246
    %v2249 = vadd.f32 %v2247, %v2248
    %2251 = vrot.lane.b32.xlu0 %v2249, 65
    %v2252 = vpop.permute.xlu0 %2251
    %2254 = vrot.lane.b32.xlu0 %v2249, 63
    %v2255 = vpop.permute.xlu0 %2254
    %v2257 = vsel %vm1267, %v2252, %v2255
    %v2258 = vmul.f32 %v1796, %v2249
    %v2259 = vmul.f32 %v2216, %v2257
    %v2260 = vadd.f32 %v2258, %v2259
    %s2261 = scalar_lea.vmem [#allocation7], 128
    %v2262 = vld [vmem:[%s2261] sm:$0xff]
    %v2263 = vld [vmem:[%s2261 + $0x8] sm:$0xff]
    %v2264 = vld [vmem:[%s2261 + $0x10] sm:$0xff]
    %v2265 = vld [vmem:[%s2261 + $0x18] sm:$0xff]
    %v2266 = vld [vmem:[%s2261 + $0x20] sm:$0xff]
    %v2267 = vld [vmem:[%s2261 + $0x28] sm:$0xff]
    %v2268 = vld [vmem:[%s2261 + $0x30] sm:$0xff]
    %v2269 = vld [vmem:[%s2261 + $0x38] sm:$0xff]
    %v2270 = vld [vmem:[%s2261 + $0x40] sm:$0xff]
    %v2271 = vld [vmem:[%s2261 + $0x48] sm:$0xff]
    %v2272 = vld [vmem:[%s2261 + $0x50] sm:$0xff]
    %v2273 = vld [vmem:[%s2261 + $0x58] sm:$0xff]
    %v2274 = vld [vmem:[%s2261 + $0x60] sm:$0xff]
    %v2275 = vld [vmem:[%s2261 + $0x68] sm:$0xff]
    %v2276 = vld [vmem:[%s2261 + $0x70] sm:$0xff]
    %v2277 = vld [vmem:[%s2261 + $0x78] sm:$0xff]
    %2278 = vmatprep.subr.mxu0 0.0
    %2279 = vmatpush1.msra.mxu0 %v2262
    %2280 = vmatprep.subr.mxu0 0.0
    %2281 = vmatpush1.msra.mxu0 %v2263
    %2282 = vmatprep.subr.mxu0 0.0
    %2283 = vmatpush1.msra.mxu0 %v2264
    %2284 = vmatprep.subr.mxu0 0.0
    %2285 = vmatpush1.msra.mxu0 %v2265
    %2286 = vmatprep.subr.mxu0 0.0
    %2287 = vmatpush1.msra.mxu0 %v2266
    %2288 = vmatprep.subr.mxu0 0.0
    %2289 = vmatpush1.msra.mxu0 %v2267
    %2290 = vmatprep.subr.mxu0 0.0
    %2291 = vmatpush1.msra.mxu0 %v2268
    %2292 = vmatprep.subr.mxu0 0.0
    %2293 = vmatpush1.msra.mxu0 %v2269
    %2294 = vmatprep.subr.mxu0 0.0
    %2295 = vmatpush1.msra.mxu0 %v2270
    %2296 = vmatprep.subr.mxu0 0.0
    %2297 = vmatpush1.msra.mxu0 %v2271
    %2298 = vmatprep.subr.mxu0 0.0
    %2299 = vmatpush1.msra.mxu0 %v2272
    %2300 = vmatprep.subr.mxu0 0.0
    %2301 = vmatpush1.msra.mxu0 %v2273
    %2302 = vmatprep.subr.mxu0 0.0
    %2303 = vmatpush1.msra.mxu0 %v2274
    %2304 = vmatprep.subr.mxu0 0.0
    %2305 = vmatpush1.msra.mxu0 %v2275
    %2306 = vmatprep.subr.mxu0 0.0
    %2307 = vmatpush1.msra.mxu0 %v2276
    %2308 = vmatprep.subr.mxu0 0.0
    %2309 = vmatpush1.msra.mxu0 %v2277
    %2310 = vmatprep.subr.mxu0 0.0
    %2311 = vmatpush1.msra.mxu0 0.0
    %2312 = vmatprep.subr.mxu0 0.0
    %2313 = vmatpush1.msra.mxu0 0.0
    %2314 = vmatprep.subr.mxu0 0.0
    %2315 = vmatpush1.msra.mxu0 0.0
    %2316 = vmatprep.subr.mxu0 0.0
    %2317 = vmatpush1.msra.mxu0 0.0
    %2318 = vmatprep.subr.mxu0 0.0
    %2319 = vmatpush1.msra.mxu0 0.0
    %2320 = vmatprep.subr.mxu0 0.0
    %2321 = vmatpush1.msra.mxu0 0.0
    %2322 = vmatprep.subr.mxu0 0.0
    %2323 = vmatpush1.msra.mxu0 0.0
    %2324 = vmatprep.subr.mxu0 0.0
    %2325 = vmatpush1.msra.mxu0 0.0
    %2326 = vmatprep.subr.mxu0 0.0
    %2327 = vmatpush1.msra.mxu0 0.0
    %2328 = vmatprep.subr.mxu0 0.0
    %2329 = vmatpush1.msra.mxu0 0.0
    %2330 = vmatprep.subr.mxu0 0.0
    %2331 = vmatpush1.msra.mxu0 0.0
    %2332 = vmatprep.subr.mxu0 0.0
    %2333 = vmatpush1.msra.mxu0 0.0
    %2334 = vmatprep.subr.mxu0 0.0
    %2335 = vmatpush1.msra.mxu0 0.0
    %2336 = vmatprep.subr.mxu0 0.0
    %2337 = vmatpush1.msra.mxu0 0.0
    %2338 = vmatprep.subr.mxu0 0.0
    %2339 = vmatpush1.msra.mxu0 0.0
    %2340 = vmatprep.subr.mxu0 0.0
    %2341 = vmatpush1.msra.mxu0 0.0
    %2342 = vmatprep.mubr.f32.mxu0 0.0
    %2343 = vmatmul.mubr.f32.gmra.mrb[0].mxu0 %v2260
    %v2344 = vpop.f32.mrb[0].mxu0
    %v2345 = vadd.f32 0.0, %v2344
    %v2346 = vpop.f32.mrb[0].mxu0
    %2347 = vdwg.mxu0
    %s2348 = scalar_lea.vmem [#allocation5], 66
    %v2349 = vld [vmem:[%s2348] ss:$8 sm:$0xf]
    %v2351 = vlaneseq
    %v2352 = vshrl.u32 %v2351, 7
    %v2353 = vsub.s32 0, %v2352
    %v2354 = vrot.slane %v2349, %v2353
    %v2355 = vlaneseq
    %v2356 = vshrl.u32 %v2355, 7
    %v2357 = vsub.s32 1, %v2356
    %v2358 = vrot.slane %v2349, %v2357
    %v2359 = vlaneseq
    %v2360 = vshrl.u32 %v2359, 7
    %v2361 = vsub.s32 2, %v2360
    %v2362 = vrot.slane %v2349, %v2361
    %v2363 = vlaneseq
    %v2364 = vshrl.u32 %v2363, 7
    %v2365 = vsub.s32 3, %v2364
    %v2366 = vrot.slane %v2349, %v2365
    %v2371 = vmul.f32 %v325, %v2354
    %v2372 = vmul.f32 %v326, %v2358
    %v2373 = vmul.f32 %v327, %v2362
    %v2374 = vmul.f32 %v328, %v2366
    %v2375 = vand.u32 2147483647, %v2371
    %vm2376 = vcmp.le.f32.partialorder %v2375, 0.7853982
    %vm2377 = vcmp.lt.s32.totalorder %v2371, 0
    %v2378 = vand.u32 %v2371, 2139095040
    %v2379 = vshrl.u32 %v2378, 23
    %v2380 = vsub.s32 %v2379, 127
    %v2381 = vand.u32 2147483647, %v2371
    %v2382 = vand.u32 %v2381, 8388607
    %v2383 = vor.u32 %v2382, 8388608
    %v2384 = vsub.s32 0, %v2383
    %v2385 = vadd.s32 %v2380, 1
    %vm2386 = vcmp.gt.s32.totalorder %v2385, 0
    %v2387 = vsel %vm2386, %v2385, 0
    %v2388 = vshrl.u32 %v2387, 5
    %v2389 = vand.u32 %v2387, 31
    %v2390 = vsub.s32 32, %v2389
    %v2391 = vshrl.u32 683565275, %v2390
    %v2392 = vshll.u32 683565275, %v2389
    %v2393 = vshrl.u32 2475754826, %v2390
    %v2394 = vor.u32 %v2392, %v2393
    %v2395 = vshll.u32 2475754826, %v2389
    %v2396 = vshrl.u32 2131351028, %v2390
    %v2397 = vor.u32 %v2395, %v2396
    %v2398 = vshll.u32 2131351028, %v2389
    %v2399 = vshrl.u32 2102212464, %v2390
    %v2400 = vor.u32 %v2398, %v2399
    %v2401 = vshll.u32 2102212464, %v2389
    %v2402 = vshrl.u32 920167782, %v2390
    %v2403 = vor.u32 %v2401, %v2402
    %v2404 = vshll.u32 920167782, %v2389
    %v2405 = vshrl.u32 1326507024, %v2390
    %v2406 = vor.u32 %v2404, %v2405
    %vm2407 = vcmp.lt.s32.totalorder %v2388, 1
    %vm2408 = vcmp.lt.s32.totalorder %v2388, 2
    %vm2409 = vcmp.lt.s32.totalorder %v2388, 3
    %vm2410 = vcmp.lt.s32.totalorder %v2388, 4
    %v2411 = vsel %vm2407, %v2391, %v2394
    %v2412 = vsel %vm2410, %v2400, 2102212464
    %v2413 = vsel %vm2409, %v2397, %v2412
    %v2414 = vsel %vm2408, %v2411, %v2413
    %v2415 = vsel %vm2407, %v2394, %v2397
    %v2416 = vsel %vm2410, %v2403, 920167782
    %v2417 = vsel %vm2409, %v2400, %v2416
    %v2418 = vsel %vm2408, %v2415, %v2417
    %v2419 = vsel %vm2407, %v2397, %v2400
    %v2420 = vsel %vm2410, %v2406, 1326507024
    %v2421 = vsel %vm2409, %v2403, %v2420
    %v2422 = vsel %vm2408, %v2419, %v2421
    %v2423 = vshll.u32 %v2383, 8
    %v2424 = vmul.u32.u64.compose %v2423, %v2422
    %v2425 = vextract.low.u32 %v2424
    %v2426 = vextract.high.u32 %v2424
    %v2427 = vmul.u32.u64.compose %v2423, %v2418
    %v2428 = vextract.low.u32 %v2427
    %v2429 = vextract.high.u32 %v2427
    %v2430 = vmul.u32 %v2423, %v2414
    %v2431 = vadd.s32 %v2426, %v2428
    %vm2432 = vc.u32 %v2426, %v2428
    %v2433 = vadd.s32 %v2429, 1
    %v2434 = vsel %vm2432, %v2433, %v2429
    %v2435 = vadd.s32 %v2430, %v2434
    %v2436 = vadd.s32 %v2435, 536870912
    %v2437 = vshrl.u32 %v2436, 30
    %v2438 = vshll.u32 %v2437, 30
    %v2439 = vsub.s32 %v2435, %v2438
    %vm2440 = vcmp.lt.s32.totalorder %v2439, 0
    %v2441 = vsub.s32 0, %v2439
    %v2442 = vsel %vm2440, %v2441, %v2439
    %v2443 = vclz %v2442
    %v2444 = vsub.s32 %v2443, 2
    %vm2445 = vcmp.gt.s32.totalorder 0, %v2444
    %v2446 = vsel %vm2445, 0, %v2444
    %v2447 = vsub.s32 32, %v2446
    %v2448 = vshll.u32 %v2439, %v2446
    %v2449 = vshrl.u32 %v2431, %v2447
    %v2450 = vor.u32 %v2448, %v2449
    %v2451 = vsub.s32 4294967266, %v2446
    %v2452 = vadd.s32 %v2451, 127
    %v2453 = vshll.u32 %v2452, 23
    %v2454 = vor.u32 4788187, %v2453
    %v2455 = vand.u32 2147483647, %v2454
    %v2457 = vcvt.s32.f32 %v2450
    %v2458 = vmul.f32 %v2457, %v2455
    %v2459 = vxor.u32 %v2458, 2147483648
    %v2460 = vsel %vm2377, %v2459, %v2458
    %v2461 = vsub.s32 4, %v2437
    %v2462 = vsel %vm2377, %v2461, %v2437
    %v2463 = vsel %vm2376, %v2371, %v2460
    %v2464 = vsel %vm2376, 0, %v2462
    %v2465 = vcosq.f32.pop %v2463
    %v2466 = vsinq.f32.pop %v2463
    %vm2467 = vweird.f32 %v2371
    %v2468 = vand.u32 %v2464, 3
    %vm2469 = vcmp.lt.s32.totalorder %v2468, 2
    %vm2470 = vcmp.eq.s32.totalorder %v2468, 0
    %v2471 = vxor.u32 %v2466, 2147483648
    %v2472 = vsel %vm2470, %v2465, %v2471
    %vm2473 = vcmp.eq.s32.totalorder %v2468, 2
    %v2474 = vxor.u32 %v2465, 2147483648
    %v2475 = vsel %vm2473, %v2474, %v2466
    %v2476 = vsel %vm2469, %v2472, %v2475
    %v2477 = vsel %vm2467, nan, %v2476
    %v2478 = vand.u32 2147483647, %v2372
    %vm2479 = vcmp.le.f32.partialorder %v2478, 0.7853982
    %vm2480 = vcmp.lt.s32.totalorder %v2372, 0
    %v2481 = vand.u32 %v2372, 2139095040
    %v2482 = vshrl.u32 %v2481, 23
    %v2483 = vsub.s32 %v2482, 127
    %v2484 = vand.u32 2147483647, %v2372
    %v2485 = vand.u32 %v2484, 8388607
    %v2486 = vor.u32 %v2485, 8388608
    %v2487 = vsub.s32 0, %v2486
    %v2488 = vadd.s32 %v2483, 1
    %vm2489 = vcmp.gt.s32.totalorder %v2488, 0
    %v2490 = vsel %vm2489, %v2488, 0
    %v2491 = vshrl.u32 %v2490, 5
    %v2492 = vand.u32 %v2490, 31
    %v2493 = vsub.s32 32, %v2492
    %v2494 = vshrl.u32 683565275, %v2493
    %v2495 = vshll.u32 683565275, %v2492
    %v2496 = vshrl.u32 2475754826, %v2493
    %v2497 = vor.u32 %v2495, %v2496
    %v2498 = vshll.u32 2475754826, %v2492
    %v2499 = vshrl.u32 2131351028, %v2493
    %v2500 = vor.u32 %v2498, %v2499
    %v2501 = vshll.u32 2131351028, %v2492
    %v2502 = vshrl.u32 2102212464, %v2493
    %v2503 = vor.u32 %v2501, %v2502
    %v2504 = vshll.u32 2102212464, %v2492
    %v2505 = vshrl.u32 920167782, %v2493
    %v2506 = vor.u32 %v2504, %v2505
    %v2507 = vshll.u32 920167782, %v2492
    %v2508 = vshrl.u32 1326507024, %v2493
    %v2509 = vor.u32 %v2507, %v2508
    %vm2510 = vcmp.lt.s32.totalorder %v2491, 1
    %vm2511 = vcmp.lt.s32.totalorder %v2491, 2
    %vm2512 = vcmp.lt.s32.totalorder %v2491, 3
    %vm2513 = vcmp.lt.s32.totalorder %v2491, 4
    %v2514 = vsel %vm2510, %v2494, %v2497
    %v2515 = vsel %vm2513, %v2503, 2102212464
    %v2516 = vsel %vm2512, %v2500, %v2515
    %v2517 = vsel %vm2511, %v2514, %v2516
    %v2518 = vsel %vm2510, %v2497, %v2500
    %v2519 = vsel %vm2513, %v2506, 920167782
    %v2520 = vsel %vm2512, %v2503, %v2519
    %v2521 = vsel %vm2511, %v2518, %v2520
    %v2522 = vsel %vm2510, %v2500, %v2503
    %v2523 = vsel %vm2513, %v2509, 1326507024
    %v2524 = vsel %vm2512, %v2506, %v2523
    %v2525 = vsel %vm2511, %v2522, %v2524
    %v2526 = vshll.u32 %v2486, 8
    %v2527 = vmul.u32.u64.compose %v2526, %v2525
    %v2528 = vextract.low.u32 %v2527
    %v2529 = vextract.high.u32 %v2527
    %v2530 = vmul.u32.u64.compose %v2526, %v2521
    %v2531 = vextract.low.u32 %v2530
    %v2532 = vextract.high.u32 %v2530
    %v2533 = vmul.u32 %v2526, %v2517
    %v2534 = vadd.s32 %v2529, %v2531
    %vm2535 = vc.u32 %v2529, %v2531
    %v2536 = vadd.s32 %v2532, 1
    %v2537 = vsel %vm2535, %v2536, %v2532
    %v2538 = vadd.s32 %v2533, %v2537
    %v2539 = vadd.s32 %v2538, 536870912
    %v2540 = vshrl.u32 %v2539, 30
    %v2541 = vshll.u32 %v2540, 30
    %v2542 = vsub.s32 %v2538, %v2541
    %vm2543 = vcmp.lt.s32.totalorder %v2542, 0
    %v2544 = vsub.s32 0, %v2542
    %v2545 = vsel %vm2543, %v2544, %v2542
    %v2546 = vclz %v2545
    %v2547 = vsub.s32 %v2546, 2
    %vm2548 = vcmp.gt.s32.totalorder 0, %v2547
    %v2549 = vsel %vm2548, 0, %v2547
    %v2550 = vsub.s32 32, %v2549
    %v2551 = vshll.u32 %v2542, %v2549
    %v2552 = vshrl.u32 %v2534, %v2550
    %v2553 = vor.u32 %v2551, %v2552
    %v2554 = vsub.s32 4294967266, %v2549
    %v2555 = vadd.s32 %v2554, 127
    %v2556 = vshll.u32 %v2555, 23
    %v2557 = vor.u32 4788187, %v2556
    %v2558 = vand.u32 2147483647, %v2557
    %v2560 = vcvt.s32.f32 %v2553
    %v2561 = vmul.f32 %v2560, %v2558
    %v2562 = vxor.u32 %v2561, 2147483648
    %v2563 = vsel %vm2480, %v2562, %v2561
    %v2564 = vsub.s32 4, %v2540
    %v2565 = vsel %vm2480, %v2564, %v2540
    %v2566 = vsel %vm2479, %v2372, %v2563
    %v2567 = vsel %vm2479, 0, %v2565
    %v2568 = vcosq.f32.pop %v2566
    %v2569 = vsinq.f32.pop %v2566
    %vm2570 = vweird.f32 %v2372
    %v2571 = vand.u32 %v2567, 3
    %vm2572 = vcmp.lt.s32.totalorder %v2571, 2
    %vm2573 = vcmp.eq.s32.totalorder %v2571, 0
    %v2574 = vxor.u32 %v2569, 2147483648
    %v2575 = vsel %vm2573, %v2568, %v2574
    %vm2576 = vcmp.eq.s32.totalorder %v2571, 2
    %v2577 = vxor.u32 %v2568, 2147483648
    %v2578 = vsel %vm2576, %v2577, %v2569
    %v2579 = vsel %vm2572, %v2575, %v2578
    %v2580 = vsel %vm2570, nan, %v2579
    %v2581 = vand.u32 2147483647, %v2373
    %vm2582 = vcmp.le.f32.partialorder %v2581, 0.7853982
    %vm2583 = vcmp.lt.s32.totalorder %v2373, 0
    %v2584 = vand.u32 %v2373, 2139095040
    %v2585 = vshrl.u32 %v2584, 23
    %v2586 = vsub.s32 %v2585, 127
    %v2587 = vand.u32 2147483647, %v2373
    %v2588 = vand.u32 %v2587, 8388607
    %v2589 = vor.u32 %v2588, 8388608
    %v2590 = vsub.s32 0, %v2589
    %v2591 = vadd.s32 %v2586, 1
    %vm2592 = vcmp.gt.s32.totalorder %v2591, 0
    %v2593 = vsel %vm2592, %v2591, 0
    %v2594 = vshrl.u32 %v2593, 5
    %v2595 = vand.u32 %v2593, 31
    %v2596 = vsub.s32 32, %v2595
    %v2597 = vshrl.u32 683565275, %v2596
    %v2598 = vshll.u32 683565275, %v2595
    %v2599 = vshrl.u32 2475754826, %v2596
    %v2600 = vor.u32 %v2598, %v2599
    %v2601 = vshll.u32 2475754826, %v2595
    %v2602 = vshrl.u32 2131351028, %v2596
    %v2603 = vor.u32 %v2601, %v2602
    %v2604 = vshll.u32 2131351028, %v2595
    %v2605 = vshrl.u32 2102212464, %v2596
    %v2606 = vor.u32 %v2604, %v2605
    %v2607 = vshll.u32 2102212464, %v2595
    %v2608 = vshrl.u32 920167782, %v2596
    %v2609 = vor.u32 %v2607, %v2608
    %v2610 = vshll.u32 920167782, %v2595
    %v2611 = vshrl.u32 1326507024, %v2596
    %v2612 = vor.u32 %v2610, %v2611
    %vm2613 = vcmp.lt.s32.totalorder %v2594, 1
    %vm2614 = vcmp.lt.s32.totalorder %v2594, 2
    %vm2615 = vcmp.lt.s32.totalorder %v2594, 3
    %vm2616 = vcmp.lt.s32.totalorder %v2594, 4
    %v2617 = vsel %vm2613, %v2597, %v2600
    %v2618 = vsel %vm2616, %v2606, 2102212464
    %v2619 = vsel %vm2615, %v2603, %v2618
    %v2620 = vsel %vm2614, %v2617, %v2619
    %v2621 = vsel %vm2613, %v2600, %v2603
    %v2622 = vsel %vm2616, %v2609, 920167782
    %v2623 = vsel %vm2615, %v2606, %v2622
    %v2624 = vsel %vm2614, %v2621, %v2623
    %v2625 = vsel %vm2613, %v2603, %v2606
    %v2626 = vsel %vm2616, %v2612, 1326507024
    %v2627 = vsel %vm2615, %v2609, %v2626
    %v2628 = vsel %vm2614, %v2625, %v2627
    %v2629 = vshll.u32 %v2589, 8
    %v2630 = vmul.u32.u64.compose %v2629, %v2628
    %v2631 = vextract.low.u32 %v2630
    %v2632 = vextract.high.u32 %v2630
    %v2633 = vmul.u32.u64.compose %v2629, %v2624
    %v2634 = vextract.low.u32 %v2633
    %v2635 = vextract.high.u32 %v2633
    %v2636 = vmul.u32 %v2629, %v2620
    %v2637 = vadd.s32 %v2632, %v2634
    %vm2638 = vc.u32 %v2632, %v2634
    %v2639 = vadd.s32 %v2635, 1
    %v2640 = vsel %vm2638, %v2639, %v2635
    %v2641 = vadd.s32 %v2636, %v2640
    %v2642 = vadd.s32 %v2641, 536870912
    %v2643 = vshrl.u32 %v2642, 30
    %v2644 = vshll.u32 %v2643, 30
    %v2645 = vsub.s32 %v2641, %v2644
    %vm2646 = vcmp.lt.s32.totalorder %v2645, 0
    %v2647 = vsub.s32 0, %v2645
    %v2648 = vsel %vm2646, %v2647, %v2645
    %v2649 = vclz %v2648
    %v2650 = vsub.s32 %v2649, 2
    %vm2651 = vcmp.gt.s32.totalorder 0, %v2650
    %v2652 = vsel %vm2651, 0, %v2650
    %v2653 = vsub.s32 32, %v2652
    %v2654 = vshll.u32 %v2645, %v2652
    %v2655 = vshrl.u32 %v2637, %v2653
    %v2656 = vor.u32 %v2654, %v2655
    %v2657 = vsub.s32 4294967266, %v2652
    %v2658 = vadd.s32 %v2657, 127
    %v2659 = vshll.u32 %v2658, 23
    %v2660 = vor.u32 4788187, %v2659
    %v2661 = vand.u32 2147483647, %v2660
    %v2663 = vcvt.s32.f32 %v2656
    %v2664 = vmul.f32 %v2663, %v2661
    %v2665 = vxor.u32 %v2664, 2147483648
    %v2666 = vsel %vm2583, %v2665, %v2664
    %v2667 = vsub.s32 4, %v2643
    %v2668 = vsel %vm2583, %v2667, %v2643
    %v2669 = vsel %vm2582, %v2373, %v2666
    %v2670 = vsel %vm2582, 0, %v2668
    %v2671 = vcosq.f32.pop %v2669
    %v2672 = vsinq.f32.pop %v2669
    %vm2673 = vweird.f32 %v2373
    %v2674 = vand.u32 %v2670, 3
    %vm2675 = vcmp.lt.s32.totalorder %v2674, 2
    %vm2676 = vcmp.eq.s32.totalorder %v2674, 0
    %v2677 = vxor.u32 %v2672, 2147483648
    %v2678 = vsel %vm2676, %v2671, %v2677
    %vm2679 = vcmp.eq.s32.totalorder %v2674, 2
    %v2680 = vxor.u32 %v2671, 2147483648
    %v2681 = vsel %vm2679, %v2680, %v2672
    %v2682 = vsel %vm2675, %v2678, %v2681
    %v2683 = vsel %vm2673, nan, %v2682
    %v2684 = vand.u32 2147483647, %v2374
    %vm2685 = vcmp.le.f32.partialorder %v2684, 0.7853982
    %vm2686 = vcmp.lt.s32.totalorder %v2374, 0
    %v2687 = vand.u32 %v2374, 2139095040
    %v2688 = vshrl.u32 %v2687, 23
    %v2689 = vsub.s32 %v2688, 127
    %v2690 = vand.u32 2147483647, %v2374
    %v2691 = vand.u32 %v2690, 8388607
    %v2692 = vor.u32 %v2691, 8388608
    %v2693 = vsub.s32 0, %v2692
    %v2694 = vadd.s32 %v2689, 1
    %vm2695 = vcmp.gt.s32.totalorder %v2694, 0
    %v2696 = vsel %vm2695, %v2694, 0
    %v2697 = vshrl.u32 %v2696, 5
    %v2698 = vand.u32 %v2696, 31
    %v2699 = vsub.s32 32, %v2698
    %v2700 = vshrl.u32 683565275, %v2699
    %v2701 = vshll.u32 683565275, %v2698
    %v2702 = vshrl.u32 2475754826, %v2699
    %v2703 = vor.u32 %v2701, %v2702
    %v2704 = vshll.u32 2475754826, %v2698
    %v2705 = vshrl.u32 2131351028, %v2699
    %v2706 = vor.u32 %v2704, %v2705
    %v2707 = vshll.u32 2131351028, %v2698
    %v2708 = vshrl.u32 2102212464, %v2699
    %v2709 = vor.u32 %v2707, %v2708
    %v2710 = vshll.u32 2102212464, %v2698
    %v2711 = vshrl.u32 920167782, %v2699
    %v2712 = vor.u32 %v2710, %v2711
    %v2713 = vshll.u32 920167782, %v2698
    %v2714 = vshrl.u32 1326507024, %v2699
    %v2715 = vor.u32 %v2713, %v2714
    %vm2716 = vcmp.lt.s32.totalorder %v2697, 1
    %vm2717 = vcmp.lt.s32.totalorder %v2697, 2
    %vm2718 = vcmp.lt.s32.totalorder %v2697, 3
    %vm2719 = vcmp.lt.s32.totalorder %v2697, 4
    %v2720 = vsel %vm2716, %v2700, %v2703
    %v2721 = vsel %vm2719, %v2709, 2102212464
    %v2722 = vsel %vm2718, %v2706, %v2721
    %v2723 = vsel %vm2717, %v2720, %v2722
    %v2724 = vsel %vm2716, %v2703, %v2706
    %v2725 = vsel %vm2719, %v2712, 920167782
    %v2726 = vsel %vm2718, %v2709, %v2725
    %v2727 = vsel %vm2717, %v2724, %v2726
    %v2728 = vsel %vm2716, %v2706, %v2709
    %v2729 = vsel %vm2719, %v2715, 1326507024
    %v2730 = vsel %vm2718, %v2712, %v2729
    %v2731 = vsel %vm2717, %v2728, %v2730
    %v2732 = vshll.u32 %v2692, 8
    %v2733 = vmul.u32.u64.compose %v2732, %v2731
    %v2734 = vextract.low.u32 %v2733
    %v2735 = vextract.high.u32 %v2733
    %v2736 = vmul.u32.u64.compose %v2732, %v2727
    %v2737 = vextract.low.u32 %v2736
    %v2738 = vextract.high.u32 %v2736
    %v2739 = vmul.u32 %v2732, %v2723
    %v2740 = vadd.s32 %v2735, %v2737
    %vm2741 = vc.u32 %v2735, %v2737
    %v2742 = vadd.s32 %v2738, 1
    %v2743 = vsel %vm2741, %v2742, %v2738
    %v2744 = vadd.s32 %v2739, %v2743
    %v2745 = vadd.s32 %v2744, 536870912
    %v2746 = vshrl.u32 %v2745, 30
    %v2747 = vshll.u32 %v2746, 30
    %v2748 = vsub.s32 %v2744, %v2747
    %vm2749 = vcmp.lt.s32.totalorder %v2748, 0
    %v2750 = vsub.s32 0, %v2748
    %v2751 = vsel %vm2749, %v2750, %v2748
    %v2752 = vclz %v2751
    %v2753 = vsub.s32 %v2752, 2
    %vm2754 = vcmp.gt.s32.totalorder 0, %v2753
    %v2755 = vsel %vm2754, 0, %v2753
    %v2756 = vsub.s32 32, %v2755
    %v2757 = vshll.u32 %v2748, %v2755
    %v2758 = vshrl.u32 %v2740, %v2756
    %v2759 = vor.u32 %v2757, %v2758
    %v2760 = vsub.s32 4294967266, %v2755
    %v2761 = vadd.s32 %v2760, 127
    %v2762 = vshll.u32 %v2761, 23
    %v2763 = vor.u32 4788187, %v2762
    %v2764 = vand.u32 2147483647, %v2763
    %v2766 = vcvt.s32.f32 %v2759
    %v2767 = vmul.f32 %v2766, %v2764
    %v2768 = vxor.u32 %v2767, 2147483648
    %v2769 = vsel %vm2686, %v2768, %v2767
    %v2770 = vsub.s32 4, %v2746
    %v2771 = vsel %vm2686, %v2770, %v2746
    %v2772 = vsel %vm2685, %v2374, %v2769
    %v2773 = vsel %vm2685, 0, %v2771
    %v2774 = vcosq.f32.pop %v2772
    %v2775 = vsinq.f32.pop %v2772
    %vm2776 = vweird.f32 %v2374
    %v2777 = vand.u32 %v2773, 3
    %vm2778 = vcmp.lt.s32.totalorder %v2777, 2
    %vm2779 = vcmp.eq.s32.totalorder %v2777, 0
    %v2780 = vxor.u32 %v2775, 2147483648
    %v2781 = vsel %vm2779, %v2774, %v2780
    %vm2782 = vcmp.eq.s32.totalorder %v2777, 2
    %v2783 = vxor.u32 %v2774, 2147483648
    %v2784 = vsel %vm2782, %v2783, %v2775
    %v2785 = vsel %vm2778, %v2781, %v2784
    %v2786 = vsel %vm2776, nan, %v2785
    %v2787 = vand.u32 2147483647, %v2371
    %vm2788 = vcmp.le.f32.partialorder %v2787, 0.7853982
    %vm2789 = vcmp.lt.s32.totalorder %v2371, 0
    %v2790 = vand.u32 %v2371, 2139095040
    %v2791 = vshrl.u32 %v2790, 23
    %v2792 = vsub.s32 %v2791, 127
    %v2793 = vand.u32 2147483647, %v2371
    %v2794 = vand.u32 %v2793, 8388607
    %v2795 = vor.u32 %v2794, 8388608
    %v2796 = vsub.s32 0, %v2795
    %v2797 = vadd.s32 %v2792, 1
    %vm2798 = vcmp.gt.s32.totalorder %v2797, 0
    %v2799 = vsel %vm2798, %v2797, 0
    %v2800 = vshrl.u32 %v2799, 5
    %v2801 = vand.u32 %v2799, 31
    %v2802 = vsub.s32 32, %v2801
    %v2803 = vshrl.u32 683565275, %v2802
    %v2804 = vshll.u32 683565275, %v2801
    %v2805 = vshrl.u32 2475754826, %v2802
    %v2806 = vor.u32 %v2804, %v2805
    %v2807 = vshll.u32 2475754826, %v2801
    %v2808 = vshrl.u32 2131351028, %v2802
    %v2809 = vor.u32 %v2807, %v2808
    %v2810 = vshll.u32 2131351028, %v2801
    %v2811 = vshrl.u32 2102212464, %v2802
    %v2812 = vor.u32 %v2810, %v2811
    %v2813 = vshll.u32 2102212464, %v2801
    %v2814 = vshrl.u32 920167782, %v2802
    %v2815 = vor.u32 %v2813, %v2814
    %v2816 = vshll.u32 920167782, %v2801
    %v2817 = vshrl.u32 1326507024, %v2802
    %v2818 = vor.u32 %v2816, %v2817
    %vm2819 = vcmp.lt.s32.totalorder %v2800, 1
    %vm2820 = vcmp.lt.s32.totalorder %v2800, 2
    %vm2821 = vcmp.lt.s32.totalorder %v2800, 3
    %vm2822 = vcmp.lt.s32.totalorder %v2800, 4
    %v2823 = vsel %vm2819, %v2803, %v2806
    %v2824 = vsel %vm2822, %v2812, 2102212464
    %v2825 = vsel %vm2821, %v2809, %v2824
    %v2826 = vsel %vm2820, %v2823, %v2825
    %v2827 = vsel %vm2819, %v2806, %v2809
    %v2828 = vsel %vm2822, %v2815, 920167782
    %v2829 = vsel %vm2821, %v2812, %v2828
    %v2830 = vsel %vm2820, %v2827, %v2829
    %v2831 = vsel %vm2819, %v2809, %v2812
    %v2832 = vsel %vm2822, %v2818, 1326507024
    %v2833 = vsel %vm2821, %v2815, %v2832
    %v2834 = vsel %vm2820, %v2831, %v2833
    %v2835 = vshll.u32 %v2795, 8
    %v2836 = vmul.u32.u64.compose %v2835, %v2834
    %v2837 = vextract.low.u32 %v2836
    %v2838 = vextract.high.u32 %v2836
    %v2839 = vmul.u32.u64.compose %v2835, %v2830
    %v2840 = vextract.low.u32 %v2839
    %v2841 = vextract.high.u32 %v2839
    %v2842 = vmul.u32 %v2835, %v2826
    %v2843 = vadd.s32 %v2838, %v2840
    %vm2844 = vc.u32 %v2838, %v2840
    %v2845 = vadd.s32 %v2841, 1
    %v2846 = vsel %vm2844, %v2845, %v2841
    %v2847 = vadd.s32 %v2842, %v2846
    %v2848 = vadd.s32 %v2847, 536870912
    %v2849 = vshrl.u32 %v2848, 30
    %v2850 = vshll.u32 %v2849, 30
    %v2851 = vsub.s32 %v2847, %v2850
    %vm2852 = vcmp.lt.s32.totalorder %v2851, 0
    %v2853 = vsub.s32 0, %v2851
    %v2854 = vsel %vm2852, %v2853, %v2851
    %v2855 = vclz %v2854
    %v2856 = vsub.s32 %v2855, 2
    %vm2857 = vcmp.gt.s32.totalorder 0, %v2856
    %v2858 = vsel %vm2857, 0, %v2856
    %v2859 = vsub.s32 32, %v2858
    %v2860 = vshll.u32 %v2851, %v2858
    %v2861 = vshrl.u32 %v2843, %v2859
    %v2862 = vor.u32 %v2860, %v2861
    %v2863 = vsub.s32 4294967266, %v2858
    %v2864 = vadd.s32 %v2863, 127
    %v2865 = vshll.u32 %v2864, 23
    %v2866 = vor.u32 4788187, %v2865
    %v2867 = vand.u32 2147483647, %v2866
    %v2869 = vcvt.s32.f32 %v2862
    %v2870 = vmul.f32 %v2869, %v2867
    %v2871 = vxor.u32 %v2870, 2147483648
    %v2872 = vsel %vm2789, %v2871, %v2870
    %v2873 = vsub.s32 4, %v2849
    %v2874 = vsel %vm2789, %v2873, %v2849
    %v2875 = vsel %vm2788, %v2371, %v2872
    %v2876 = vsel %vm2788, 0, %v2874
    %v2877 = vcosq.f32.pop %v2875
    %v2878 = vsinq.f32.pop %v2875
    %vm2879 = vweird.f32 %v2371
    %v2880 = vadd.s32 %v2876, 3
    %v2881 = vand.u32 %v2880, 3
    %vm2882 = vcmp.lt.s32.totalorder %v2881, 2
    %vm2883 = vcmp.eq.s32.totalorder %v2881, 0
    %v2884 = vxor.u32 %v2878, 2147483648
    %v2885 = vsel %vm2883, %v2877, %v2884
    %vm2886 = vcmp.eq.s32.totalorder %v2881, 2
    %v2887 = vxor.u32 %v2877, 2147483648
    %v2888 = vsel %vm2886, %v2887, %v2878
    %v2889 = vsel %vm2882, %v2885, %v2888
    %v2890 = vsel %vm2879, nan, %v2889
    %v2891 = vand.u32 2147483647, %v2372
    %vm2892 = vcmp.le.f32.partialorder %v2891, 0.7853982
    %vm2893 = vcmp.lt.s32.totalorder %v2372, 0
    %v2894 = vand.u32 %v2372, 2139095040
    %v2895 = vshrl.u32 %v2894, 23
    %v2896 = vsub.s32 %v2895, 127
    %v2897 = vand.u32 2147483647, %v2372
    %v2898 = vand.u32 %v2897, 8388607
    %v2899 = vor.u32 %v2898, 8388608
    %v2900 = vsub.s32 0, %v2899
    %v2901 = vadd.s32 %v2896, 1
    %vm2902 = vcmp.gt.s32.totalorder %v2901, 0
    %v2903 = vsel %vm2902, %v2901, 0
    %v2904 = vshrl.u32 %v2903, 5
    %v2905 = vand.u32 %v2903, 31
    %v2906 = vsub.s32 32, %v2905
    %v2907 = vshrl.u32 683565275, %v2906
    %v2908 = vshll.u32 683565275, %v2905
    %v2909 = vshrl.u32 2475754826, %v2906
    %v2910 = vor.u32 %v2908, %v2909
    %v2911 = vshll.u32 2475754826, %v2905
    %v2912 = vshrl.u32 2131351028, %v2906
    %v2913 = vor.u32 %v2911, %v2912
    %v2914 = vshll.u32 2131351028, %v2905
    %v2915 = vshrl.u32 2102212464, %v2906
    %v2916 = vor.u32 %v2914, %v2915
    %v2917 = vshll.u32 2102212464, %v2905
    %v2918 = vshrl.u32 920167782, %v2906
    %v2919 = vor.u32 %v2917, %v2918
    %v2920 = vshll.u32 920167782, %v2905
    %v2921 = vshrl.u32 1326507024, %v2906
    %v2922 = vor.u32 %v2920, %v2921
    %vm2923 = vcmp.lt.s32.totalorder %v2904, 1
    %vm2924 = vcmp.lt.s32.totalorder %v2904, 2
    %vm2925 = vcmp.lt.s32.totalorder %v2904, 3
    %vm2926 = vcmp.lt.s32.totalorder %v2904, 4
    %v2927 = vsel %vm2923, %v2907, %v2910
    %v2928 = vsel %vm2926, %v2916, 2102212464
    %v2929 = vsel %vm2925, %v2913, %v2928
    %v2930 = vsel %vm2924, %v2927, %v2929
    %v2931 = vsel %vm2923, %v2910, %v2913
    %v2932 = vsel %vm2926, %v2919, 920167782
    %v2933 = vsel %vm2925, %v2916, %v2932
    %v2934 = vsel %vm2924, %v2931, %v2933
    %v2935 = vsel %vm2923, %v2913, %v2916
    %v2936 = vsel %vm2926, %v2922, 1326507024
    %v2937 = vsel %vm2925, %v2919, %v2936
    %v2938 = vsel %vm2924, %v2935, %v2937
    %v2939 = vshll.u32 %v2899, 8
    %v2940 = vmul.u32.u64.compose %v2939, %v2938
    %v2941 = vextract.low.u32 %v2940
    %v2942 = vextract.high.u32 %v2940
    %v2943 = vmul.u32.u64.compose %v2939, %v2934
    %v2944 = vextract.low.u32 %v2943
    %v2945 = vextract.high.u32 %v2943
    %v2946 = vmul.u32 %v2939, %v2930
    %v2947 = vadd.s32 %v2942, %v2944
    %vm2948 = vc.u32 %v2942, %v2944
    %v2949 = vadd.s32 %v2945, 1
    %v2950 = vsel %vm2948, %v2949, %v2945
    %v2951 = vadd.s32 %v2946, %v2950
    %v2952 = vadd.s32 %v2951, 536870912
    %v2953 = vshrl.u32 %v2952, 30
    %v2954 = vshll.u32 %v2953, 30
    %v2955 = vsub.s32 %v2951, %v2954
    %vm2956 = vcmp.lt.s32.totalorder %v2955, 0
    %v2957 = vsub.s32 0, %v2955
    %v2958 = vsel %vm2956, %v2957, %v2955
    %v2959 = vclz %v2958
    %v2960 = vsub.s32 %v2959, 2
    %vm2961 = vcmp.gt.s32.totalorder 0, %v2960
    %v2962 = vsel %vm2961, 0, %v2960
    %v2963 = vsub.s32 32, %v2962
    %v2964 = vshll.u32 %v2955, %v2962
    %v2965 = vshrl.u32 %v2947, %v2963
    %v2966 = vor.u32 %v2964, %v2965
    %v2967 = vsub.s32 4294967266, %v2962
    %v2968 = vadd.s32 %v2967, 127
    %v2969 = vshll.u32 %v2968, 23
    %v2970 = vor.u32 4788187, %v2969
    %v2971 = vand.u32 2147483647, %v2970
    %v2973 = vcvt.s32.f32 %v2966
    %v2974 = vmul.f32 %v2973, %v2971
    %v2975 = vxor.u32 %v2974, 2147483648
    %v2976 = vsel %vm2893, %v2975, %v2974
    %v2977 = vsub.s32 4, %v2953
    %v2978 = vsel %vm2893, %v2977, %v2953
    %v2979 = vsel %vm2892, %v2372, %v2976
    %v2980 = vsel %vm2892, 0, %v2978
    %v2981 = vcosq.f32.pop %v2979
    %v2982 = vsinq.f32.pop %v2979
    %vm2983 = vweird.f32 %v2372
    %v2984 = vadd.s32 %v2980, 3
    %v2985 = vand.u32 %v2984, 3
    %vm2986 = vcmp.lt.s32.totalorder %v2985, 2
    %vm2987 = vcmp.eq.s32.totalorder %v2985, 0
    %v2988 = vxor.u32 %v2982, 2147483648
    %v2989 = vsel %vm2987, %v2981, %v2988
    %vm2990 = vcmp.eq.s32.totalorder %v2985, 2
    %v2991 = vxor.u32 %v2981, 2147483648
    %v2992 = vsel %vm2990, %v2991, %v2982
    %v2993 = vsel %vm2986, %v2989, %v2992
    %v2994 = vsel %vm2983, nan, %v2993
    %v2995 = vand.u32 2147483647, %v2373
    %vm2996 = vcmp.le.f32.partialorder %v2995, 0.7853982
    %vm2997 = vcmp.lt.s32.totalorder %v2373, 0
    %v2998 = vand.u32 %v2373, 2139095040
    %v2999 = vshrl.u32 %v2998, 23
    %v3000 = vsub.s32 %v2999, 127
    %v3001 = vand.u32 2147483647, %v2373
    %v3002 = vand.u32 %v3001, 8388607
    %v3003 = vor.u32 %v3002, 8388608
    %v3004 = vsub.s32 0, %v3003
    %v3005 = vadd.s32 %v3000, 1
    %vm3006 = vcmp.gt.s32.totalorder %v3005, 0
    %v3007 = vsel %vm3006, %v3005, 0
    %v3008 = vshrl.u32 %v3007, 5
    %v3009 = vand.u32 %v3007, 31
    %v3010 = vsub.s32 32, %v3009
    %v3011 = vshrl.u32 683565275, %v3010
    %v3012 = vshll.u32 683565275, %v3009
    %v3013 = vshrl.u32 2475754826, %v3010
    %v3014 = vor.u32 %v3012, %v3013
    %v3015 = vshll.u32 2475754826, %v3009
    %v3016 = vshrl.u32 2131351028, %v3010
    %v3017 = vor.u32 %v3015, %v3016
    %v3018 = vshll.u32 2131351028, %v3009
    %v3019 = vshrl.u32 2102212464, %v3010
    %v3020 = vor.u32 %v3018, %v3019
    %v3021 = vshll.u32 2102212464, %v3009
    %v3022 = vshrl.u32 920167782, %v3010
    %v3023 = vor.u32 %v3021, %v3022
    %v3024 = vshll.u32 920167782, %v3009
    %v3025 = vshrl.u32 1326507024, %v3010
    %v3026 = vor.u32 %v3024, %v3025
    %vm3027 = vcmp.lt.s32.totalorder %v3008, 1
    %vm3028 = vcmp.lt.s32.totalorder %v3008, 2
    %vm3029 = vcmp.lt.s32.totalorder %v3008, 3
    %vm3030 = vcmp.lt.s32.totalorder %v3008, 4
    %v3031 = vsel %vm3027, %v3011, %v3014
    %v3032 = vsel %vm3030, %v3020, 2102212464
    %v3033 = vsel %vm3029, %v3017, %v3032
    %v3034 = vsel %vm3028, %v3031, %v3033
    %v3035 = vsel %vm3027, %v3014, %v3017
    %v3036 = vsel %vm3030, %v3023, 920167782
    %v3037 = vsel %vm3029, %v3020, %v3036
    %v3038 = vsel %vm3028, %v3035, %v3037
    %v3039 = vsel %vm3027, %v3017, %v3020
    %v3040 = vsel %vm3030, %v3026, 1326507024
    %v3041 = vsel %vm3029, %v3023, %v3040
    %v3042 = vsel %vm3028, %v3039, %v3041
    %v3043 = vshll.u32 %v3003, 8
    %v3044 = vmul.u32.u64.compose %v3043, %v3042
    %v3045 = vextract.low.u32 %v3044
    %v3046 = vextract.high.u32 %v3044
    %v3047 = vmul.u32.u64.compose %v3043, %v3038
    %v3048 = vextract.low.u32 %v3047
    %v3049 = vextract.high.u32 %v3047
    %v3050 = vmul.u32 %v3043, %v3034
    %v3051 = vadd.s32 %v3046, %v3048
    %vm3052 = vc.u32 %v3046, %v3048
    %v3053 = vadd.s32 %v3049, 1
    %v3054 = vsel %vm3052, %v3053, %v3049
    %v3055 = vadd.s32 %v3050, %v3054
    %v3056 = vadd.s32 %v3055, 536870912
    %v3057 = vshrl.u32 %v3056, 30
    %v3058 = vshll.u32 %v3057, 30
    %v3059 = vsub.s32 %v3055, %v3058
    %vm3060 = vcmp.lt.s32.totalorder %v3059, 0
    %v3061 = vsub.s32 0, %v3059
    %v3062 = vsel %vm3060, %v3061, %v3059
    %v3063 = vclz %v3062
    %v3064 = vsub.s32 %v3063, 2
    %vm3065 = vcmp.gt.s32.totalorder 0, %v3064
    %v3066 = vsel %vm3065, 0, %v3064
    %v3067 = vsub.s32 32, %v3066
    %v3068 = vshll.u32 %v3059, %v3066
    %v3069 = vshrl.u32 %v3051, %v3067
    %v3070 = vor.u32 %v3068, %v3069
    %v3071 = vsub.s32 4294967266, %v3066
    %v3072 = vadd.s32 %v3071, 127
    %v3073 = vshll.u32 %v3072, 23
    %v3074 = vor.u32 4788187, %v3073
    %v3075 = vand.u32 2147483647, %v3074
    %v3077 = vcvt.s32.f32 %v3070
    %v3078 = vmul.f32 %v3077, %v3075
    %v3079 = vxor.u32 %v3078, 2147483648
    %v3080 = vsel %vm2997, %v3079, %v3078
    %v3081 = vsub.s32 4, %v3057
    %v3082 = vsel %vm2997, %v3081, %v3057
    %v3083 = vsel %vm2996, %v2373, %v3080
    %v3084 = vsel %vm2996, 0, %v3082
    %v3085 = vcosq.f32.pop %v3083
    %v3086 = vsinq.f32.pop %v3083
    %vm3087 = vweird.f32 %v2373
    %v3088 = vadd.s32 %v3084, 3
    %v3089 = vand.u32 %v3088, 3
    %vm3090 = vcmp.lt.s32.totalorder %v3089, 2
    %vm3091 = vcmp.eq.s32.totalorder %v3089, 0
    %v3092 = vxor.u32 %v3086, 2147483648
    %v3093 = vsel %vm3091, %v3085, %v3092
    %vm3094 = vcmp.eq.s32.totalorder %v3089, 2
    %v3095 = vxor.u32 %v3085, 2147483648
    %v3096 = vsel %vm3094, %v3095, %v3086
    %v3097 = vsel %vm3090, %v3093, %v3096
    %v3098 = vsel %vm3087, nan, %v3097
    %v3099 = vand.u32 2147483647, %v2374
    %vm3100 = vcmp.le.f32.partialorder %v3099, 0.7853982
    %vm3101 = vcmp.lt.s32.totalorder %v2374, 0
    %v3102 = vand.u32 %v2374, 2139095040
    %v3103 = vshrl.u32 %v3102, 23
    %v3104 = vsub.s32 %v3103, 127
    %v3105 = vand.u32 2147483647, %v2374
    %v3106 = vand.u32 %v3105, 8388607
    %v3107 = vor.u32 %v3106, 8388608
    %v3108 = vsub.s32 0, %v3107
    %v3109 = vadd.s32 %v3104, 1
    %vm3110 = vcmp.gt.s32.totalorder %v3109, 0
    %v3111 = vsel %vm3110, %v3109, 0
    %v3112 = vshrl.u32 %v3111, 5
    %v3113 = vand.u32 %v3111, 31
    %v3114 = vsub.s32 32, %v3113
    %v3115 = vshrl.u32 683565275, %v3114
    %v3116 = vshll.u32 683565275, %v3113
    %v3117 = vshrl.u32 2475754826, %v3114
    %v3118 = vor.u32 %v3116, %v3117
    %v3119 = vshll.u32 2475754826, %v3113
    %v3120 = vshrl.u32 2131351028, %v3114
    %v3121 = vor.u32 %v3119, %v3120
    %v3122 = vshll.u32 2131351028, %v3113
    %v3123 = vshrl.u32 2102212464, %v3114
    %v3124 = vor.u32 %v3122, %v3123
    %v3125 = vshll.u32 2102212464, %v3113
    %v3126 = vshrl.u32 920167782, %v3114
    %v3127 = vor.u32 %v3125, %v3126
    %v3128 = vshll.u32 920167782, %v3113
    %v3129 = vshrl.u32 1326507024, %v3114
    %v3130 = vor.u32 %v3128, %v3129
    %vm3131 = vcmp.lt.s32.totalorder %v3112, 1
    %vm3132 = vcmp.lt.s32.totalorder %v3112, 2
    %vm3133 = vcmp.lt.s32.totalorder %v3112, 3
    %vm3134 = vcmp.lt.s32.totalorder %v3112, 4
    %v3135 = vsel %vm3131, %v3115, %v3118
    %v3136 = vsel %vm3134, %v3124, 2102212464
    %v3137 = vsel %vm3133, %v3121, %v3136
    %v3138 = vsel %vm3132, %v3135, %v3137
    %v3139 = vsel %vm3131, %v3118, %v3121
    %v3140 = vsel %vm3134, %v3127, 920167782
    %v3141 = vsel %vm3133, %v3124, %v3140
    %v3142 = vsel %vm3132, %v3139, %v3141
    %v3143 = vsel %vm3131, %v3121, %v3124
    %v3144 = vsel %vm3134, %v3130, 1326507024
    %v3145 = vsel %vm3133, %v3127, %v3144
    %v3146 = vsel %vm3132, %v3143, %v3145
    %v3147 = vshll.u32 %v3107, 8
    %v3148 = vmul.u32.u64.compose %v3147, %v3146
    %v3149 = vextract.low.u32 %v3148
    %v3150 = vextract.high.u32 %v3148
    %v3151 = vmul.u32.u64.compose %v3147, %v3142
    %v3152 = vextract.low.u32 %v3151
    %v3153 = vextract.high.u32 %v3151
    %v3154 = vmul.u32 %v3147, %v3138
    %v3155 = vadd.s32 %v3150, %v3152
    %vm3156 = vc.u32 %v3150, %v3152
    %v3157 = vadd.s32 %v3153, 1
    %v3158 = vsel %vm3156, %v3157, %v3153
    %v3159 = vadd.s32 %v3154, %v3158
    %v3160 = vadd.s32 %v3159, 536870912
    %v3161 = vshrl.u32 %v3160, 30
    %v3162 = vshll.u32 %v3161, 30
    %v3163 = vsub.s32 %v3159, %v3162
    %vm3164 = vcmp.lt.s32.totalorder %v3163, 0
    %v3165 = vsub.s32 0, %v3163
    %v3166 = vsel %vm3164, %v3165, %v3163
    %v3167 = vclz %v3166
    %v3168 = vsub.s32 %v3167, 2
    %vm3169 = vcmp.gt.s32.totalorder 0, %v3168
    %v3170 = vsel %vm3169, 0, %v3168
    %v3171 = vsub.s32 32, %v3170
    %v3172 = vshll.u32 %v3163, %v3170
    %v3173 = vshrl.u32 %v3155, %v3171
    %v3174 = vor.u32 %v3172, %v3173
    %v3175 = vsub.s32 4294967266, %v3170
    %v3176 = vadd.s32 %v3175, 127
    %v3177 = vshll.u32 %v3176, 23
    %v3178 = vor.u32 4788187, %v3177
    %v3179 = vand.u32 2147483647, %v3178
    %v3181 = vcvt.s32.f32 %v3174
    %v3182 = vmul.f32 %v3181, %v3179
    %v3183 = vxor.u32 %v3182, 2147483648
    %v3184 = vsel %vm3101, %v3183, %v3182
    %v3185 = vsub.s32 4, %v3161
    %v3186 = vsel %vm3101, %v3185, %v3161
    %v3187 = vsel %vm3100, %v2374, %v3184
    %v3188 = vsel %vm3100, 0, %v3186
    %v3189 = vcosq.f32.pop %v3187
    %v3190 = vsinq.f32.pop %v3187
    %vm3191 = vweird.f32 %v2374
    %v3192 = vadd.s32 %v3188, 3
    %v3193 = vand.u32 %v3192, 3
    %vm3194 = vcmp.lt.s32.totalorder %v3193, 2
    %vm3195 = vcmp.eq.s32.totalorder %v3193, 0
    %v3196 = vxor.u32 %v3190, 2147483648
    %v3197 = vsel %vm3195, %v3189, %v3196
    %vm3198 = vcmp.eq.s32.totalorder %v3193, 2
    %v3199 = vxor.u32 %v3189, 2147483648
    %v3200 = vsel %vm3198, %v3199, %v3190
    %v3201 = vsel %vm3194, %v3197, %v3200
    %v3202 = vsel %vm3191, nan, %v3201
    %v3203 = vmul.f32 %v2890, %v1199
    %v3204 = vmul.f32 %v2994, %v1203
    %v3205 = vmul.f32 %v3098, %v1207
    %v3206 = vmul.f32 %v3202, %v1211
    %3208 = vrot.lane.b32.xlu0 %v2345, 72
    %v3209 = vpop.permute.xlu0 %3208
    %3211 = vrot.lane.b32.xlu0 %v2345, 56
    %v3212 = vpop.permute.xlu0 %3211
    %v3214 = vsel %vm1228, %v3209, %v3212
    %v3215 = vmul.f32 %v2477, %v2345
    %v3216 = vmul.f32 %v3203, %v3214
    %v3217 = vadd.f32 %v3215, %v3216
    %3219 = vrot.lane.b32.xlu0 %v3217, 68
    %v3220 = vpop.permute.xlu0 %3219
    %3222 = vrot.lane.b32.xlu0 %v3217, 60
    %v3223 = vpop.permute.xlu0 %3222
    %v3225 = vsel %vm1241, %v3220, %v3223
    %v3226 = vmul.f32 %v2580, %v3217
    %v3227 = vmul.f32 %v3204, %v3225
    %v3228 = vadd.f32 %v3226, %v3227
    %3230 = vrot.lane.b32.xlu0 %v3228, 66
    %v3231 = vpop.permute.xlu0 %3230
    %3233 = vrot.lane.b32.xlu0 %v3228, 62
    %v3234 = vpop.permute.xlu0 %3233
    %v3236 = vsel %vm1254, %v3231, %v3234
    %v3237 = vmul.f32 %v2683, %v3228
    %v3238 = vmul.f32 %v3205, %v3236
    %v3239 = vadd.f32 %v3237, %v3238
    %3241 = vrot.lane.b32.xlu0 %v3239, 65
    %v3242 = vpop.permute.xlu0 %3241
    %3244 = vrot.lane.b32.xlu0 %v3239, 63
    %v3245 = vpop.permute.xlu0 %3244
    %v3247 = vsel %vm1267, %v3242, %v3245
    %v3248 = vmul.f32 %v2786, %v3239
    %v3249 = vmul.f32 %v3206, %v3247
    %v3250 = vadd.f32 %v3248, %v3249
    %s3251 = scalar_lea.vmem [#allocation7], 256
    %v3252 = vld [vmem:[%s3251] sm:$0xff]
    %v3253 = vld [vmem:[%s3251 + $0x8] sm:$0xff]
    %v3254 = vld [vmem:[%s3251 + $0x10] sm:$0xff]
    %v3255 = vld [vmem:[%s3251 + $0x18] sm:$0xff]
    %v3256 = vld [vmem:[%s3251 + $0x20] sm:$0xff]
    %v3257 = vld [vmem:[%s3251 + $0x28] sm:$0xff]
    %v3258 = vld [vmem:[%s3251 + $0x30] sm:$0xff]
    %v3259 = vld [vmem:[%s3251 + $0x38] sm:$0xff]
    %v3260 = vld [vmem:[%s3251 + $0x40] sm:$0xff]
    %v3261 = vld [vmem:[%s3251 + $0x48] sm:$0xff]
    %v3262 = vld [vmem:[%s3251 + $0x50] sm:$0xff]
    %v3263 = vld [vmem:[%s3251 + $0x58] sm:$0xff]
    %v3264 = vld [vmem:[%s3251 + $0x60] sm:$0xff]
    %v3265 = vld [vmem:[%s3251 + $0x68] sm:$0xff]
    %v3266 = vld [vmem:[%s3251 + $0x70] sm:$0xff]
    %v3267 = vld [vmem:[%s3251 + $0x78] sm:$0xff]
    %3268 = vmatprep.subr.mxu0 0.0
    %3269 = vmatpush1.msra.mxu0 %v3252
    %3270 = vmatprep.subr.mxu0 0.0
    %3271 = vmatpush1.msra.mxu0 %v3253
    %3272 = vmatprep.subr.mxu0 0.0
    %3273 = vmatpush1.msra.mxu0 %v3254
    %3274 = vmatprep.subr.mxu0 0.0
    %3275 = vmatpush1.msra.mxu0 %v3255
    %3276 = vmatprep.subr.mxu0 0.0
    %3277 = vmatpush1.msra.mxu0 %v3256
    %3278 = vmatprep.subr.mxu0 0.0
    %3279 = vmatpush1.msra.mxu0 %v3257
    %3280 = vmatprep.subr.mxu0 0.0
    %3281 = vmatpush1.msra.mxu0 %v3258
    %3282 = vmatprep.subr.mxu0 0.0
    %3283 = vmatpush1.msra.mxu0 %v3259
    %3284 = vmatprep.subr.mxu0 0.0
    %3285 = vmatpush1.msra.mxu0 %v3260
    %3286 = vmatprep.subr.mxu0 0.0
    %3287 = vmatpush1.msra.mxu0 %v3261
    %3288 = vmatprep.subr.mxu0 0.0
    %3289 = vmatpush1.msra.mxu0 %v3262
    %3290 = vmatprep.subr.mxu0 0.0
    %3291 = vmatpush1.msra.mxu0 %v3263
    %3292 = vmatprep.subr.mxu0 0.0
    %3293 = vmatpush1.msra.mxu0 %v3264
    %3294 = vmatprep.subr.mxu0 0.0
    %3295 = vmatpush1.msra.mxu0 %v3265
    %3296 = vmatprep.subr.mxu0 0.0
    %3297 = vmatpush1.msra.mxu0 %v3266
    %3298 = vmatprep.subr.mxu0 0.0
    %3299 = vmatpush1.msra.mxu0 %v3267
    %3300 = vmatprep.subr.mxu0 0.0
    %3301 = vmatpush1.msra.mxu0 0.0
    %3302 = vmatprep.subr.mxu0 0.0
    %3303 = vmatpush1.msra.mxu0 0.0
    %3304 = vmatprep.subr.mxu0 0.0
    %3305 = vmatpush1.msra.mxu0 0.0
    %3306 = vmatprep.subr.mxu0 0.0
    %3307 = vmatpush1.msra.mxu0 0.0
    %3308 = vmatprep.subr.mxu0 0.0
    %3309 = vmatpush1.msra.mxu0 0.0
    %3310 = vmatprep.subr.mxu0 0.0
    %3311 = vmatpush1.msra.mxu0 0.0
    %3312 = vmatprep.subr.mxu0 0.0
    %3313 = vmatpush1.msra.mxu0 0.0
    %3314 = vmatprep.subr.mxu0 0.0
    %3315 = vmatpush1.msra.mxu0 0.0
    %3316 = vmatprep.subr.mxu0 0.0
    %3317 = vmatpush1.msra.mxu0 0.0
    %3318 = vmatprep.subr.mxu0 0.0
    %3319 = vmatpush1.msra.mxu0 0.0
    %3320 = vmatprep.subr.mxu0 0.0
    %3321 = vmatpush1.msra.mxu0 0.0
    %3322 = vmatprep.subr.mxu0 0.0
    %3323 = vmatpush1.msra.mxu0 0.0
    %3324 = vmatprep.subr.mxu0 0.0
    %3325 = vmatpush1.msra.mxu0 0.0
    %3326 = vmatprep.subr.mxu0 0.0
    %3327 = vmatpush1.msra.mxu0 0.0
    %3328 = vmatprep.subr.mxu0 0.0
    %3329 = vmatpush1.msra.mxu0 0.0
    %3330 = vmatprep.subr.mxu0 0.0
    %3331 = vmatpush1.msra.mxu0 0.0
    %3332 = vmatprep.mubr.f32.mxu0 0.0
    %3333 = vmatmul.mubr.f32.gmra.mrb[0].mxu0 %v3250
    %v3334 = vpop.f32.mrb[0].mxu0
    %v3335 = vadd.f32 0.0, %v3334
    %v3336 = vpop.f32.mrb[0].mxu0
    %3337 = vdwg.mxu0
    %v3338 = vmul.f32 %v3335, %v3335
    %s3339 = scalar_lea.vmem [#allocation7], 384
    %v3340 = vld [vmem:[%s3339] sm:$0xff]
    %v3341 = vld [vmem:[%s3339 + $0x8] sm:$0xff]
    %v3342 = vld [vmem:[%s3339 + $0x10] sm:$0xff]
    %v3343 = vld [vmem:[%s3339 + $0x18] sm:$0xff]
    %v3344 = vld [vmem:[%s3339 + $0x20] sm:$0xff]
    %v3345 = vld [vmem:[%s3339 + $0x28] sm:$0xff]
    %v3346 = vld [vmem:[%s3339 + $0x30] sm:$0xff]
    %v3347 = vld [vmem:[%s3339 + $0x38] sm:$0xff]
    %v3348 = vld [vmem:[%s3339 + $0x40] sm:$0xff]
    %v3349 = vld [vmem:[%s3339 + $0x48] sm:$0xff]
    %v3350 = vld [vmem:[%s3339 + $0x50] sm:$0xff]
    %v3351 = vld [vmem:[%s3339 + $0x58] sm:$0xff]
    %v3352 = vld [vmem:[%s3339 + $0x60] sm:$0xff]
    %v3353 = vld [vmem:[%s3339 + $0x68] sm:$0xff]
    %v3354 = vld [vmem:[%s3339 + $0x70] sm:$0xff]
    %v3355 = vld [vmem:[%s3339 + $0x78] sm:$0xff]
    %3356 = vmatprep.subr.mxu0 0.0
    %3357 = vmatpush1.msra.mxu0 %v3340
    %3358 = vmatprep.subr.mxu0 0.0
    %3359 = vmatpush1.msra.mxu0 %v3341
    %3360 = vmatprep.subr.mxu0 0.0
    %3361 = vmatpush1.msra.mxu0 %v3342
    %3362 = vmatprep.subr.mxu0 0.0
    %3363 = vmatpush1.msra.mxu0 %v3343
    %3364 = vmatprep.subr.mxu0 0.0
    %3365 = vmatpush1.msra.mxu0 %v3344
    %3366 = vmatprep.subr.mxu0 0.0
    %3367 = vmatpush1.msra.mxu0 %v3345
    %3368 = vmatprep.subr.mxu0 0.0
    %3369 = vmatpush1.msra.mxu0 %v3346
    %3370 = vmatprep.subr.mxu0 0.0
    %3371 = vmatpush1.msra.mxu0 %v3347
    %3372 = vmatprep.subr.mxu0 0.0
    %3373 = vmatpush1.msra.mxu0 %v3348
    %3374 = vmatprep.subr.mxu0 0.0
    %3375 = vmatpush1.msra.mxu0 %v3349
    %3376 = vmatprep.subr.mxu0 0.0
    %3377 = vmatpush1.msra.mxu0 %v3350
    %3378 = vmatprep.subr.mxu0 0.0
    %3379 = vmatpush1.msra.mxu0 %v3351
    %3380 = vmatprep.subr.mxu0 0.0
    %3381 = vmatpush1.msra.mxu0 %v3352
    %3382 = vmatprep.subr.mxu0 0.0
    %3383 = vmatpush1.msra.mxu0 %v3353
    %3384 = vmatprep.subr.mxu0 0.0
    %3385 = vmatpush1.msra.mxu0 %v3354
    %3386 = vmatprep.subr.mxu0 0.0
    %3387 = vmatpush1.msra.mxu0 %v3355
    %3388 = vmatprep.subr.mxu0 0.0
    %3389 = vmatpush1.msra.mxu0 0.0
    %3390 = vmatprep.subr.mxu0 0.0
    %3391 = vmatpush1.msra.mxu0 0.0
    %3392 = vmatprep.subr.mxu0 0.0
    %3393 = vmatpush1.msra.mxu0 0.0
    %3394 = vmatprep.subr.mxu0 0.0
    %3395 = vmatpush1.msra.mxu0 0.0
    %3396 = vmatprep.subr.mxu0 0.0
    %3397 = vmatpush1.msra.mxu0 0.0
    %3398 = vmatprep.subr.mxu0 0.0
    %3399 = vmatpush1.msra.mxu0 0.0
    %3400 = vmatprep.subr.mxu0 0.0
    %3401 = vmatpush1.msra.mxu0 0.0
    %3402 = vmatprep.subr.mxu0 0.0
    %3403 = vmatpush1.msra.mxu0 0.0
    %3404 = vmatprep.subr.mxu0 0.0
    %3405 = vmatpush1.msra.mxu0 0.0
    %3406 = vmatprep.subr.mxu0 0.0
    %3407 = vmatpush1.msra.mxu0 0.0
    %3408 = vmatprep.subr.mxu0 0.0
    %3409 = vmatpush1.msra.mxu0 0.0
    %3410 = vmatprep.subr.mxu0 0.0
    %3411 = vmatpush1.msra.mxu0 0.0
    %3412 = vmatprep.subr.mxu0 0.0
    %3413 = vmatpush1.msra.mxu0 0.0
    %3414 = vmatprep.subr.mxu0 0.0
    %3415 = vmatpush1.msra.mxu0 0.0
    %3416 = vmatprep.subr.mxu0 0.0
    %3417 = vmatpush1.msra.mxu0 0.0
    %3418 = vmatprep.subr.mxu0 0.0
    %3419 = vmatpush1.msra.mxu0 0.0
    %3420 = vmatprep.mubr.f32.mxu0 0.0
    %3421 = vmatmul.mubr.f32.gmra.mrb[0].mxu0 %v3338
    %v3422 = vpop.f32.mrb[0].mxu0
    %v3423 = vadd.f32 0.0, %v3422
    %v3424 = vpop.f32.mrb[0].mxu0
    %3425 = vdwg.mxu0
    %3426 = vst [vmem:[#allocation8] sm:$0xff] %v3423
    // Predicated region
    $region26: #{tpu_custom_call.1} parent=1 // pred_check
      _
    $region27: #{tpu_custom_call.1} parent=1 // pred_check_branch
      %3428 = sbr.rel (0) target = $region29
    $region28: #{tpu_custom_call.1} parent=1 // pred_region
      %s3430 = ssub.s32 128, 128
      %3431 = vsyncadd [#allocation4], %s3430
      %s3433 = sshll.u32 [#allocation8], 4
      %s3434 = int_to_ptr.vmem [resolvable:$true] %s3433
      %3436 = dma.vmem_to_hbm [thread:$0]  %s3434, 128, %s3, [#allocation4]
    $region29: #{tpu_custom_call.1} parent=1 // pred_fallthru
      _
    // Predicated region
    $region30: #{tpu_custom_call.1} parent=1 // pred_check
      _
    $region31: #{tpu_custom_call.1} parent=1 // pred_check_branch
      %3438 = sbr.rel (0) target = $region33
    $region32: #{tpu_custom_call.1} parent=1 // pred_region
      %3439 = dma.done [#allocation4], 128
    $region33: #{tpu_custom_call.1} parent=1 // pred_fallthru
      _
    %3440 = vsyncpa [#allocation3], 1
    %3441 = vsyncpa [#allocation6], 1
    %3442 = vsyncpa [#allocation4], 1

</llo_original>
